<compile_context>
chip_gen: v5e
topology: v5e:2x2
jax: 0.10.0
libtpu: 0.0.40
codegen_flags: <defaults>
</compile_context>

<pallas_src>
import functools

import jax
import jax.numpy as jnp
from jax.experimental import pallas as pl
from jax.experimental.pallas import tpu as pltpu


def _round_up(x, m):
    return ((x + m - 1) // m) * m


def _vmem_capacity_bytes():
    """Physical VMEM of the attached TPU; conservative (v7x-sized) fallback."""
    try:
        return int(pltpu.get_tpu_info().vmem_capacity_bytes)
    except Exception:
        return 64 * 2**20


def _has_bf16_eup():
    """bf16 transcendentals (exp) exist on v6e / v7x; keep f32 on v5e and older."""
    try:
        kind = jax.devices()[0].device_kind.lower()
    except Exception:
        return False
    return any(tag in kind for tag in ("v6", "v7", "tpu7"))


# ----------------------------- Pallas kernels --------------------------------


def _attn_block_kernel(x_ref, g1_ref, b1_ref, wqkv_ref, wproj_ref, bproj_ref,
                       y_ref, cls_ref, *, num_heads, n_pad, exp_dtype, bf16_relayout):
    """Per-batch-element: y = x + proj(MHA(norm1(x))); cls = mean_h softmax row 0."""
    x = x_ref[0]                                          # (N, C) f32
    N, C = x.shape
    H = num_heads
    hd = C // H

    # LayerNorm (norm1): eps=1e-5, biased variance (PyTorch semantics), f32.
    mu = jnp.mean(x, axis=-1, keepdims=True)
    var = jnp.mean((x - mu) ** 2, axis=-1, keepdims=True)
    xn = (x - mu) * jax.lax.rsqrt(var + 1e-5)
    xn = xn * g1_ref[...] + b1_ref[...]

    # Fused qkv projection (qkv_bias=False): bf16 operands, f32 accumulation.  The
    # attention scale is already folded into the q columns of wqkv (host side, in f32).
    qkv = jnp.dot(xn.astype(jnp.bfloat16), wqkv_ref[...],
                  preferred_element_type=jnp.float32)     # (N, 3C) f32

    # Head split (N, 3C) -> (3H, N, hd).  hd < 128 makes this a lane-splitting relayout;
    # doing it in bf16 halves the relayout bytes and fuses with the cast the MXU needs.
    # TODO(synk): with head_dim >= 128 (or head-pair lane packing) this relayout goes away.
    if bf16_relayout:
        qkv_h = jnp.transpose(qkv.astype(jnp.bfloat16).reshape(N, 3 * H, hd), (1, 0, 2))
    else:
        qkv_h = jnp.transpose(qkv.reshape(N, 3 * H, hd), (1, 0, 2)).astype(jnp.bfloat16)
    q = qkv_h[0:H]                                        # (H, N, hd) bf16, pre-scaled
    k = qkv_h[H:2 * H]
    v = qkv_h[2 * H:3 * H]

    # Scores for all heads at once; subtract the row max (safe softmax).
    s = jnp.einsum('hqd,hkd->hqk', q, k,
                   preferred_element_type=jnp.float32)    # (H, N, N) f32
    s = s - jnp.max(s, axis=-1, keepdims=True)

    # cls-attention scores (drive the top-k token selection): exact f32 softmax row 0.
    p0 = jnp.exp(s[:, 0, :])                              # (H, N) f32
    cls_row = jnp.mean(p0 / jnp.sum(p0, axis=-1, keepdims=True), axis=0, keepdims=True)
    if n_pad > 0:                                         # lane-dense (x128) store
        cls_row = jnp.concatenate(
            [cls_row, jnp.zeros((1, n_pad), jnp.float32)], axis=-1)
    cls_ref[0] = cls_row

    # Unnormalized probabilities; exp in bf16 on v6e/v7x (bf16 EUP), f32 elsewhere.
    # Row sums are accumulated in f32 either way.
    p = jnp.exp(s.astype(exp_dtype))                      # (H, N, N)
    row = jnp.sum(p.astype(jnp.float32), axis=-1, keepdims=True)   # (H, N, 1) f32

    # o = softmax(s) @ v; normalization applied to the small (H,N,hd) output.
    o = jnp.einsum('hqk,hkd->hqd', p.astype(jnp.bfloat16), v,
                   preferred_element_type=jnp.float32)    # (H, N, hd) f32
    o = o * pl.reciprocal(row, approx=False)              # exact softmax normalization
    if bf16_relayout:                                     # head-major concat == PyTorch
        o = jnp.transpose(o.astype(jnp.bfloat16), (1, 0, 2)).reshape(N, C)
    else:
        o = jnp.transpose(o, (1, 0, 2)).reshape(N, C).astype(jnp.bfloat16)

    proj = jnp.dot(o, wproj_ref[...],
                   preferred_element_type=jnp.float32) + bproj_ref[...]
    y_ref[0] = x + proj                                   # fused residual add


def _mlp_rows_kernel(x_ref, g2_ref, b2_ref, w1_ref, bb1_ref, w2_ref, bb2_ref, y_ref):
    """Row tile of tokens: y = x + Linear(GELU(Linear(norm2(x))))."""
    x = x_ref[...]                                        # (TM, C) f32
    mu = jnp.mean(x, axis=-1, keepdims=True)
    var = jnp.mean((x - mu) ** 2, axis=-1, keepdims=True)
    xn = (x - mu) * jax.lax.rsqrt(var + 1e-5)
    xn = xn * g2_ref[...] + b2_ref[...]

    h = jnp.dot(xn.astype(jnp.bfloat16), w1_ref[...],
                preferred_element_type=jnp.float32) + bb1_ref[...]
    h = jax.nn.gelu(h, approximate=False)                 # exact GELU (nn.GELU()), f32
    out = jnp.dot(h.astype(jnp.bfloat16), w2_ref[...],
                  preferred_element_type=jnp.float32) + bb2_ref[...]
    y_ref[...] = x + out                                  # fused residual add


# ----------------------------- Pallas wrappers --------------------------------


def attention_evit(x, g1, b1, wqkv, wproj, bproj, num_heads):
    """Returns (x + attention(norm1(x)), cls_attn (B, N-1))."""
    B, N, C = x.shape
    hd = C // num_heads
    scale = hd ** -0.5
    NP = _round_up(N, 128)                                # lane-dense cls output width

    # Fold the attention scale into the q columns (f32, before the bf16 cast) so the
    # kernel never pays the per-step (H, N, hd) scale multiply.
    wqkv_scaled = wqkv.at[:, :C].multiply(jnp.float32(scale))
    wqkv_b = wqkv_scaled.astype(jnp.bfloat16)
    wproj_b = wproj.astype(jnp.bfloat16)
    # TODO(synk): in production, keep these weights resident in HBM as bf16.

    exp_dt = jnp.bfloat16 if _has_bf16_eup() else jnp.float32

    flops = int(B * (2 * N * C * 3 * C + 4 * N * N * C + 2 * N * C * C))
    transc = int(B * num_heads * N * N)
    bytes_acc = int(2 * B * N * C * 4 + B * NP * 4 + (3 * C * C + C * C) * 2 + 8 * C * 4)

    vmem_cap = _vmem_capacity_bytes()
    blk = (4 * (N * C * 4) + 2 * (NP * 4)
           + 2 * (3 * C * C * 2) + 2 * (C * C * 2) + 8 * C * 4)
    interm = (N * 3 * C * (4 + 2) + 2 * num_heads * N * N * 4
              + num_heads * N * (hd * 6 + 8))
    vmem_limit = int(min(max(blk + interm + 4 * 2**20, 16 * 2**20),
                         (7 * vmem_cap) // 10))           # generation-aware ceiling

    def run(single_buffer, exp_dtype, bf16_relayout):
        kern = functools.partial(_attn_block_kernel, num_heads=num_heads,
                                 n_pad=NP - N, exp_dtype=exp_dtype,
                                 bf16_relayout=bf16_relayout)

        def wspec(shape):
            if single_buffer:
                # Constant-index weight blocks: a second pipeline buffer is pure waste.
                return pl.BlockSpec(shape, lambda b: (0,) * len(shape),
                                    pipeline_mode=pl.Buffered(1))
            return pl.BlockSpec(shape, lambda b: (0,) * len(shape))

        # NOTE: grid=(B,) is "parallel" -> feeds both v7x TensorCores whenever B >= 2.
        # TODO(synk): add a head-group grid axis for better v7x balance at small/odd B.
        return pl.pallas_call(
            kern,
            grid=(B,),
            in_specs=[
                pl.BlockSpec((1, N, C), lambda b: (b, 0, 0)),
                pl.BlockSpec((1, C), lambda b: (0, 0)),
                pl.BlockSpec((1, C), lambda b: (0, 0)),
                wspec((C, 3 * C)),
                wspec((C, C)),
                pl.BlockSpec((1, C), lambda b: (0, 0)),
            ],
            out_specs=[
                pl.BlockSpec((1, N, C), lambda b: (b, 0, 0)),
                pl.BlockSpec((1, 1, NP), lambda b: (b, 0, 0)),
            ],
            out_shape=[
                jax.ShapeDtypeStruct((B, N, C), jnp.float32),
                jax.ShapeDtypeStruct((B, 1, NP), jnp.float32),
            ],
            compiler_params=pltpu.CompilerParams(
                dimension_semantics=("parallel",),
                vmem_limit_bytes=vmem_limit),
            cost_estimate=pl.CostEstimate(flops=flops, transcendentals=transc,
                                          bytes_accessed=bytes_acc),
        )(x, g1, b1, wqkv_b, wproj_b, bproj)

    # Most aggressive config first; fall back gracefully if the running JAX/Mosaic
    # build rejects single-buffering or a bf16 lowering.
    attempts = (
        dict(single_buffer=True, exp_dtype=exp_dt, bf16_relayout=True),
        dict(single_buffer=False, exp_dtype=exp_dt, bf16_relayout=True),
        dict(single_buffer=True, exp_dtype=jnp.float32, bf16_relayout=False),
        dict(single_buffer=False, exp_dtype=jnp.float32, bf16_relayout=False),
    )
    last_err = None
    for cfg in attempts:
        try:
            y, cls_pad = run(**cfg)
            break
        except Exception as e:                            # noqa: BLE001
            last_err = e
    else:
        raise last_err

    cls_attn = cls_pad[:, 0, 1:N]                         # (B, N-1)
    return y, cls_attn


def mlp_evit(x, g2, b2, w1, bb1, w2, bb2):
    """Returns x + Mlp(norm2(x)); tokens flattened and row-tiled."""
    B, Np, C = x.shape
    H = w1.shape[1]
    rows = B * Np

    vmem_cap = _vmem_capacity_bytes()
    tm_cap = 1024 if vmem_cap >= 96 * 2**20 else 512      # 128 MiB chips vs v7x-sized

    # Prefer a tile that divides the row count (no pad); otherwise round up + pad tail.
    TM = None
    for t in (1024, 768, 512, 384, 256, 128):
        if t <= tm_cap and rows % t == 0:
            TM = t
            break
    if TM is None:
        TM = min(tm_cap, _round_up(rows, 8))
    rows_pad = _round_up(rows, TM)

    xf = x.reshape(rows, C)
    if rows_pad != rows:
        # TODO(synk): replace this full-activation pad with a masked tail tile.
        xf = jnp.pad(xf, ((0, rows_pad - rows), (0, 0)))

    w1_b = w1.astype(jnp.bfloat16)
    w2_b = w2.astype(jnp.bfloat16)

    flops = int(rows * 4 * C * H)
    transc = int(rows * H)
    bytes_acc = int(2 * rows * C * 4 + 2 * C * H * 2 + (H + 3 * C) * 4)

    blk = (4 * (TM * C * 4) + 2 * (C * H + H * C) * 2 + 2 * (H + 3 * C) * 4)
    interm = TM * H * 4 * 2 + TM * C * 4 * 2 + TM * (C + H) * 2
    vmem_limit = int(min(max(blk + interm + 4 * 2**20, 16 * 2**20),
                         (7 * vmem_cap) // 10))

    def run(single_buffer):
        def wspec(shape):
            if single_buffer:
                return pl.BlockSpec(shape, lambda i: (0,) * len(shape),
                                    pipeline_mode=pl.Buffered(1))
            return pl.BlockSpec(shape, lambda i: (0,) * len(shape))

        return pl.pallas_call(
            _mlp_rows_kernel,
            grid=(rows_pad // TM,),
            in_specs=[
                pl.BlockSpec((TM, C), lambda i: (i, 0)),
                pl.BlockSpec((1, C), lambda i: (0, 0)),
                pl.BlockSpec((1, C), lambda i: (0, 0)),
                wspec((C, H)),
                pl.BlockSpec((1, H), lambda i: (0, 0)),
                wspec((H, C)),
                pl.BlockSpec((1, C), lambda i: (0, 0)),
            ],
            out_specs=pl.BlockSpec((TM, C), lambda i: (i, 0)),
            out_shape=jax.ShapeDtypeStruct((rows_pad, C), jnp.float32),
            compiler_params=pltpu.CompilerParams(
                dimension_semantics=("parallel",),
                vmem_limit_bytes=vmem_limit),
            cost_estimate=pl.CostEstimate(flops=flops, transcendentals=transc,
                                          bytes_accessed=bytes_acc),
        )(xf, g2, b2, w1_b, bb1, w2_b, bb2)

    try:
        yf = run(True)
    except Exception:                                     # noqa: BLE001
        yf = run(False)

    return yf[:rows].reshape(B, Np, C)


# ----------------------------- JAX glue (data-dependent token selection) ------


def complement_idx_jax(idx, dim):
    """set(range(dim)) - set(idx[b]) per batch row, sorted ascending. idx: (B, K)."""
    B, K = idx.shape
    a = jnp.broadcast_to(jnp.arange(dim, dtype=idx.dtype), (B, dim))
    in_idx = jnp.any(a[:, :, None] == idx[:, None, :], axis=-1)
    masked = jnp.where(in_idx, jnp.zeros_like(a), a)      # scatter 0 at kept positions
    compl = jnp.sort(masked, axis=-1)[:, K:]
    return compl


def block_evit_forward(x, params, num_heads, keep_rate, init_n=14 * 14):
    assert 0 < keep_rate <= 1
    B, N, C = x.shape

    # residual (drop_path = Identity) is fused inside the attention kernel
    x, cls_attn = attention_evit(
        x, params["g1"], params["b1"], params["wqkv"], params["wproj"],
        params["bproj"], num_heads)

    index = None
    idx = None
    compl = None
    if keep_rate < 1:
        left_tokens = int(keep_rate * init_n)
        if left_tokens != N - 1:
            assert left_tokens >= 1
            _, idx = jax.lax.top_k(cls_attn, left_tokens)  # largest=True, sorted=True
            non_cls = x[:, 1:]                             # (B, N-1, C)
            index = jnp.broadcast_to(idx[:, :, None], (B, left_tokens, C))
            x_others = jnp.take_along_axis(non_cls, index, axis=1)
            compl = complement_idx_jax(idx, N - 1)
            non_topk = jnp.take_along_axis(
                non_cls,
                jnp.broadcast_to(compl[:, :, None], (B, compl.shape[1], C)), axis=1)
            non_topk_attn = jnp.take_along_axis(cls_attn, compl, axis=1)
            extra_token = jnp.sum(non_topk * non_topk_attn[:, :, None],
                                  axis=1, keepdims=True)
            x = jnp.concatenate([x[:, 0:1], x_others, extra_token], axis=1)
            idx = jnp.concatenate([idx, -jnp.ones((B, 1), idx.dtype)], axis=1)

    y = mlp_evit(x, params["g2"], params["b2"], params["w1"], params["bb1"],
                 params["w2"], params["bb2"])
    n_tokens = y.shape[1] - 1
    if index is not None:
        return y, n_tokens, idx, compl
    return y, n_tokens, None, None


# ----------------------------- main -------------------------------------------


if __name__ == "__main__":
    B, N, C = 2, 8, 32          # batch, tokens (incl. cls), dim
    num_heads = 4
    mlp_ratio = 4.0
    H = int(C * mlp_ratio)
    keep_rate = 0.025           # left_tokens = int(0.025 * 196) = 4  (< N-1 = 7)

    key = jax.random.PRNGKey(0)
    ks = jax.random.split(key, 8)
    x = jax.random.normal(ks[0], (B, N, C), jnp.float32)

    params = dict(
        g1=jnp.ones((1, C), jnp.float32), b1=jnp.zeros((1, C), jnp.float32),
        wqkv=0.02 * jax.random.normal(ks[1], (C, 3 * C), jnp.float32),
        wproj=0.02 * jax.random.normal(ks[2], (C, C), jnp.float32),
        bproj=0.02 * jax.random.normal(ks[3], (1, C), jnp.float32),
        g2=jnp.ones((1, C), jnp.float32), b2=jnp.zeros((1, C), jnp.float32),
        w1=0.02 * jax.random.normal(ks[4], (C, H), jnp.float32),
        bb1=0.02 * jax.random.normal(ks[5], (1, H), jnp.float32),
        w2=0.02 * jax.random.normal(ks[6], (H, C), jnp.float32),
        bb2=0.02 * jax.random.normal(ks[7], (1, C), jnp.float32),
    )

    y, n_tokens, idx, compl = block_evit_forward(x, params, num_heads, keep_rate)
    jax.block_until_ready(y)
    if idx is not None:
        jax.block_until_ready(idx)
        jax.block_until_ready(compl)
    assert bool(jnp.all(jnp.isfinite(y)))
    print("KERNEL_OK")
</pallas_src>

<mosaic_0001>
module attributes {stable_mosaic.version = 11 : i64} {
  func.func @_attn_block_kernel(%arg0: i32, %arg1: memref<1x8x32xf32, #tpu.memory_space<vmem>>, %arg2: memref<1x32xf32, #tpu.memory_space<vmem>>, %arg3: memref<1x32xf32, #tpu.memory_space<vmem>>, %arg4: memref<32x96xbf16, #tpu.memory_space<vmem>>, %arg5: memref<32x32xbf16, #tpu.memory_space<vmem>>, %arg6: memref<1x32xf32, #tpu.memory_space<vmem>>, %arg7: memref<1x8x32xf32, #tpu.memory_space<vmem>>, %arg8: memref<1x1x128xf32, #tpu.memory_space<vmem>>) attributes {dimension_semantics = [#tpu.dimension_semantics<parallel>], iteration_bounds = array<i64: 2>, scalar_prefetch = 0 : i64, scratch_operands = 0 : i64, tpu.core_type = #tpu.core_type<tc>, window_params = [{transform_indices = @transform_0, window_bounds = array<i64: 1, 8, 32>}, {pipeline_mode = #tpu.pipeline_mode<synchronous>, transform_indices = @transform_1, window_bounds = array<i64: 1, 32>}, {pipeline_mode = #tpu.pipeline_mode<synchronous>, transform_indices = @transform_2, window_bounds = array<i64: 1, 32>}, {pipeline_mode = #tpu.pipeline_mode<synchronous>, transform_indices = @transform_3, window_bounds = array<i64: 32, 96>}, {pipeline_mode = #tpu.pipeline_mode<synchronous>, transform_indices = @transform_4, window_bounds = array<i64: 32, 32>}, {pipeline_mode = #tpu.pipeline_mode<synchronous>, transform_indices = @transform_5, window_bounds = array<i64: 1, 32>}, {transform_indices = @transform_6, window_bounds = array<i64: 1, 8, 32>}, {transform_indices = @transform_7, window_bounds = array<i64: 1, 1, 128>}]} {
    %c0 = arith.constant 0 : index
    %c0_0 = arith.constant 0 : index
    %c0_1 = arith.constant 0 : index
    %0 = vector.load %arg1[%c0, %c0_0, %c0_1] : memref<1x8x32xf32, #tpu.memory_space<vmem>>, vector<1x8x32xf32>
    %1 = vector.shape_cast %0 : vector<1x8x32xf32> to vector<8x32xf32>
    %cst = arith.constant dense<0.000000e+00> : vector<8xf32>
    %2 = vector.multi_reduction <add>, %1, %cst [1] : vector<8x32xf32> to vector<8xf32>
    %3 = vector.shape_cast %2 : vector<8xf32> to vector<8x1xf32>
    %cst_2 = arith.constant 3.200000e+01 : f32
    %4 = vector.broadcast %cst_2 : f32 to vector<8x1xf32>
    %5 = arith.divf %3, %4 : vector<8x1xf32>
    %6 = vector.broadcast %5 : vector<8x1xf32> to vector<8x32xf32>
    %7 = arith.subf %1, %6 : vector<8x32xf32>
    %8 = arith.mulf %7, %7 : vector<8x32xf32>
    %cst_3 = arith.constant dense<0.000000e+00> : vector<8xf32>
    %9 = vector.multi_reduction <add>, %8, %cst_3 [1] : vector<8x32xf32> to vector<8xf32>
    %10 = vector.shape_cast %9 : vector<8xf32> to vector<8x1xf32>
    %cst_4 = arith.constant 3.200000e+01 : f32
    %11 = vector.broadcast %cst_4 : f32 to vector<8x1xf32>
    %12 = arith.divf %10, %11 : vector<8x1xf32>
    %13 = vector.broadcast %5 : vector<8x1xf32> to vector<8x32xf32>
    %14 = arith.subf %1, %13 : vector<8x32xf32>
    %cst_5 = arith.constant 9.99999974E-6 : f32
    %15 = vector.broadcast %cst_5 : f32 to vector<8x1xf32>
    %16 = arith.addf %12, %15 : vector<8x1xf32>
    %17 = math.rsqrt %16 : vector<8x1xf32>
    %18 = vector.broadcast %17 : vector<8x1xf32> to vector<8x32xf32>
    %19 = arith.mulf %14, %18 : vector<8x32xf32>
    %c0_6 = arith.constant 0 : index
    %c0_7 = arith.constant 0 : index
    %20 = vector.load %arg2[%c0_6, %c0_7] : memref<1x32xf32, #tpu.memory_space<vmem>>, vector<1x32xf32>
    %21 = vector.broadcast %20 : vector<1x32xf32> to vector<8x32xf32>
    %22 = arith.mulf %19, %21 : vector<8x32xf32>
    %c0_8 = arith.constant 0 : index
    %c0_9 = arith.constant 0 : index
    %23 = vector.load %arg3[%c0_8, %c0_9] : memref<1x32xf32, #tpu.memory_space<vmem>>, vector<1x32xf32>
    %24 = vector.broadcast %23 : vector<1x32xf32> to vector<8x32xf32>
    %25 = arith.addf %22, %24 : vector<8x32xf32>
    %26 = arith.truncf %25 : vector<8x32xf32> to vector<8x32xbf16>
    %c0_10 = arith.constant 0 : index
    %c0_11 = arith.constant 0 : index
    %27 = vector.load %arg4[%c0_10, %c0_11] : memref<32x96xbf16, #tpu.memory_space<vmem>>, vector<32x96xbf16>
    %cst_12 = arith.constant dense<0.000000e+00> : vector<8x96xf32>
    %28 = tpu.matmul %26, %27, %cst_12 {dimension_numbers = #tpu.dot_dimension_numbers<[1], [0], [0], [1], [0, 0, 1, 1], [], []>} : vector<8x32xbf16>, vector<32x96xbf16>, vector<8x96xf32> -> vector<8x96xf32>
    %29 = arith.truncf %28 : vector<8x96xf32> to vector<8x96xbf16>
    %30 = vector.shape_cast %29 : vector<8x96xbf16> to vector<8x12x8xbf16>
    %31 = tpu.transpose %30, [1, 0, 2] : vector<8x12x8xbf16> -> vector<12x8x8xbf16>
    %32 = vector.extract_strided_slice %31 {offsets = [0, 0, 0], sizes = [4, 8, 8], strides = [1, 1, 1]} : vector<12x8x8xbf16> to vector<4x8x8xbf16>
    %33 = vector.extract_strided_slice %31 {offsets = [4, 0, 0], sizes = [4, 8, 8], strides = [1, 1, 1]} : vector<12x8x8xbf16> to vector<4x8x8xbf16>
    %34 = vector.extract_strided_slice %31 {offsets = [8, 0, 0], sizes = [4, 8, 8], strides = [1, 1, 1]} : vector<12x8x8xbf16> to vector<4x8x8xbf16>
    "tpu.trace_start"() <{level = 10 : i32, message = "hqd,hkd->hqk"}> : () -> ()
    %cst_13 = arith.constant dense<0.000000e+00> : vector<4x8x8xf32>
    %35 = tpu.matmul %32, %33, %cst_13 {dimension_numbers = #tpu.dot_dimension_numbers<[2], [2], [1], [1], [0, 0, 0, 1, 1, 1], [0], [0]>} : vector<4x8x8xbf16>, vector<4x8x8xbf16>, vector<4x8x8xf32> -> vector<4x8x8xf32>
    "tpu.trace_stop"() : () -> ()
    %cst_14 = arith.constant dense<0xFF800000> : vector<4x8xf32>
    %36 = vector.multi_reduction <maximumf>, %35, %cst_14 [2] : vector<4x8x8xf32> to vector<4x8xf32>
    %37 = vector.shape_cast %36 : vector<4x8xf32> to vector<4x8x1xf32>
    %38 = vector.broadcast %37 : vector<4x8x1xf32> to vector<4x8x8xf32>
    %39 = arith.subf %35, %38 : vector<4x8x8xf32>
    %40 = vector.extract_strided_slice %39 {offsets = [0, 0, 0], sizes = [4, 1, 8], strides = [1, 1, 1]} : vector<4x8x8xf32> to vector<4x1x8xf32>
    %41 = vector.shape_cast %40 : vector<4x1x8xf32> to vector<4x8xf32>
    %42 = math.exp %41 : vector<4x8xf32>
    %cst_15 = arith.constant dense<0.000000e+00> : vector<4xf32>
    %43 = vector.multi_reduction <add>, %42, %cst_15 [1] : vector<4x8xf32> to vector<4xf32>
    %44 = vector.shape_cast %43 : vector<4xf32> to vector<4x1xf32>
    %45 = vector.broadcast %44 : vector<4x1xf32> to vector<4x8xf32>
    %46 = arith.divf %42, %45 : vector<4x8xf32>
    %cst_16 = arith.constant dense<0.000000e+00> : vector<8xf32>
    %47 = vector.multi_reduction <add>, %46, %cst_16 [0] : vector<4x8xf32> to vector<8xf32>
    %48 = vector.shape_cast %47 : vector<8xf32> to vector<1x8xf32>
    %cst_17 = arith.constant 4.000000e+00 : f32
    %49 = vector.broadcast %cst_17 : f32 to vector<1x8xf32>
    %50 = arith.divf %48, %49 : vector<1x8xf32>
    %cst_18 = arith.constant 0.000000e+00 : f32
    %51 = vector.broadcast %cst_18 : f32 to vector<1x120xf32>
    %52 = tpu.concatenate %50, %51 in 1 : vector<1x8xf32>, vector<1x120xf32> -> vector<1x128xf32>
    %c0_19 = arith.constant 0 : index
    %c0_20 = arith.constant 0 : index
    %c0_21 = arith.constant 0 : index
    %53 = vector.load %arg8[%c0_19, %c0_20, %c0_21] : memref<1x1x128xf32, #tpu.memory_space<vmem>>, vector<1x1x128xf32>
    %54 = vector.shape_cast %53 : vector<1x1x128xf32> to vector<1x128xf32>
    %55 = vector.shape_cast %52 : vector<1x128xf32> to vector<1x1x128xf32>
    tpu.vector_store %arg8[%c0_19, %c0_20, %c0_21], %55 {strides = array<i32>} : memref<1x1x128xf32, #tpu.memory_space<vmem>>, vector<1x1x128xf32>,
    %56 = math.exp %39 : vector<4x8x8xf32>
    %cst_22 = arith.constant dense<0.000000e+00> : vector<4x8xf32>
    %57 = vector.multi_reduction <add>, %56, %cst_22 [2] : vector<4x8x8xf32> to vector<4x8xf32>
    %58 = vector.shape_cast %57 : vector<4x8xf32> to vector<4x8x1xf32>
    %59 = arith.truncf %56 : vector<4x8x8xf32> to vector<4x8x8xbf16>
    "tpu.trace_start"() <{level = 10 : i32, message = "hqk,hkd->hqd"}> : () -> ()
    %cst_23 = arith.constant dense<0.000000e+00> : vector<4x8x8xf32>
    %60 = tpu.matmul %59, %34, %cst_23 {dimension_numbers = #tpu.dot_dimension_numbers<[2], [1], [1], [2], [0, 0, 0, 1, 1, 2], [0], [0]>} : vector<4x8x8xbf16>, vector<4x8x8xbf16>, vector<4x8x8xf32> -> vector<4x8x8xf32>
    "tpu.trace_stop"() : () -> ()
    %61 = tpu.reciprocal %58 : vector<4x8x1xf32> -> vector<4x8x1xf32>
    %62 = vector.broadcast %61 : vector<4x8x1xf32> to vector<4x8x8xf32>
    %63 = arith.mulf %60, %62 : vector<4x8x8xf32>
    %64 = arith.truncf %63 : vector<4x8x8xf32> to vector<4x8x8xbf16>
    %65 = tpu.transpose %64, [1, 0, 2] : vector<4x8x8xbf16> -> vector<8x4x8xbf16>
    %66 = vector.shape_cast %65 : vector<8x4x8xbf16> to vector<8x32xbf16>
    %c0_24 = arith.constant 0 : index
    %c0_25 = arith.constant 0 : index
    %67 = vector.load %arg5[%c0_24, %c0_25] : memref<32x32xbf16, #tpu.memory_space<vmem>>, vector<32x32xbf16>
    %cst_26 = arith.constant dense<0.000000e+00> : vector<8x32xf32>
    %68 = tpu.matmul %66, %67, %cst_26 {dimension_numbers = #tpu.dot_dimension_numbers<[1], [0], [0], [1], [0, 0, 1, 1], [], []>} : vector<8x32xbf16>, vector<32x32xbf16>, vector<8x32xf32> -> vector<8x32xf32>
    %c0_27 = arith.constant 0 : index
    %c0_28 = arith.constant 0 : index
    %69 = vector.load %arg6[%c0_27, %c0_28] : memref<1x32xf32, #tpu.memory_space<vmem>>, vector<1x32xf32>
    %70 = vector.broadcast %69 : vector<1x32xf32> to vector<8x32xf32>
    %71 = arith.addf %68, %70 : vector<8x32xf32>
    %72 = arith.addf %1, %71 : vector<8x32xf32>
    %c0_29 = arith.constant 0 : index
    %c0_30 = arith.constant 0 : index
    %c0_31 = arith.constant 0 : index
    %73 = vector.load %arg7[%c0_29, %c0_30, %c0_31] : memref<1x8x32xf32, #tpu.memory_space<vmem>>, vector<1x8x32xf32>
    %74 = vector.shape_cast %73 : vector<1x8x32xf32> to vector<8x32xf32>
    %75 = vector.shape_cast %72 : vector<8x32xf32> to vector<1x8x32xf32>
    tpu.vector_store %arg7[%c0_29, %c0_30, %c0_31], %75 {strides = array<i32>} : memref<1x8x32xf32, #tpu.memory_space<vmem>>, vector<1x8x32xf32>,
    return
  }
  func.func @transform_0(%arg0: i32) -> (i32, i32, i32) {
    %c0_i32 = arith.constant 0 : i32
    %c0_i32_0 = arith.constant 0 : i32
    %c0_i32_1 = arith.constant 0 : i32
    return %arg0, %c0_i32, %c0_i32_0 : i32, i32, i32
  }
  func.func @transform_1(%arg0: i32) -> (i32, i32) {
    %c0_i32 = arith.constant 0 : i32
    %c0_i32_0 = arith.constant 0 : i32
    %c0_i32_1 = arith.constant 0 : i32
    return %c0_i32, %c0_i32_0 : i32, i32
  }
  func.func @transform_2(%arg0: i32) -> (i32, i32) {
    %c0_i32 = arith.constant 0 : i32
    %c0_i32_0 = arith.constant 0 : i32
    %c0_i32_1 = arith.constant 0 : i32
    return %c0_i32, %c0_i32_0 : i32, i32
  }
  func.func @transform_3(%arg0: i32) -> (i32, i32) {
    %c0_i32 = arith.constant 0 : i32
    %c0_i32_0 = arith.constant 0 : i32
    %c0_i32_1 = arith.constant 0 : i32
    return %c0_i32, %c0_i32_0 : i32, i32
  }
  func.func @transform_4(%arg0: i32) -> (i32, i32) {
    %c0_i32 = arith.constant 0 : i32
    %c0_i32_0 = arith.constant 0 : i32
    %c0_i32_1 = arith.constant 0 : i32
    return %c0_i32, %c0_i32_0 : i32, i32
  }
  func.func @transform_5(%arg0: i32) -> (i32, i32) {
    %c0_i32 = arith.constant 0 : i32
    %c0_i32_0 = arith.constant 0 : i32
    %c0_i32_1 = arith.constant 0 : i32
    return %c0_i32, %c0_i32_0 : i32, i32
  }
  func.func @transform_6(%arg0: i32) -> (i32, i32, i32) {
    %c0_i32 = arith.constant 0 : i32
    %c0_i32_0 = arith.constant 0 : i32
    %c0_i32_1 = arith.constant 0 : i32
    return %arg0, %c0_i32, %c0_i32_0 : i32, i32, i32
  }
  func.func @transform_7(%arg0: i32) -> (i32, i32, i32) {
    %c0_i32 = arith.constant 0 : i32
    %c0_i32_0 = arith.constant 0 : i32
    %c0_i32_1 = arith.constant 0 : i32
    return %arg0, %c0_i32, %c0_i32_0 : i32, i32, i32
  }
}

module attributes {stable_mosaic.version = 11 : i64} {
  func.func @_attn_block_kernel(%arg0: i32, %arg1: memref<1x8x32xf32, #tpu.memory_space<vmem>>, %arg2: memref<1x32xf32, #tpu.memory_space<vmem>>, %arg3: memref<1x32xf32, #tpu.memory_space<vmem>>, %arg4: memref<32x96xbf16, #tpu.memory_space<vmem>>, %arg5: memref<32x32xbf16, #tpu.memory_space<vmem>>, %arg6: memref<1x32xf32, #tpu.memory_space<vmem>>, %arg7: memref<1x8x32xf32, #tpu.memory_space<vmem>>, %arg8: memref<1x1x128xf32, #tpu.memory_space<vmem>>) attributes {dimension_semantics = [#tpu.dimension_semantics<parallel>], iteration_bounds = array<i64: 2>, scalar_prefetch = 0 : i64, scratch_operands = 0 : i64, tpu.core_type = #tpu.core_type<tc>, window_params = [{transform_indices = @transform_0, window_bounds = array<i64: 1, 8, 32>}, {pipeline_mode = #tpu.pipeline_mode<synchronous>, transform_indices = @transform_1, window_bounds = array<i64: 1, 32>}, {pipeline_mode = #tpu.pipeline_mode<synchronous>, transform_indices = @transform_2, window_bounds = array<i64: 1, 32>}, {pipeline_mode = #tpu.pipeline_mode<synchronous>, transform_indices = @transform_3, window_bounds = array<i64: 32, 96>}, {pipeline_mode = #tpu.pipeline_mode<synchronous>, transform_indices = @transform_4, window_bounds = array<i64: 32, 32>}, {pipeline_mode = #tpu.pipeline_mode<synchronous>, transform_indices = @transform_5, window_bounds = array<i64: 1, 32>}, {transform_indices = @transform_6, window_bounds = array<i64: 1, 8, 32>}, {transform_indices = @transform_7, window_bounds = array<i64: 1, 1, 128>}]} {
    %c0 = arith.constant 0 : index
    %c0_0 = arith.constant 0 : index
    %c0_1 = arith.constant 0 : index
    %0 = vector.load %arg1[%c0, %c0_0, %c0_1] : memref<1x8x32xf32, #tpu.memory_space<vmem>>, vector<1x8x32xf32>
    %1 = vector.shape_cast %0 : vector<1x8x32xf32> to vector<8x32xf32>
    %cst = arith.constant dense<0.000000e+00> : vector<8xf32>
    %2 = vector.multi_reduction <add>, %1, %cst [1] : vector<8x32xf32> to vector<8xf32>
    %3 = vector.shape_cast %2 : vector<8xf32> to vector<8x1xf32>
    %cst_2 = arith.constant 3.200000e+01 : f32
    %4 = vector.broadcast %cst_2 : f32 to vector<8x1xf32>
    %5 = arith.divf %3, %4 : vector<8x1xf32>
    %6 = vector.broadcast %5 : vector<8x1xf32> to vector<8x32xf32>
    %7 = arith.subf %1, %6 : vector<8x32xf32>
    %8 = arith.mulf %7, %7 : vector<8x32xf32>
    %cst_3 = arith.constant dense<0.000000e+00> : vector<8xf32>
    %9 = vector.multi_reduction <add>, %8, %cst_3 [1] : vector<8x32xf32> to vector<8xf32>
    %10 = vector.shape_cast %9 : vector<8xf32> to vector<8x1xf32>
    %cst_4 = arith.constant 3.200000e+01 : f32
    %11 = vector.broadcast %cst_4 : f32 to vector<8x1xf32>
    %12 = arith.divf %10, %11 : vector<8x1xf32>
    %13 = vector.broadcast %5 : vector<8x1xf32> to vector<8x32xf32>
    %14 = arith.subf %1, %13 : vector<8x32xf32>
    %cst_5 = arith.constant 9.99999974E-6 : f32
    %15 = vector.broadcast %cst_5 : f32 to vector<8x1xf32>
    %16 = arith.addf %12, %15 : vector<8x1xf32>
    %17 = math.rsqrt %16 : vector<8x1xf32>
    %18 = vector.broadcast %17 : vector<8x1xf32> to vector<8x32xf32>
    %19 = arith.mulf %14, %18 : vector<8x32xf32>
    %c0_6 = arith.constant 0 : index
    %c0_7 = arith.constant 0 : index
    %20 = vector.load %arg2[%c0_6, %c0_7] : memref<1x32xf32, #tpu.memory_space<vmem>>, vector<1x32xf32>
    %21 = vector.broadcast %20 : vector<1x32xf32> to vector<8x32xf32>
    %22 = arith.mulf %19, %21 : vector<8x32xf32>
    %c0_8 = arith.constant 0 : index
    %c0_9 = arith.constant 0 : index
    %23 = vector.load %arg3[%c0_8, %c0_9] : memref<1x32xf32, #tpu.memory_space<vmem>>, vector<1x32xf32>
    %24 = vector.broadcast %23 : vector<1x32xf32> to vector<8x32xf32>
    %25 = arith.addf %22, %24 : vector<8x32xf32>
    %26 = arith.truncf %25 : vector<8x32xf32> to vector<8x32xbf16>
    %c0_10 = arith.constant 0 : index
    %c0_11 = arith.constant 0 : index
    %27 = vector.load %arg4[%c0_10, %c0_11] : memref<32x96xbf16, #tpu.memory_space<vmem>>, vector<32x96xbf16>
    %cst_12 = arith.constant dense<0.000000e+00> : vector<8x96xf32>
    %28 = tpu.matmul %26, %27, %cst_12 {dimension_numbers = #tpu.dot_dimension_numbers<[1], [0], [0], [1], [0, 0, 1, 1], [], []>} : vector<8x32xbf16>, vector<32x96xbf16>, vector<8x96xf32> -> vector<8x96xf32>
    %29 = arith.truncf %28 : vector<8x96xf32> to vector<8x96xbf16>
    %30 = vector.shape_cast %29 : vector<8x96xbf16> to vector<8x12x8xbf16>
    %31 = tpu.transpose %30, [1, 0, 2] : vector<8x12x8xbf16> -> vector<12x8x8xbf16>
    %32 = vector.extract_strided_slice %31 {offsets = [0, 0, 0], sizes = [4, 8, 8], strides = [1, 1, 1]} : vector<12x8x8xbf16> to vector<4x8x8xbf16>
    %33 = vector.extract_strided_slice %31 {offsets = [4, 0, 0], sizes = [4, 8, 8], strides = [1, 1, 1]} : vector<12x8x8xbf16> to vector<4x8x8xbf16>
    %34 = vector.extract_strided_slice %31 {offsets = [8, 0, 0], sizes = [4, 8, 8], strides = [1, 1, 1]} : vector<12x8x8xbf16> to vector<4x8x8xbf16>
    "tpu.trace_start"() <{level = 10 : i32, message = "hqd,hkd->hqk"}> : () -> ()
    %cst_13 = arith.constant dense<0.000000e+00> : vector<4x8x8xf32>
    %35 = tpu.matmul %32, %33, %cst_13 {dimension_numbers = #tpu.dot_dimension_numbers<[2], [2], [1], [1], [0, 0, 0, 1, 1, 1], [0], [0]>} : vector<4x8x8xbf16>, vector<4x8x8xbf16>, vector<4x8x8xf32> -> vector<4x8x8xf32>
    "tpu.trace_stop"() : () -> ()
    %cst_14 = arith.constant dense<0xFF800000> : vector<4x8xf32>
    %36 = vector.multi_reduction <maximumf>, %35, %cst_14 [2] : vector<4x8x8xf32> to vector<4x8xf32>
    %37 = vector.shape_cast %36 : vector<4x8xf32> to vector<4x8x1xf32>
    %38 = vector.broadcast %37 : vector<4x8x1xf32> to vector<4x8x8xf32>
    %39 = arith.subf %35, %38 : vector<4x8x8xf32>
    %40 = vector.extract_strided_slice %39 {offsets = [0, 0, 0], sizes = [4, 1, 8], strides = [1, 1, 1]} : vector<4x8x8xf32> to vector<4x1x8xf32>
    %41 = vector.shape_cast %40 : vector<4x1x8xf32> to vector<4x8xf32>
    %42 = math.exp %41 : vector<4x8xf32>
    %cst_15 = arith.constant dense<0.000000e+00> : vector<4xf32>
    %43 = vector.multi_reduction <add>, %42, %cst_15 [1] : vector<4x8xf32> to vector<4xf32>
    %44 = vector.shape_cast %43 : vector<4xf32> to vector<4x1xf32>
    %45 = vector.broadcast %44 : vector<4x1xf32> to vector<4x8xf32>
    %46 = arith.divf %42, %45 : vector<4x8xf32>
    %cst_16 = arith.constant dense<0.000000e+00> : vector<8xf32>
    %47 = vector.multi_reduction <add>, %46, %cst_16 [0] : vector<4x8xf32> to vector<8xf32>
    %48 = vector.shape_cast %47 : vector<8xf32> to vector<1x8xf32>
    %cst_17 = arith.constant 4.000000e+00 : f32
    %49 = vector.broadcast %cst_17 : f32 to vector<1x8xf32>
    %50 = arith.divf %48, %49 : vector<1x8xf32>
    %cst_18 = arith.constant 0.000000e+00 : f32
    %51 = vector.broadcast %cst_18 : f32 to vector<1x120xf32>
    %52 = tpu.concatenate %50, %51 in 1 : vector<1x8xf32>, vector<1x120xf32> -> vector<1x128xf32>
    %c0_19 = arith.constant 0 : index
    %c0_20 = arith.constant 0 : index
    %c0_21 = arith.constant 0 : index
    %53 = vector.load %arg8[%c0_19, %c0_20, %c0_21] : memref<1x1x128xf32, #tpu.memory_space<vmem>>, vector<1x1x128xf32>
    %54 = vector.shape_cast %53 : vector<1x1x128xf32> to vector<1x128xf32>
    %55 = vector.shape_cast %52 : vector<1x128xf32> to vector<1x1x128xf32>
    tpu.vector_store %arg8[%c0_19, %c0_20, %c0_21], %55 {strides = array<i32>} : memref<1x1x128xf32, #tpu.memory_space<vmem>>, vector<1x1x128xf32>,
    %56 = math.exp %39 : vector<4x8x8xf32>
    %cst_22 = arith.constant dense<0.000000e+00> : vector<4x8xf32>
    %57 = vector.multi_reduction <add>, %56, %cst_22 [2] : vector<4x8x8xf32> to vector<4x8xf32>
    %58 = vector.shape_cast %57 : vector<4x8xf32> to vector<4x8x1xf32>
    %59 = arith.truncf %56 : vector<4x8x8xf32> to vector<4x8x8xbf16>
    "tpu.trace_start"() <{level = 10 : i32, message = "hqk,hkd->hqd"}> : () -> ()
    %cst_23 = arith.constant dense<0.000000e+00> : vector<4x8x8xf32>
    %60 = tpu.matmul %59, %34, %cst_23 {dimension_numbers = #tpu.dot_dimension_numbers<[2], [1], [1], [2], [0, 0, 0, 1, 1, 2], [0], [0]>} : vector<4x8x8xbf16>, vector<4x8x8xbf16>, vector<4x8x8xf32> -> vector<4x8x8xf32>
    "tpu.trace_stop"() : () -> ()
    %61 = tpu.reciprocal %58 : vector<4x8x1xf32> -> vector<4x8x1xf32>
    %62 = vector.broadcast %61 : vector<4x8x1xf32> to vector<4x8x8xf32>
    %63 = arith.mulf %60, %62 : vector<4x8x8xf32>
    %64 = arith.truncf %63 : vector<4x8x8xf32> to vector<4x8x8xbf16>
    %65 = tpu.transpose %64, [1, 0, 2] : vector<4x8x8xbf16> -> vector<8x4x8xbf16>
    %66 = vector.shape_cast %65 : vector<8x4x8xbf16> to vector<8x32xbf16>
    %c0_24 = arith.constant 0 : index
    %c0_25 = arith.constant 0 : index
    %67 = vector.load %arg5[%c0_24, %c0_25] : memref<32x32xbf16, #tpu.memory_space<vmem>>, vector<32x32xbf16>
    %cst_26 = arith.constant dense<0.000000e+00> : vector<8x32xf32>
    %68 = tpu.matmul %66, %67, %cst_26 {dimension_numbers = #tpu.dot_dimension_numbers<[1], [0], [0], [1], [0, 0, 1, 1], [], []>} : vector<8x32xbf16>, vector<32x32xbf16>, vector<8x32xf32> -> vector<8x32xf32>
    %c0_27 = arith.constant 0 : index
    %c0_28 = arith.constant 0 : index
    %69 = vector.load %arg6[%c0_27, %c0_28] : memref<1x32xf32, #tpu.memory_space<vmem>>, vector<1x32xf32>
    %70 = vector.broadcast %69 : vector<1x32xf32> to vector<8x32xf32>
    %71 = arith.addf %68, %70 : vector<8x32xf32>
    %72 = arith.addf %1, %71 : vector<8x32xf32>
    %c0_29 = arith.constant 0 : index
    %c0_30 = arith.constant 0 : index
    %c0_31 = arith.constant 0 : index
    %73 = vector.load %arg7[%c0_29, %c0_30, %c0_31] : memref<1x8x32xf32, #tpu.memory_space<vmem>>, vector<1x8x32xf32>
    %74 = vector.shape_cast %73 : vector<1x8x32xf32> to vector<8x32xf32>
    %75 = vector.shape_cast %72 : vector<8x32xf32> to vector<1x8x32xf32>
    tpu.vector_store %arg7[%c0_29, %c0_30, %c0_31], %75 {strides = array<i32>} : memref<1x8x32xf32, #tpu.memory_space<vmem>>, vector<1x8x32xf32>,
    return
  }
  func.func @transform_0(%arg0: i32) -> (i32, i32, i32) {
    %c0_i32 = arith.constant 0 : i32
    %c0_i32_0 = arith.constant 0 : i32
    %c0_i32_1 = arith.constant 0 : i32
    return %arg0, %c0_i32, %c0_i32_0 : i32, i32, i32
  }
  func.func @transform_1(%arg0: i32) -> (i32, i32) {
    %c0_i32 = arith.constant 0 : i32
    %c0_i32_0 = arith.constant 0 : i32
    %c0_i32_1 = arith.constant 0 : i32
    return %c0_i32, %c0_i32_0 : i32, i32
  }
  func.func @transform_2(%arg0: i32) -> (i32, i32) {
    %c0_i32 = arith.constant 0 : i32
    %c0_i32_0 = arith.constant 0 : i32
    %c0_i32_1 = arith.constant 0 : i32
    return %c0_i32, %c0_i32_0 : i32, i32
  }
  func.func @transform_3(%arg0: i32) -> (i32, i32) {
    %c0_i32 = arith.constant 0 : i32
    %c0_i32_0 = arith.constant 0 : i32
    %c0_i32_1 = arith.constant 0 : i32
    return %c0_i32, %c0_i32_0 : i32, i32
  }
  func.func @transform_4(%arg0: i32) -> (i32, i32) {
    %c0_i32 = arith.constant 0 : i32
    %c0_i32_0 = arith.constant 0 : i32
    %c0_i32_1 = arith.constant 0 : i32
    return %c0_i32, %c0_i32_0 : i32, i32
  }
  func.func @transform_5(%arg0: i32) -> (i32, i32) {
    %c0_i32 = arith.constant 0 : i32
    %c0_i32_0 = arith.constant 0 : i32
    %c0_i32_1 = arith.constant 0 : i32
    return %c0_i32, %c0_i32_0 : i32, i32
  }
  func.func @transform_6(%arg0: i32) -> (i32, i32, i32) {
    %c0_i32 = arith.constant 0 : i32
    %c0_i32_0 = arith.constant 0 : i32
    %c0_i32_1 = arith.constant 0 : i32
    return %arg0, %c0_i32, %c0_i32_0 : i32, i32, i32
  }
  func.func @transform_7(%arg0: i32) -> (i32, i32, i32) {
    %c0_i32 = arith.constant 0 : i32
    %c0_i32_0 = arith.constant 0 : i32
    %c0_i32_1 = arith.constant 0 : i32
    return %arg0, %c0_i32, %c0_i32_0 : i32, i32, i32
  }
}

module attributes {stable_mosaic.version = 11 : i64} {
  func.func @_attn_block_kernel(%arg0: i32, %arg1: memref<1x8x32xf32, #tpu.memory_space<vmem>>, %arg2: memref<1x32xf32, #tpu.memory_space<vmem>>, %arg3: memref<1x32xf32, #tpu.memory_space<vmem>>, %arg4: memref<32x96xbf16, #tpu.memory_space<vmem>>, %arg5: memref<32x32xbf16, #tpu.memory_space<vmem>>, %arg6: memref<1x32xf32, #tpu.memory_space<vmem>>, %arg7: memref<1x8x32xf32, #tpu.memory_space<vmem>>, %arg8: memref<1x1x128xf32, #tpu.memory_space<vmem>>) attributes {dimension_semantics = [#tpu.dimension_semantics<parallel>], iteration_bounds = array<i64: 2>, scalar_prefetch = 0 : i64, scratch_operands = 0 : i64, tpu.core_type = #tpu.core_type<tc>, window_params = [{transform_indices = @transform_0, window_bounds = array<i64: 1, 8, 32>}, {pipeline_mode = #tpu.pipeline_mode<synchronous>, transform_indices = @transform_1, window_bounds = array<i64: 1, 32>}, {pipeline_mode = #tpu.pipeline_mode<synchronous>, transform_indices = @transform_2, window_bounds = array<i64: 1, 32>}, {pipeline_mode = #tpu.pipeline_mode<synchronous>, transform_indices = @transform_3, window_bounds = array<i64: 32, 96>}, {pipeline_mode = #tpu.pipeline_mode<synchronous>, transform_indices = @transform_4, window_bounds = array<i64: 32, 32>}, {pipeline_mode = #tpu.pipeline_mode<synchronous>, transform_indices = @transform_5, window_bounds = array<i64: 1, 32>}, {transform_indices = @transform_6, window_bounds = array<i64: 1, 8, 32>}, {transform_indices = @transform_7, window_bounds = array<i64: 1, 1, 128>}]} {
    %c0 = arith.constant 0 : index
    %c0_0 = arith.constant 0 : index
    %c0_1 = arith.constant 0 : index
    %0 = vector.load %arg1[%c0, %c0_0, %c0_1] : memref<1x8x32xf32, #tpu.memory_space<vmem>>, vector<1x8x32xf32>
    %1 = vector.shape_cast %0 : vector<1x8x32xf32> to vector<8x32xf32>
    %cst = arith.constant dense<0.000000e+00> : vector<8xf32>
    %2 = vector.multi_reduction <add>, %1, %cst [1] : vector<8x32xf32> to vector<8xf32>
    %3 = vector.shape_cast %2 : vector<8xf32> to vector<8x1xf32>
    %cst_2 = arith.constant 3.200000e+01 : f32
    %4 = vector.broadcast %cst_2 : f32 to vector<8x1xf32>
    %5 = arith.divf %3, %4 : vector<8x1xf32>
    %6 = vector.broadcast %5 : vector<8x1xf32> to vector<8x32xf32>
    %7 = arith.subf %1, %6 : vector<8x32xf32>
    %8 = arith.mulf %7, %7 : vector<8x32xf32>
    %cst_3 = arith.constant dense<0.000000e+00> : vector<8xf32>
    %9 = vector.multi_reduction <add>, %8, %cst_3 [1] : vector<8x32xf32> to vector<8xf32>
    %10 = vector.shape_cast %9 : vector<8xf32> to vector<8x1xf32>
    %cst_4 = arith.constant 3.200000e+01 : f32
    %11 = vector.broadcast %cst_4 : f32 to vector<8x1xf32>
    %12 = arith.divf %10, %11 : vector<8x1xf32>
    %13 = vector.broadcast %5 : vector<8x1xf32> to vector<8x32xf32>
    %14 = arith.subf %1, %13 : vector<8x32xf32>
    %cst_5 = arith.constant 9.99999974E-6 : f32
    %15 = vector.broadcast %cst_5 : f32 to vector<8x1xf32>
    %16 = arith.addf %12, %15 : vector<8x1xf32>
    %17 = math.rsqrt %16 : vector<8x1xf32>
    %18 = vector.broadcast %17 : vector<8x1xf32> to vector<8x32xf32>
    %19 = arith.mulf %14, %18 : vector<8x32xf32>
    %c0_6 = arith.constant 0 : index
    %c0_7 = arith.constant 0 : index
    %20 = vector.load %arg2[%c0_6, %c0_7] : memref<1x32xf32, #tpu.memory_space<vmem>>, vector<1x32xf32>
    %21 = vector.broadcast %20 : vector<1x32xf32> to vector<8x32xf32>
    %22 = arith.mulf %19, %21 : vector<8x32xf32>
    %c0_8 = arith.constant 0 : index
    %c0_9 = arith.constant 0 : index
    %23 = vector.load %arg3[%c0_8, %c0_9] : memref<1x32xf32, #tpu.memory_space<vmem>>, vector<1x32xf32>
    %24 = vector.broadcast %23 : vector<1x32xf32> to vector<8x32xf32>
    %25 = arith.addf %22, %24 : vector<8x32xf32>
    %26 = arith.truncf %25 : vector<8x32xf32> to vector<8x32xbf16>
    %c0_10 = arith.constant 0 : index
    %c0_11 = arith.constant 0 : index
    %27 = vector.load %arg4[%c0_10, %c0_11] : memref<32x96xbf16, #tpu.memory_space<vmem>>, vector<32x96xbf16>
    %cst_12 = arith.constant dense<0.000000e+00> : vector<8x96xf32>
    %28 = tpu.matmul %26, %27, %cst_12 {dimension_numbers = #tpu.dot_dimension_numbers<[1], [0], [0], [1], [0, 0, 1, 1], [], []>} : vector<8x32xbf16>, vector<32x96xbf16>, vector<8x96xf32> -> vector<8x96xf32>
    %29 = vector.shape_cast %28 : vector<8x96xf32> to vector<8x12x8xf32>
    %30 = tpu.transpose %29, [1, 0, 2] : vector<8x12x8xf32> -> vector<12x8x8xf32>
    %31 = arith.truncf %30 : vector<12x8x8xf32> to vector<12x8x8xbf16>
    %32 = vector.extract_strided_slice %31 {offsets = [0, 0, 0], sizes = [4, 8, 8], strides = [1, 1, 1]} : vector<12x8x8xbf16> to vector<4x8x8xbf16>
    %33 = vector.extract_strided_slice %31 {offsets = [4, 0, 0], sizes = [4, 8, 8], strides = [1, 1, 1]} : vector<12x8x8xbf16> to vector<4x8x8xbf16>
    %34 = vector.extract_strided_slice %31 {offsets = [8, 0, 0], sizes = [4, 8, 8], strides = [1, 1, 1]} : vector<12x8x8xbf16> to vector<4x8x8xbf16>
    "tpu.trace_start"() <{level = 10 : i32, message = "hqd,hkd->hqk"}> : () -> ()
    %cst_13 = arith.constant dense<0.000000e+00> : vector<4x8x8xf32>
    %35 = tpu.matmul %32, %33, %cst_13 {dimension_numbers = #tpu.dot_dimension_numbers<[2], [2], [1], [1], [0, 0, 0, 1, 1, 1], [0], [0]>} : vector<4x8x8xbf16>, vector<4x8x8xbf16>, vector<4x8x8xf32> -> vector<4x8x8xf32>
    "tpu.trace_stop"() : () -> ()
    %cst_14 = arith.constant dense<0xFF800000> : vector<4x8xf32>
    %36 = vector.multi_reduction <maximumf>, %35, %cst_14 [2] : vector<4x8x8xf32> to vector<4x8xf32>
    %37 = vector.shape_cast %36 : vector<4x8xf32> to vector<4x8x1xf32>
    %38 = vector.broadcast %37 : vector<4x8x1xf32> to vector<4x8x8xf32>
    %39 = arith.subf %35, %38 : vector<4x8x8xf32>
    %40 = vector.extract_strided_slice %39 {offsets = [0, 0, 0], sizes = [4, 1, 8], strides = [1, 1, 1]} : vector<4x8x8xf32> to vector<4x1x8xf32>
    %41 = vector.shape_cast %40 : vector<4x1x8xf32> to vector<4x8xf32>
    %42 = math.exp %41 : vector<4x8xf32>
    %cst_15 = arith.constant dense<0.000000e+00> : vector<4xf32>
    %43 = vector.multi_reduction <add>, %42, %cst_15 [1] : vector<4x8xf32> to vector<4xf32>
    %44 = vector.shape_cast %43 : vector<4xf32> to vector<4x1xf32>
    %45 = vector.broadcast %44 : vector<4x1xf32> to vector<4x8xf32>
    %46 = arith.divf %42, %45 : vector<4x8xf32>
    %cst_16 = arith.constant dense<0.000000e+00> : vector<8xf32>
    %47 = vector.multi_reduction <add>, %46, %cst_16 [0] : vector<4x8xf32> to vector<8xf32>
    %48 = vector.shape_cast %47 : vector<8xf32> to vector<1x8xf32>
    %cst_17 = arith.constant 4.000000e+00 : f32
    %49 = vector.broadcast %cst_17 : f32 to vector<1x8xf32>
    %50 = arith.divf %48, %49 : vector<1x8xf32>
    %cst_18 = arith.constant 0.000000e+00 : f32
    %51 = vector.broadcast %cst_18 : f32 to vector<1x120xf32>
    %52 = tpu.concatenate %50, %51 in 1 : vector<1x8xf32>, vector<1x120xf32> -> vector<1x128xf32>
    %c0_19 = arith.constant 0 : index
    %c0_20 = arith.constant 0 : index
    %c0_21 = arith.constant 0 : index
    %53 = vector.load %arg8[%c0_19, %c0_20, %c0_21] : memref<1x1x128xf32, #tpu.memory_space<vmem>>, vector<1x1x128xf32>
    %54 = vector.shape_cast %53 : vector<1x1x128xf32> to vector<1x128xf32>
    %55 = vector.shape_cast %52 : vector<1x128xf32> to vector<1x1x128xf32>
    tpu.vector_store %arg8[%c0_19, %c0_20, %c0_21], %55 {strides = array<i32>} : memref<1x1x128xf32, #tpu.memory_space<vmem>>, vector<1x1x128xf32>,
    %56 = math.exp %39 : vector<4x8x8xf32>
    %cst_22 = arith.constant dense<0.000000e+00> : vector<4x8xf32>
    %57 = vector.multi_reduction <add>, %56, %cst_22 [2] : vector<4x8x8xf32> to vector<4x8xf32>
    %58 = vector.shape_cast %57 : vector<4x8xf32> to vector<4x8x1xf32>
    %59 = arith.truncf %56 : vector<4x8x8xf32> to vector<4x8x8xbf16>
    "tpu.trace_start"() <{level = 10 : i32, message = "hqk,hkd->hqd"}> : () -> ()
    %cst_23 = arith.constant dense<0.000000e+00> : vector<4x8x8xf32>
    %60 = tpu.matmul %59, %34, %cst_23 {dimension_numbers = #tpu.dot_dimension_numbers<[2], [1], [1], [2], [0, 0, 0, 1, 1, 2], [0], [0]>} : vector<4x8x8xbf16>, vector<4x8x8xbf16>, vector<4x8x8xf32> -> vector<4x8x8xf32>
    "tpu.trace_stop"() : () -> ()
    %61 = tpu.reciprocal %58 : vector<4x8x1xf32> -> vector<4x8x1xf32>
    %62 = vector.broadcast %61 : vector<4x8x1xf32> to vector<4x8x8xf32>
    %63 = arith.mulf %60, %62 : vector<4x8x8xf32>
    %64 = tpu.transpose %63, [1, 0, 2] : vector<4x8x8xf32> -> vector<8x4x8xf32>
    %65 = vector.shape_cast %64 : vector<8x4x8xf32> to vector<8x32xf32>
    %66 = arith.truncf %65 : vector<8x32xf32> to vector<8x32xbf16>
    %c0_24 = arith.constant 0 : index
    %c0_25 = arith.constant 0 : index
    %67 = vector.load %arg5[%c0_24, %c0_25] : memref<32x32xbf16, #tpu.memory_space<vmem>>, vector<32x32xbf16>
    %cst_26 = arith.constant dense<0.000000e+00> : vector<8x32xf32>
    %68 = tpu.matmul %66, %67, %cst_26 {dimension_numbers = #tpu.dot_dimension_numbers<[1], [0], [0], [1], [0, 0, 1, 1], [], []>} : vector<8x32xbf16>, vector<32x32xbf16>, vector<8x32xf32> -> vector<8x32xf32>
    %c0_27 = arith.constant 0 : index
    %c0_28 = arith.constant 0 : index
    %69 = vector.load %arg6[%c0_27, %c0_28] : memref<1x32xf32, #tpu.memory_space<vmem>>, vector<1x32xf32>
    %70 = vector.broadcast %69 : vector<1x32xf32> to vector<8x32xf32>
    %71 = arith.addf %68, %70 : vector<8x32xf32>
    %72 = arith.addf %1, %71 : vector<8x32xf32>
    %c0_29 = arith.constant 0 : index
    %c0_30 = arith.constant 0 : index
    %c0_31 = arith.constant 0 : index
    %73 = vector.load %arg7[%c0_29, %c0_30, %c0_31] : memref<1x8x32xf32, #tpu.memory_space<vmem>>, vector<1x8x32xf32>
    %74 = vector.shape_cast %73 : vector<1x8x32xf32> to vector<8x32xf32>
    %75 = vector.shape_cast %72 : vector<8x32xf32> to vector<1x8x32xf32>
    tpu.vector_store %arg7[%c0_29, %c0_30, %c0_31], %75 {strides = array<i32>} : memref<1x8x32xf32, #tpu.memory_space<vmem>>, vector<1x8x32xf32>,
    return
  }
  func.func @transform_0(%arg0: i32) -> (i32, i32, i32) {
    %c0_i32 = arith.constant 0 : i32
    %c0_i32_0 = arith.constant 0 : i32
    %c0_i32_1 = arith.constant 0 : i32
    return %arg0, %c0_i32, %c0_i32_0 : i32, i32, i32
  }
  func.func @transform_1(%arg0: i32) -> (i32, i32) {
    %c0_i32 = arith.constant 0 : i32
    %c0_i32_0 = arith.constant 0 : i32
    %c0_i32_1 = arith.constant 0 : i32
    return %c0_i32, %c0_i32_0 : i32, i32
  }
  func.func @transform_2(%arg0: i32) -> (i32, i32) {
    %c0_i32 = arith.constant 0 : i32
    %c0_i32_0 = arith.constant 0 : i32
    %c0_i32_1 = arith.constant 0 : i32
    return %c0_i32, %c0_i32_0 : i32, i32
  }
  func.func @transform_3(%arg0: i32) -> (i32, i32) {
    %c0_i32 = arith.constant 0 : i32
    %c0_i32_0 = arith.constant 0 : i32
    %c0_i32_1 = arith.constant 0 : i32
    return %c0_i32, %c0_i32_0 : i32, i32
  }
  func.func @transform_4(%arg0: i32) -> (i32, i32) {
    %c0_i32 = arith.constant 0 : i32
    %c0_i32_0 = arith.constant 0 : i32
    %c0_i32_1 = arith.constant 0 : i32
    return %c0_i32, %c0_i32_0 : i32, i32
  }
  func.func @transform_5(%arg0: i32) -> (i32, i32) {
    %c0_i32 = arith.constant 0 : i32
    %c0_i32_0 = arith.constant 0 : i32
    %c0_i32_1 = arith.constant 0 : i32
    return %c0_i32, %c0_i32_0 : i32, i32
  }
  func.func @transform_6(%arg0: i32) -> (i32, i32, i32) {
    %c0_i32 = arith.constant 0 : i32
    %c0_i32_0 = arith.constant 0 : i32
    %c0_i32_1 = arith.constant 0 : i32
    return %arg0, %c0_i32, %c0_i32_0 : i32, i32, i32
  }
  func.func @transform_7(%arg0: i32) -> (i32, i32, i32) {
    %c0_i32 = arith.constant 0 : i32
    %c0_i32_0 = arith.constant 0 : i32
    %c0_i32_1 = arith.constant 0 : i32
    return %arg0, %c0_i32, %c0_i32_0 : i32, i32, i32
  }
}

module attributes {stable_mosaic.version = 11 : i64} {
  func.func @_attn_block_kernel(%arg0: i32, %arg1: memref<1x8x32xf32, #tpu.memory_space<vmem>>, %arg2: memref<1x32xf32, #tpu.memory_space<vmem>>, %arg3: memref<1x32xf32, #tpu.memory_space<vmem>>, %arg4: memref<32x96xbf16, #tpu.memory_space<vmem>>, %arg5: memref<32x32xbf16, #tpu.memory_space<vmem>>, %arg6: memref<1x32xf32, #tpu.memory_space<vmem>>, %arg7: memref<1x8x32xf32, #tpu.memory_space<vmem>>, %arg8: memref<1x1x128xf32, #tpu.memory_space<vmem>>) attributes {dimension_semantics = [#tpu.dimension_semantics<parallel>], iteration_bounds = array<i64: 2>, scalar_prefetch = 0 : i64, scratch_operands = 0 : i64, tpu.core_type = #tpu.core_type<tc>, window_params = [{transform_indices = @transform_0, window_bounds = array<i64: 1, 8, 32>}, {pipeline_mode = #tpu.pipeline_mode<synchronous>, transform_indices = @transform_1, window_bounds = array<i64: 1, 32>}, {pipeline_mode = #tpu.pipeline_mode<synchronous>, transform_indices = @transform_2, window_bounds = array<i64: 1, 32>}, {pipeline_mode = #tpu.pipeline_mode<synchronous>, transform_indices = @transform_3, window_bounds = array<i64: 32, 96>}, {pipeline_mode = #tpu.pipeline_mode<synchronous>, transform_indices = @transform_4, window_bounds = array<i64: 32, 32>}, {pipeline_mode = #tpu.pipeline_mode<synchronous>, transform_indices = @transform_5, window_bounds = array<i64: 1, 32>}, {transform_indices = @transform_6, window_bounds = array<i64: 1, 8, 32>}, {transform_indices = @transform_7, window_bounds = array<i64: 1, 1, 128>}]} {
    %c0 = arith.constant 0 : index
    %c0_0 = arith.constant 0 : index
    %c0_1 = arith.constant 0 : index
    %0 = vector.load %arg1[%c0, %c0_0, %c0_1] : memref<1x8x32xf32, #tpu.memory_space<vmem>>, vector<1x8x32xf32>
    %1 = vector.shape_cast %0 : vector<1x8x32xf32> to vector<8x32xf32>
    %cst = arith.constant dense<0.000000e+00> : vector<8xf32>
    %2 = vector.multi_reduction <add>, %1, %cst [1] : vector<8x32xf32> to vector<8xf32>
    %3 = vector.shape_cast %2 : vector<8xf32> to vector<8x1xf32>
    %cst_2 = arith.constant 3.200000e+01 : f32
    %4 = vector.broadcast %cst_2 : f32 to vector<8x1xf32>
    %5 = arith.divf %3, %4 : vector<8x1xf32>
    %6 = vector.broadcast %5 : vector<8x1xf32> to vector<8x32xf32>
    %7 = arith.subf %1, %6 : vector<8x32xf32>
    %8 = arith.mulf %7, %7 : vector<8x32xf32>
    %cst_3 = arith.constant dense<0.000000e+00> : vector<8xf32>
    %9 = vector.multi_reduction <add>, %8, %cst_3 [1] : vector<8x32xf32> to vector<8xf32>
    %10 = vector.shape_cast %9 : vector<8xf32> to vector<8x1xf32>
    %cst_4 = arith.constant 3.200000e+01 : f32
    %11 = vector.broadcast %cst_4 : f32 to vector<8x1xf32>
    %12 = arith.divf %10, %11 : vector<8x1xf32>
    %13 = vector.broadcast %5 : vector<8x1xf32> to vector<8x32xf32>
    %14 = arith.subf %1, %13 : vector<8x32xf32>
    %cst_5 = arith.constant 9.99999974E-6 : f32
    %15 = vector.broadcast %cst_5 : f32 to vector<8x1xf32>
    %16 = arith.addf %12, %15 : vector<8x1xf32>
    %17 = math.rsqrt %16 : vector<8x1xf32>
    %18 = vector.broadcast %17 : vector<8x1xf32> to vector<8x32xf32>
    %19 = arith.mulf %14, %18 : vector<8x32xf32>
    %c0_6 = arith.constant 0 : index
    %c0_7 = arith.constant 0 : index
    %20 = vector.load %arg2[%c0_6, %c0_7] : memref<1x32xf32, #tpu.memory_space<vmem>>, vector<1x32xf32>
    %21 = vector.broadcast %20 : vector<1x32xf32> to vector<8x32xf32>
    %22 = arith.mulf %19, %21 : vector<8x32xf32>
    %c0_8 = arith.constant 0 : index
    %c0_9 = arith.constant 0 : index
    %23 = vector.load %arg3[%c0_8, %c0_9] : memref<1x32xf32, #tpu.memory_space<vmem>>, vector<1x32xf32>
    %24 = vector.broadcast %23 : vector<1x32xf32> to vector<8x32xf32>
    %25 = arith.addf %22, %24 : vector<8x32xf32>
    %26 = arith.truncf %25 : vector<8x32xf32> to vector<8x32xbf16>
    %c0_10 = arith.constant 0 : index
    %c0_11 = arith.constant 0 : index
    %27 = vector.load %arg4[%c0_10, %c0_11] : memref<32x96xbf16, #tpu.memory_space<vmem>>, vector<32x96xbf16>
    %cst_12 = arith.constant dense<0.000000e+00> : vector<8x96xf32>
    %28 = tpu.matmul %26, %27, %cst_12 {dimension_numbers = #tpu.dot_dimension_numbers<[1], [0], [0], [1], [0, 0, 1, 1], [], []>} : vector<8x32xbf16>, vector<32x96xbf16>, vector<8x96xf32> -> vector<8x96xf32>
    %29 = vector.shape_cast %28 : vector<8x96xf32> to vector<8x12x8xf32>
    %30 = tpu.transpose %29, [1, 0, 2] : vector<8x12x8xf32> -> vector<12x8x8xf32>
    %31 = arith.truncf %30 : vector<12x8x8xf32> to vector<12x8x8xbf16>
    %32 = vector.extract_strided_slice %31 {offsets = [0, 0, 0], sizes = [4, 8, 8], strides = [1, 1, 1]} : vector<12x8x8xbf16> to vector<4x8x8xbf16>
    %33 = vector.extract_strided_slice %31 {offsets = [4, 0, 0], sizes = [4, 8, 8], strides = [1, 1, 1]} : vector<12x8x8xbf16> to vector<4x8x8xbf16>
    %34 = vector.extract_strided_slice %31 {offsets = [8, 0, 0], sizes = [4, 8, 8], strides = [1, 1, 1]} : vector<12x8x8xbf16> to vector<4x8x8xbf16>
    "tpu.trace_start"() <{level = 10 : i32, message = "hqd,hkd->hqk"}> : () -> ()
    %cst_13 = arith.constant dense<0.000000e+00> : vector<4x8x8xf32>
    %35 = tpu.matmul %32, %33, %cst_13 {dimension_numbers = #tpu.dot_dimension_numbers<[2], [2], [1], [1], [0, 0, 0, 1, 1, 1], [0], [0]>} : vector<4x8x8xbf16>, vector<4x8x8xbf16>, vector<4x8x8xf32> -> vector<4x8x8xf32>
    "tpu.trace_stop"() : () -> ()
    %cst_14 = arith.constant dense<0xFF800000> : vector<4x8xf32>
    %36 = vector.multi_reduction <maximumf>, %35, %cst_14 [2] : vector<4x8x8xf32> to vector<4x8xf32>
    %37 = vector.shape_cast %36 : vector<4x8xf32> to vector<4x8x1xf32>
    %38 = vector.broadcast %37 : vector<4x8x1xf32> to vector<4x8x8xf32>
    %39 = arith.subf %35, %38 : vector<4x8x8xf32>
    %40 = vector.extract_strided_slice %39 {offsets = [0, 0, 0], sizes = [4, 1, 8], strides = [1, 1, 1]} : vector<4x8x8xf32> to vector<4x1x8xf32>
    %41 = vector.shape_cast %40 : vector<4x1x8xf32> to vector<4x8xf32>
    %42 = math.exp %41 : vector<4x8xf32>
    %cst_15 = arith.constant dense<0.000000e+00> : vector<4xf32>
    %43 = vector.multi_reduction <add>, %42, %cst_15 [1] : vector<4x8xf32> to vector<4xf32>
    %44 = vector.shape_cast %43 : vector<4xf32> to vector<4x1xf32>
    %45 = vector.broadcast %44 : vector<4x1xf32> to vector<4x8xf32>
    %46 = arith.divf %42, %45 : vector<4x8xf32>
    %cst_16 = arith.constant dense<0.000000e+00> : vector<8xf32>
    %47 = vector.multi_reduction <add>, %46, %cst_16 [0] : vector<4x8xf32> to vector<8xf32>
    %48 = vector.shape_cast %47 : vector<8xf32> to vector<1x8xf32>
    %cst_17 = arith.constant 4.000000e+00 : f32
    %49 = vector.broadcast %cst_17 : f32 to vector<1x8xf32>
    %50 = arith.divf %48, %49 : vector<1x8xf32>
    %cst_18 = arith.constant 0.000000e+00 : f32
    %51 = vector.broadcast %cst_18 : f32 to vector<1x120xf32>
    %52 = tpu.concatenate %50, %51 in 1 : vector<1x8xf32>, vector<1x120xf32> -> vector<1x128xf32>
    %c0_19 = arith.constant 0 : index
    %c0_20 = arith.constant 0 : index
    %c0_21 = arith.constant 0 : index
    %53 = vector.load %arg8[%c0_19, %c0_20, %c0_21] : memref<1x1x128xf32, #tpu.memory_space<vmem>>, vector<1x1x128xf32>
    %54 = vector.shape_cast %53 : vector<1x1x128xf32> to vector<1x128xf32>
    %55 = vector.shape_cast %52 : vector<1x128xf32> to vector<1x1x128xf32>
    tpu.vector_store %arg8[%c0_19, %c0_20, %c0_21], %55 {strides = array<i32>} : memref<1x1x128xf32, #tpu.memory_space<vmem>>, vector<1x1x128xf32>,
    %56 = math.exp %39 : vector<4x8x8xf32>
    %cst_22 = arith.constant dense<0.000000e+00> : vector<4x8xf32>
    %57 = vector.multi_reduction <add>, %56, %cst_22 [2] : vector<4x8x8xf32> to vector<4x8xf32>
    %58 = vector.shape_cast %57 : vector<4x8xf32> to vector<4x8x1xf32>
    %59 = arith.truncf %56 : vector<4x8x8xf32> to vector<4x8x8xbf16>
    "tpu.trace_start"() <{level = 10 : i32, message = "hqk,hkd->hqd"}> : () -> ()
    %cst_23 = arith.constant dense<0.000000e+00> : vector<4x8x8xf32>
    %60 = tpu.matmul %59, %34, %cst_23 {dimension_numbers = #tpu.dot_dimension_numbers<[2], [1], [1], [2], [0, 0, 0, 1, 1, 2], [0], [0]>} : vector<4x8x8xbf16>, vector<4x8x8xbf16>, vector<4x8x8xf32> -> vector<4x8x8xf32>
    "tpu.trace_stop"() : () -> ()
    %61 = tpu.reciprocal %58 : vector<4x8x1xf32> -> vector<4x8x1xf32>
    %62 = vector.broadcast %61 : vector<4x8x1xf32> to vector<4x8x8xf32>
    %63 = arith.mulf %60, %62 : vector<4x8x8xf32>
    %64 = tpu.transpose %63, [1, 0, 2] : vector<4x8x8xf32> -> vector<8x4x8xf32>
    %65 = vector.shape_cast %64 : vector<8x4x8xf32> to vector<8x32xf32>
    %66 = arith.truncf %65 : vector<8x32xf32> to vector<8x32xbf16>
    %c0_24 = arith.constant 0 : index
    %c0_25 = arith.constant 0 : index
    %67 = vector.load %arg5[%c0_24, %c0_25] : memref<32x32xbf16, #tpu.memory_space<vmem>>, vector<32x32xbf16>
    %cst_26 = arith.constant dense<0.000000e+00> : vector<8x32xf32>
    %68 = tpu.matmul %66, %67, %cst_26 {dimension_numbers = #tpu.dot_dimension_numbers<[1], [0], [0], [1], [0, 0, 1, 1], [], []>} : vector<8x32xbf16>, vector<32x32xbf16>, vector<8x32xf32> -> vector<8x32xf32>
    %c0_27 = arith.constant 0 : index
    %c0_28 = arith.constant 0 : index
    %69 = vector.load %arg6[%c0_27, %c0_28] : memref<1x32xf32, #tpu.memory_space<vmem>>, vector<1x32xf32>
    %70 = vector.broadcast %69 : vector<1x32xf32> to vector<8x32xf32>
    %71 = arith.addf %68, %70 : vector<8x32xf32>
    %72 = arith.addf %1, %71 : vector<8x32xf32>
    %c0_29 = arith.constant 0 : index
    %c0_30 = arith.constant 0 : index
    %c0_31 = arith.constant 0 : index
    %73 = vector.load %arg7[%c0_29, %c0_30, %c0_31] : memref<1x8x32xf32, #tpu.memory_space<vmem>>, vector<1x8x32xf32>
    %74 = vector.shape_cast %73 : vector<1x8x32xf32> to vector<8x32xf32>
    %75 = vector.shape_cast %72 : vector<8x32xf32> to vector<1x8x32xf32>
    tpu.vector_store %arg7[%c0_29, %c0_30, %c0_31], %75 {strides = array<i32>} : memref<1x8x32xf32, #tpu.memory_space<vmem>>, vector<1x8x32xf32>,
    return
  }
  func.func @transform_0(%arg0: i32) -> (i32, i32, i32) {
    %c0_i32 = arith.constant 0 : i32
    %c0_i32_0 = arith.constant 0 : i32
    %c0_i32_1 = arith.constant 0 : i32
    return %arg0, %c0_i32, %c0_i32_0 : i32, i32, i32
  }
  func.func @transform_1(%arg0: i32) -> (i32, i32) {
    %c0_i32 = arith.constant 0 : i32
    %c0_i32_0 = arith.constant 0 : i32
    %c0_i32_1 = arith.constant 0 : i32
    return %c0_i32, %c0_i32_0 : i32, i32
  }
  func.func @transform_2(%arg0: i32) -> (i32, i32) {
    %c0_i32 = arith.constant 0 : i32
    %c0_i32_0 = arith.constant 0 : i32
    %c0_i32_1 = arith.constant 0 : i32
    return %c0_i32, %c0_i32_0 : i32, i32
  }
  func.func @transform_3(%arg0: i32) -> (i32, i32) {
    %c0_i32 = arith.constant 0 : i32
    %c0_i32_0 = arith.constant 0 : i32
    %c0_i32_1 = arith.constant 0 : i32
    return %c0_i32, %c0_i32_0 : i32, i32
  }
  func.func @transform_4(%arg0: i32) -> (i32, i32) {
    %c0_i32 = arith.constant 0 : i32
    %c0_i32_0 = arith.constant 0 : i32
    %c0_i32_1 = arith.constant 0 : i32
    return %c0_i32, %c0_i32_0 : i32, i32
  }
  func.func @transform_5(%arg0: i32) -> (i32, i32) {
    %c0_i32 = arith.constant 0 : i32
    %c0_i32_0 = arith.constant 0 : i32
    %c0_i32_1 = arith.constant 0 : i32
    return %c0_i32, %c0_i32_0 : i32, i32
  }
  func.func @transform_6(%arg0: i32) -> (i32, i32, i32) {
    %c0_i32 = arith.constant 0 : i32
    %c0_i32_0 = arith.constant 0 : i32
    %c0_i32_1 = arith.constant 0 : i32
    return %arg0, %c0_i32, %c0_i32_0 : i32, i32, i32
  }
  func.func @transform_7(%arg0: i32) -> (i32, i32, i32) {
    %c0_i32 = arith.constant 0 : i32
    %c0_i32_0 = arith.constant 0 : i32
    %c0_i32_1 = arith.constant 0 : i32
    return %arg0, %c0_i32, %c0_i32_0 : i32, i32, i32
  }
}

</mosaic_0001>

<llo_original>
// kernel: tpu_custom_call.1
$region0: #{tpu_custom_call.1}
  #allocation0 [shape = 'u32[]', space=smem, size = 0x4, offset = 0x4, fixed_abs, tag = 'smem constant byte address 0x4 - core index']
  #allocation1 [shape = 'u32[72,128]{1,0:T(1,128)}', space=vmem, size = 0x9000, scoped, tag = 'internal scratch']
  %s0 = inlined_call_operand.hbm [shape: f32[2,8,32], index: 0, kind: input, shape index: {}]
  %s1 = inlined_call_operand.hbm [shape: f32[1,32], index: 1, kind: input, shape index: {}]
  %s2 = inlined_call_operand.vmem [shape: f32[1,32], index: 2, kind: input, shape index: {}]
  %s3 = inlined_call_operand.hbm [shape: bf16[32,96], index: 3, kind: input, shape index: {}]
  %s4 = inlined_call_operand.hbm [shape: bf16[32,32], index: 4, kind: input, shape index: {}]
  %s5 = inlined_call_operand.vmem [shape: f32[1,32], index: 5, kind: input, shape index: {}]
  %s6 = inlined_call_operand.hbm [shape: f32[2,8,32], index: 6, kind: output, shape index: {0}]
  %s7 = inlined_call_operand.hbm [shape: f32[2,1,128], index: 7, kind: output, shape index: {1}]
  %8 = xla_tuple %s6, %s7
  %s9 = sld [smem:[#allocation0]]
  $region81: #{tpu_custom_call.1} parent=0
    _
  %s11 = ssub.s32 1, %s9
  %s12 = scalar_select 0, %s11, %s9
  $region1: #{tpu_custom_call.1} parent=0
    #allocation2 [shape = 'u8[8192]{0}', space=vmem, size = 0x2000, scoped, tag = 'input window, operand 0']
    #allocation3 [shape = 's32[2]{0}', space=sflag, size = 0x8, scoped, tag = 'scoped memory for tpu_custom_call.1']
    #allocation4 [shape = 's32[2]{0}', space=sflag, size = 0x8, scoped, tag = 'scoped memory for tpu_custom_call.1']
    #allocation5 [shape = 'u8[512]{0}', space=vmem, size = 0x400, scoped, tag = 'input window, operand 1, single buffered']
    #allocation6 [shape = 's32[1]{0}', space=sflag, size = 0x4, scoped, tag = 'scoped memory for tpu_custom_call.1']
    #allocation7 [shape = 'u8[8192]{0}', space=vmem, size = 0x2000, scoped, tag = 'input window, operand 3, single buffered']
    #allocation8 [shape = 'u8[8192]{0}', space=vmem, size = 0x2000, scoped, tag = 'input window, operand 4, single buffered']
    #allocation9 [shape = 's32[1]{0}', space=sflag, size = 0x4, scoped, tag = 'scoped memory for tpu_custom_call.1']
    #allocation10 [shape = 'u8[8192]{0}', space=vmem, size = 0x2000, scoped, tag = 'output window, operand 0']
    #allocation11 [shape = 'u8[1024]{0}', space=vmem, size = 0x400, scoped, tag = 'output window, operand 1']
    #allocation12 [shape = 's32[2]{0}', space=sflag, size = 0x8, scoped, tag = 'scoped memory for tpu_custom_call.1']
    %13 = vsyncpa [#allocation3], 0
    %s14 = scalar_lea.sflag [#allocation3], 1
    %15 = vsyncpa %s14, 0
    %16 = vsyncpa [#allocation6], 0
    %17 = vsyncpa [#allocation9], 0
    %18 = vsyncpa [#allocation4], 0
    %s19 = scalar_lea.sflag [#allocation4], 1
    %20 = vsyncpa %s19, 0
    %21 = vsyncpa [#allocation12], 0
    %s22 = scalar_lea.sflag [#allocation12], 1
    %23 = vsyncpa %s22, 0
    loop: start=0, step=1, limit=4
    $region2: #{tpu_custom_call.1} parent=1 // loop_pre_header
      _
    $region3: #{tpu_custom_call.1} parent=1 // loop_header
      %s25 = sphi 0, %s29
      %p26 = scmp.ge.s32.totalorder %s25, 4
      %s35 = sphi 0, %s37
      %s38 = sphi 0, %s35
      %s39 = sphi 0, %s38
      %s55 = sphi 0, %s39
      %s59 = sphi 0, %s59
      %s61 = sphi 0, %s59
      %s62 = sphi 0, %s61
      %s76 = sphi 0, %s62
      %s80 = sphi 0, %s80
      %s82 = sphi 0, %s80
      %s83 = sphi 0, %s82
      %s97 = sphi 0, %s83
      %s101 = sphi 0, %s101
      %s103 = sphi 0, %s101
      %s104 = sphi 0, %s103
      %s118 = sphi 0, %s104
      %s122 = sphi 0, %s122
      %s124 = sphi 0, %s122
      %s125 = sphi 0, %s124
      %s139 = sphi 0, %s125
      %s143 = sphi 0, %s143
      %s145 = sphi 0, %s143
      %s146 = sphi 0, %s145
      %s160 = sphi 0, %s146
      %s166 = sphi 0, %s168
      %s169 = sphi 0, %s166
      %s170 = sphi 0, %s169
      %s186 = sphi 0, %s170
      %s192 = sphi 0, %s194
      %s195 = sphi 0, %s192
      %s196 = sphi 0, %s195
      %s212 = sphi 0, %s196
    $region4: #{tpu_custom_call.1} parent=1 // loop_header_branch
      %28 = sbr.rel (%p26) target = $region8
    $region5: #{tpu_custom_call.1} parent=1 // loop_body
      %s30 = ssub.s32 %s25, 1
      %s31 = ssub.s32 %s25, 2
      %s32 = sadd.s32 %s25, 1
      %s33 = ssub.s32 %s25, %s32
      %p34 = scmp.eq.s32.totalorder %s33, 0
      %s36 = sadd.s32 %s35, 1
      %s37 = scalar_select %p34, %s35, %s36
      %p40 = pneg %p34
      %p41 = scmp.eq.s32.totalorder %s25, 1
      %p42 = por %p40, %p41
      %p43 = scmp.ne.s32.totalorder %s35, %s38
      %p44 = scmp.eq.s32.totalorder %s25, 0
      %p45 = por %p43, %p44
      %p46 = scmp.ne.s32.totalorder %s35, %s38
      %p47 = scmp.eq.s32.totalorder %s30, 1
      %p48 = por %p46, %p47
      %p49 = scmp.ne.s32.totalorder %s38, %s39
      %p50 = scmp.eq.s32.totalorder %s30, 0
      %p51 = por %p49, %p50
      %p52 = scmp.ne.s32.totalorder %s38, %s39
      %p53 = scmp.eq.s32.totalorder %s31, 1
      %p54 = por %p52, %p53
      %p56 = scmp.ne.s32.totalorder %s39, %s55
      %p57 = scmp.eq.s32.totalorder %s31, 0
      %p58 = por %p56, %p57
      %s60 = sadd.s32 %s59, 1
      %p63 = scmp.eq.s32.totalorder %s25, 1
      %p64 = scmp.ne.s32.totalorder %s59, %s61
      %p65 = scmp.eq.s32.totalorder %s25, 0
      %p66 = por %p64, %p65
      %p67 = scmp.ne.s32.totalorder %s59, %s61
      %p68 = scmp.eq.s32.totalorder %s30, 1
      %p69 = por %p67, %p68
      %p70 = scmp.ne.s32.totalorder %s61, %s62
      %p71 = scmp.eq.s32.totalorder %s30, 0
      %p72 = por %p70, %p71
      %p73 = scmp.ne.s32.totalorder %s61, %s62
      %p74 = scmp.eq.s32.totalorder %s31, 1
      %p75 = por %p73, %p74
      %p77 = scmp.ne.s32.totalorder %s62, %s76
      %p78 = scmp.eq.s32.totalorder %s31, 0
      %p79 = por %p77, %p78
      %s81 = sadd.s32 %s80, 1
      %p84 = scmp.eq.s32.totalorder %s25, 1
      %p85 = scmp.ne.s32.totalorder %s80, %s82
      %p86 = scmp.eq.s32.totalorder %s25, 0
      %p87 = por %p85, %p86
      %p88 = scmp.ne.s32.totalorder %s80, %s82
      %p89 = scmp.eq.s32.totalorder %s30, 1
      %p90 = por %p88, %p89
      %p91 = scmp.ne.s32.totalorder %s82, %s83
      %p92 = scmp.eq.s32.totalorder %s30, 0
      %p93 = por %p91, %p92
      %p94 = scmp.ne.s32.totalorder %s82, %s83
      %p95 = scmp.eq.s32.totalorder %s31, 1
      %p96 = por %p94, %p95
      %p98 = scmp.ne.s32.totalorder %s83, %s97
      %p99 = scmp.eq.s32.totalorder %s31, 0
      %p100 = por %p98, %p99
      %s102 = sadd.s32 %s101, 1
      %p105 = scmp.eq.s32.totalorder %s25, 1
      %p106 = scmp.ne.s32.totalorder %s101, %s103
      %p107 = scmp.eq.s32.totalorder %s25, 0
      %p108 = por %p106, %p107
      %p109 = scmp.ne.s32.totalorder %s101, %s103
      %p110 = scmp.eq.s32.totalorder %s30, 1
      %p111 = por %p109, %p110
      %p112 = scmp.ne.s32.totalorder %s103, %s104
      %p113 = scmp.eq.s32.totalorder %s30, 0
      %p114 = por %p112, %p113
      %p115 = scmp.ne.s32.totalorder %s103, %s104
      %p116 = scmp.eq.s32.totalorder %s31, 1
      %p117 = por %p115, %p116
      %p119 = scmp.ne.s32.totalorder %s104, %s118
      %p120 = scmp.eq.s32.totalorder %s31, 0
      %p121 = por %p119, %p120
      %s123 = sadd.s32 %s122, 1
      %p126 = scmp.eq.s32.totalorder %s25, 1
      %p127 = scmp.ne.s32.totalorder %s122, %s124
      %p128 = scmp.eq.s32.totalorder %s25, 0
      %p129 = por %p127, %p128
      %p130 = scmp.ne.s32.totalorder %s122, %s124
      %p131 = scmp.eq.s32.totalorder %s30, 1
      %p132 = por %p130, %p131
      %p133 = scmp.ne.s32.totalorder %s124, %s125
      %p134 = scmp.eq.s32.totalorder %s30, 0
      %p135 = por %p133, %p134
      %p136 = scmp.ne.s32.totalorder %s124, %s125
      %p137 = scmp.eq.s32.totalorder %s31, 1
      %p138 = por %p136, %p137
      %p140 = scmp.ne.s32.totalorder %s125, %s139
      %p141 = scmp.eq.s32.totalorder %s31, 0
      %p142 = por %p140, %p141
      %s144 = sadd.s32 %s143, 1
      %p147 = scmp.eq.s32.totalorder %s25, 1
      %p148 = scmp.ne.s32.totalorder %s143, %s145
      %p149 = scmp.eq.s32.totalorder %s25, 0
      %p150 = por %p148, %p149
      %p151 = scmp.ne.s32.totalorder %s143, %s145
      %p152 = scmp.eq.s32.totalorder %s30, 1
      %p153 = por %p151, %p152
      %p154 = scmp.ne.s32.totalorder %s145, %s146
      %p155 = scmp.eq.s32.totalorder %s30, 0
      %p156 = por %p154, %p155
      %p157 = scmp.ne.s32.totalorder %s145, %s146
      %p158 = scmp.eq.s32.totalorder %s31, 1
      %p159 = por %p157, %p158
      %p161 = scmp.ne.s32.totalorder %s146, %s160
      %p162 = scmp.eq.s32.totalorder %s31, 0
      %p163 = por %p161, %p162
      %s164 = ssub.s32 %s25, %s32
      %p165 = scmp.eq.s32.totalorder %s164, 0
      %s167 = sadd.s32 %s166, 1
      %s168 = scalar_select %p165, %s166, %s167
      %p171 = pneg %p165
      %p172 = scmp.eq.s32.totalorder %s25, 1
      %p173 = por %p171, %p172
      %p174 = scmp.ne.s32.totalorder %s166, %s169
      %p175 = scmp.eq.s32.totalorder %s25, 0
      %p176 = por %p174, %p175
      %p177 = scmp.ne.s32.totalorder %s166, %s169
      %p178 = scmp.eq.s32.totalorder %s30, 1
      %p179 = por %p177, %p178
      %p180 = scmp.ne.s32.totalorder %s169, %s170
      %p181 = scmp.eq.s32.totalorder %s30, 0
      %p182 = por %p180, %p181
      %p183 = scmp.ne.s32.totalorder %s169, %s170
      %p184 = scmp.eq.s32.totalorder %s31, 1
      %p185 = por %p183, %p184
      %p187 = scmp.ne.s32.totalorder %s170, %s186
      %p188 = scmp.eq.s32.totalorder %s31, 0
      %p189 = por %p187, %p188
      %s190 = ssub.s32 %s25, %s32
      %p191 = scmp.eq.s32.totalorder %s190, 0
      %s193 = sadd.s32 %s192, 1
      %s194 = scalar_select %p191, %s192, %s193
      %p197 = pneg %p191
      %p198 = scmp.eq.s32.totalorder %s25, 1
      %p199 = por %p197, %p198
      %p200 = scmp.ne.s32.totalorder %s192, %s195
      %p201 = scmp.eq.s32.totalorder %s25, 0
      %p202 = por %p200, %p201
      %p203 = scmp.ne.s32.totalorder %s192, %s195
      %p204 = scmp.eq.s32.totalorder %s30, 1
      %p205 = por %p203, %p204
      %p206 = scmp.ne.s32.totalorder %s195, %s196
      %p207 = scmp.eq.s32.totalorder %s30, 0
      %p208 = por %p206, %p207
      %p209 = scmp.ne.s32.totalorder %s195, %s196
      %p210 = scmp.eq.s32.totalorder %s31, 1
      %p211 = por %p209, %p210
      %p213 = scmp.ne.s32.totalorder %s196, %s212
      %p214 = scmp.eq.s32.totalorder %s31, 0
      %p215 = por %p213, %p214
      %p216 = scmp.le.s32.totalorder 1, %s25
      %p217 = scmp.lt.s32.totalorder %s25, 3
      %p218 = pnand %p216, %p217
      %p219 = pneg %p218
      // Predicated region
      $region9: #{tpu_custom_call.1} parent=5 // pred_check
        _
      $region10: #{tpu_custom_call.1} parent=5 // pred_check_branch
        %221 = sbr.rel (%p218) target = $region12
      $region11: #{tpu_custom_call.1} parent=5 // pred_region
        %s222 = ssub.s32 %s25, 1
        // Predicated region
        $region13: #{tpu_custom_call.1} parent=11 // pred_check
          %p223 = pneg %p72
        $region14: #{tpu_custom_call.1} parent=11 // pred_check_branch
          %225 = sbr.rel (%p223) target = $region16
        $region15: #{tpu_custom_call.1} parent=11 // pred_region
          %227 = vsyncadd [#allocation6], 0
          %s229 = sshll.u32 %s1, 4
          %s230 = int_to_ptr.hbm [resolvable:$true] %s229
          %s231 = sshll.u32 [#allocation5], 4
          %s232 = int_to_ptr.vmem [resolvable:$true] %s231
          %234 = dma.hbm_to_vmem [thread:$0]  %s230, 16, %s232, [#allocation6]
        $region16: #{tpu_custom_call.1} parent=11 // pred_fallthru
          _
        // Predicated region
        $region17: #{tpu_custom_call.1} parent=11 // pred_check
          %p235 = pneg %p93
        $region18: #{tpu_custom_call.1} parent=11 // pred_check_branch
          %237 = sbr.rel (%p235) target = $region20
        $region19: #{tpu_custom_call.1} parent=11 // pred_region
          _
        $region20: #{tpu_custom_call.1} parent=11 // pred_fallthru
          _
        // Predicated region
        $region21: #{tpu_custom_call.1} parent=11 // pred_check
          %p238 = pneg %p114
        $region22: #{tpu_custom_call.1} parent=11 // pred_check_branch
          %240 = sbr.rel (%p238) target = $region24
        $region23: #{tpu_custom_call.1} parent=11 // pred_region
          %242 = vsyncadd [#allocation6], 0
          %s243 = sshll.u32 %s3, 4
          %s244 = int_to_ptr.hbm [resolvable:$true] %s243
          %s245 = sshll.u32 [#allocation7], 4
          %s246 = int_to_ptr.vmem [resolvable:$true] %s245
          %251 = dma.hbm_to_vmem [thread:$0]  %s244, 256, %s246, [#allocation6], 64, 64, 4
        $region24: #{tpu_custom_call.1} parent=11 // pred_fallthru
          _
        // Predicated region
        $region25: #{tpu_custom_call.1} parent=11 // pred_check
          %p252 = pneg %p135
        $region26: #{tpu_custom_call.1} parent=11 // pred_check_branch
          %254 = sbr.rel (%p252) target = $region28
        $region27: #{tpu_custom_call.1} parent=11 // pred_region
          %256 = vsyncadd [#allocation9], 0
          %s257 = sshll.u32 %s4, 4
          %s258 = int_to_ptr.hbm [resolvable:$true] %s257
          %s259 = sshll.u32 [#allocation8], 4
          %s260 = int_to_ptr.vmem [resolvable:$true] %s259
          %265 = dma.hbm_to_vmem [thread:$0]  %s258, 256, %s260, [#allocation9], 64, 64, 4
        $region28: #{tpu_custom_call.1} parent=11 // pred_fallthru
          _
        // Predicated region
        $region29: #{tpu_custom_call.1} parent=11 // pred_check
          %p266 = pneg %p156
        $region30: #{tpu_custom_call.1} parent=11 // pred_check_branch
          %268 = sbr.rel (%p266) target = $region32
        $region31: #{tpu_custom_call.1} parent=11 // pred_region
          _
        $region32: #{tpu_custom_call.1} parent=11 // pred_fallthru
          _
      $region12: #{tpu_custom_call.1} parent=5 // pred_fallthru
        _
      %p269 = scmp.lt.s32.totalorder %s25, 2
      // Predicated region
      $region33: #{tpu_custom_call.1} parent=5 // pred_check
        %p270 = pneg %p269
      $region34: #{tpu_custom_call.1} parent=5 // pred_check_branch
        %272 = sbr.rel (%p270) target = $region36
      $region35: #{tpu_custom_call.1} parent=5 // pred_region
        // Predicated region
        $region37: #{tpu_custom_call.1} parent=35 // pred_check
          %p273 = pneg %p45
        $region38: #{tpu_custom_call.1} parent=35 // pred_check_branch
          %275 = sbr.rel (%p273) target = $region40
        $region39: #{tpu_custom_call.1} parent=35 // pred_region
          %s276 = sand.u32 %s35, 1
          %s277 = scalar_lea.sflag [#allocation3], %s276
          %s278 = sand.u32 %s35, 1
          %s279 = smul.addr %s278, 8
          %s280 = scalar_lea.vmem [#allocation2], %s279
          %282 = vsyncadd %s277, 0
          %s283 = smul.addr %s25, 8
          %s284 = scalar_lea.hbm %s0, %s283
          %s286 = sshll.u32 %s284, 4
          %s287 = int_to_ptr.hbm [resolvable:$true] %s286
          %s288 = sshll.u32 %s280, 4
          %s289 = int_to_ptr.vmem [resolvable:$true] %s288
          %291 = dma.hbm_to_vmem [thread:$0]  %s287, 128, %s289, %s277
        $region40: #{tpu_custom_call.1} parent=35 // pred_fallthru
          _
      $region36: #{tpu_custom_call.1} parent=5 // pred_fallthru
        _
      %p292 = scmp.le.s32.totalorder 1, %s25
      %p293 = scmp.lt.s32.totalorder %s25, 3
      %p294 = pnand %p292, %p293
      %p295 = pneg %p294
      // Predicated region
      $region41: #{tpu_custom_call.1} parent=5 // pred_check
        _
      $region42: #{tpu_custom_call.1} parent=5 // pred_check_branch
        %297 = sbr.rel (%p294) target = $region44
      $region43: #{tpu_custom_call.1} parent=5 // pred_region
        %s298 = ssub.s32 %s25, 1
        %s299 = sand.u32 %s38, 1
        %s300 = scalar_lea.sflag [#allocation3], %s299
        %s301 = sand.u32 %s38, 1
        %s302 = smul.addr %s301, 8
        %s303 = scalar_lea.vmem [#allocation2], %s302
        // Predicated region
        $region45: #{tpu_custom_call.1} parent=43 // pred_check
          %p304 = pneg %p51
        $region46: #{tpu_custom_call.1} parent=43 // pred_check_branch
          %306 = sbr.rel (%p304) target = $region48
        $region47: #{tpu_custom_call.1} parent=43 // pred_region
          %308 = dma.done %s300, 128
        $region48: #{tpu_custom_call.1} parent=43 // pred_fallthru
          _
        // Predicated region
        $region49: #{tpu_custom_call.1} parent=43 // pred_check
          %p309 = pneg %p72
        $region50: #{tpu_custom_call.1} parent=43 // pred_check_branch
          %311 = sbr.rel (%p309) target = $region52
        $region51: #{tpu_custom_call.1} parent=43 // pred_region
          %313 = dma.done [#allocation6], 16
        $region52: #{tpu_custom_call.1} parent=43 // pred_fallthru
          _
        // Predicated region
        $region53: #{tpu_custom_call.1} parent=43 // pred_check
          %p314 = pneg %p114
        $region54: #{tpu_custom_call.1} parent=43 // pred_check_branch
          %316 = sbr.rel (%p314) target = $region56
        $region55: #{tpu_custom_call.1} parent=43 // pred_region
          %318 = dma.done [#allocation6], 256
        $region56: #{tpu_custom_call.1} parent=43 // pred_fallthru
          _
        // Predicated region
        $region57: #{tpu_custom_call.1} parent=43 // pred_check
          %p319 = pneg %p135
        $region58: #{tpu_custom_call.1} parent=43 // pred_check_branch
          %321 = sbr.rel (%p319) target = $region60
        $region59: #{tpu_custom_call.1} parent=43 // pred_region
          %323 = dma.done [#allocation9], 256
        $region60: #{tpu_custom_call.1} parent=43 // pred_fallthru
          _
        %s324 = sand.u32 %s38, 1
        %s325 = scalar_lea.sflag [#allocation3], %s324
        %s326 = sand.u32 %s38, 1
        %s327 = smul.addr %s326, 8
        %s328 = scalar_lea.vmem [#allocation2], %s327
        %p329 = pneg %p51
        %p330 = pneg %p48
        %p331 = pneg %p72
        %p332 = pneg %p69
        %p333 = pneg %p93
        %p334 = pneg %p90
        %p335 = pneg %p114
        %p336 = pneg %p111
        %p337 = pneg %p135
        %p338 = pneg %p132
        %p339 = pneg %p156
        %p340 = pneg %p153
        %p341 = pneg %p182
        %p342 = pneg %p179
        %s343 = sand.u32 %s169, 1
        %s344 = scalar_lea.sflag [#allocation4], %s343
        %s345 = sand.u32 %s169, 1
        %s346 = smul.addr %s345, 8
        %s347 = scalar_lea.vmem [#allocation10], %s346
        %p348 = pneg %p208
        %p349 = pneg %p205
        %s350 = sand.u32 %s195, 1
        %s351 = scalar_lea.sflag [#allocation12], %s350
        %s352 = sand.u32 %s195, 1
        %s353 = scalar_lea.vmem [#allocation11], %s352
        %v355 = vld [vmem:[%s303] sm:$0xff]
        %vm356 = vcmask 261120
        %v357 = vsel %vm356, %v355, 0.0
        %358 = vadd.xlane.f32.xlu0 %v357
        %v359 = vpop.xlane.xlu0 %358
        %v360 = vrcp.pop 32.0
        %v361 = vmul.f32 32.0, %v360
        %v362 = vsub.f32 1.0, %v361
        %v363 = vmul.f32 %v360, %v362
        %v364 = vadd.f32 %v360, %v363
        %vm365 = vweird.f32 %v360
        %v366 = vsel %vm365, %v360, %v364
        %v367 = vmul.f32 %v359, %v366
        %v368 = vsub.f32 %v355, %v367
        %v369 = vmul.f32 %v368, %v368
        %v370 = vsel %vm356, %v369, 0.0
        %371 = vadd.xlane.f32.xlu0 %v370
        %v372 = vpop.xlane.xlu0 %371
        %v373 = vmul.f32 %v372, %v366
        %v374 = vadd.f32 %v373, 1e-05
        %v375 = vrsqrt.pop %v374
        %v376 = vmul.f32 %v375, %v374
        %v377 = vmul.f32 %v376, %v375
        %v378 = vmul.f32 0.5, %v377
        %v379 = vsub.f32 1.5, %v378
        %v380 = vmul.f32 %v375, %v379
        %vm381 = vweird.f32 %v374
        %vm382 = vweird.f32 %v375
        %vm383 = vmor %vm381, %vm382
        %v384 = vsel %vm383, %v375, %v380
        %v385 = vmul.f32 %v368, %v384
        %v386 = vld [vmem:[#allocation5] sm:$0x1]
        %v388 = vperm.slane %v386, 0
        %v390 = vmul.f32 %v385, %v388
        %v391 = vld [vmem:[%s2] sm:$0x1]
        %v393 = vperm.slane %v391, 0
        %v395 = vadd.f32 %v390, %v393
        %v396 = vpack.c.bf16 %v395, %v395
        %v397 = vld [vmem:[#allocation7] sm:$0xf]
        %v398 = vld [vmem:[#allocation7 + $0x4] sm:$0xf]
        %v399 = vld [vmem:[#allocation7 + $0x8] sm:$0xf]
        %v400 = vld [vmem:[#allocation7 + $0xc] sm:$0xf]
        %v405 = vunpack.c.l.b16 %v397
        %v406 = vunpack.c.l.b16 %v398
        %v407 = vunpack.c.l.b16 %v399
        %v408 = vunpack.c.l.b16 %v400
        %v409 = vpack.c.b16 %v406, %v405
        %v410 = vpack.c.b16 %v408, %v407
        %v414 = vsel %vm356, %v396, 0
        %416 = vmatpush.bf16.msra.mxu0 0
        %417 = vmatpush.bf16.msra.mxu0 0
        %418 = vmatpush.bf16.msra.mxu0 0
        %419 = vmatpush.bf16.msra.mxu0 0
        %420 = vmatpush.bf16.msra.mxu0 0
        %421 = vmatpush.bf16.msra.mxu0 0
        %422 = vmatpush.bf16.msra.mxu0 %v410
        %423 = vmatpush.bf16.msra.mxu0 %v409
        %424 = vmatmul.bf16.gmra.mxu0 %v414
        %v425 = vpop.f32.mrf.mxu0
        %v426 = vadd.f32 0.0, %v425
        %v427 = vpop.f32.mrf.mxu0
        %428 = vdwg.mxu0
        %v429 = vpack.c.bf16 %v426, %v426
        %431 = vrot.lane.b32.xlu0 %v429, 120
        %v432 = vpop.permute.xlu0 %431
        %433 = vrot.lane.b32.xlu0 %v429, 112
        %v434 = vpop.permute.xlu0 %433
        %435 = vrot.lane.b32.xlu0 %v429, 104
        %v436 = vpop.permute.xlu0 %435
        %437 = vrot.lane.b32.xlu0 %v429, 96
        %v438 = vpop.permute.xlu0 %437
        %439 = vrot.lane.b32.xlu0 %v429, 88
        %v440 = vpop.permute.xlu0 %439
        %441 = vrot.lane.b32.xlu0 %v429, 80
        %v442 = vpop.permute.xlu0 %441
        %443 = vrot.lane.b32.xlu0 %v429, 72
        %v444 = vpop.permute.xlu0 %443
        %445 = vrot.lane.b32.xlu0 %v429, 64
        %v446 = vpop.permute.xlu0 %445
        %447 = vrot.lane.b32.xlu0 %v429, 56
        %v448 = vpop.permute.xlu0 %447
        %449 = vrot.lane.b32.xlu0 %v429, 48
        %v450 = vpop.permute.xlu0 %449
        %451 = vrot.lane.b32.xlu0 %v429, 40
        %v452 = vpop.permute.xlu0 %451
        %v455 = vpack.i.b16 %v432, %v429
        %v457 = vshrl.u32 %v429, 16
        %v458 = vshrl.u32 %v432, 16
        %v459 = vpack.i.b16 %v458, %v457
        %v463 = vpack.i.b16 %v436, %v434
        %v465 = vshrl.u32 %v434, 16
        %v466 = vshrl.u32 %v436, 16
        %v467 = vpack.i.b16 %v466, %v465
        %v471 = vpack.i.b16 %v440, %v438
        %v473 = vshrl.u32 %v438, 16
        %v474 = vshrl.u32 %v440, 16
        %v475 = vpack.i.b16 %v474, %v473
        %v479 = vpack.i.b16 %v444, %v442
        %v481 = vshrl.u32 %v442, 16
        %v482 = vshrl.u32 %v444, 16
        %v483 = vpack.i.b16 %v482, %v481
        %v487 = vpack.i.b16 %v448, %v446
        %v488 = vshrl.u32 %v446, 16
        %v489 = vshrl.u32 %v448, 16
        %v490 = vpack.i.b16 %v489, %v488
        %v493 = vpack.i.b16 %v452, %v450
        %v494 = vshrl.u32 %v450, 16
        %v495 = vshrl.u32 %v452, 16
        %v496 = vpack.i.b16 %v495, %v494
        %v497 = vrot.slane %v471, 4
        %vm498 = vcmask 1047556
        %v499 = vsel %vm498, %v497, %v455
        %v501 = vunpack.c.l.s4 1983009808
        %v502 = vunpack.c.0.s8 %v501
        %v503 = vperm.slane %v499, %v502
        %v504 = vrot.slane %v479, 4
        %v505 = vsel %vm498, %v504, %v463
        %v507 = vunpack.c.l.s4 1983009808
        %v508 = vunpack.c.0.s8 %v507
        %v509 = vperm.slane %v505, %v508
        %v510 = vrot.slane %v509, 4
        %v511 = vsel %vm498, %v510, %v503
        %v512 = vrot.slane %v503, 4
        %v513 = vsel %vm498, %v509, %v512
        %v515 = vunpack.c.l.s4 1934713408
        %v516 = vunpack.c.0.s8 %v515
        %v517 = vperm.slane %v511, %v516
        %v519 = vunpack.c.l.s4 1934713408
        %v520 = vunpack.c.0.s8 %v519
        %v521 = vperm.slane %v513, %v520
        %v522 = vrot.slane %v517, 4
        %v523 = vsel %vm498, 0, %v522
        %v524 = vrot.slane %v521, 4
        %v525 = vsel %vm498, 0, %v524
        %v526 = vrot.slane %v475, 4
        %v527 = vsel %vm498, %v526, %v459
        %v529 = vunpack.c.l.s4 1983009808
        %v530 = vunpack.c.0.s8 %v529
        %v531 = vperm.slane %v527, %v530
        %v532 = vrot.slane %v483, 4
        %v533 = vsel %vm498, %v532, %v467
        %v535 = vunpack.c.l.s4 1983009808
        %v536 = vunpack.c.0.s8 %v535
        %v537 = vperm.slane %v533, %v536
        %v538 = vrot.slane %v537, 4
        %v539 = vsel %vm498, %v538, %v531
        %v540 = vrot.slane %v531, 4
        %v541 = vsel %vm498, %v537, %v540
        %v543 = vunpack.c.l.s4 1934713408
        %v544 = vunpack.c.0.s8 %v543
        %v545 = vperm.slane %v539, %v544
        %v547 = vunpack.c.l.s4 1934713408
        %v548 = vunpack.c.0.s8 %v547
        %v549 = vperm.slane %v541, %v548
        %v550 = vrot.slane %v545, 4
        %v551 = vsel %vm498, 0, %v550
        %v552 = vrot.slane %v549, 4
        %v553 = vsel %vm498, 0, %v552
        %v556 = vunpack.c.l.s4 1983009808
        %v557 = vunpack.c.0.s8 %v556
        %v558 = vperm.slane %v487, %v557
        %v561 = vunpack.c.l.s4 1983009808
        %v562 = vunpack.c.0.s8 %v561
        %v563 = vperm.slane %v493, %v562
        %v564 = vrot.slane %v563, 4
        %v565 = vsel %vm498, %v564, %v558
        %v566 = vrot.slane %v558, 4
        %v567 = vsel %vm498, %v563, %v566
        %v569 = vunpack.c.l.s4 1934713408
        %v570 = vunpack.c.0.s8 %v569
        %v571 = vperm.slane %v565, %v570
        %v573 = vunpack.c.l.s4 1934713408
        %v574 = vunpack.c.0.s8 %v573
        %v575 = vperm.slane %v567, %v574
        %v576 = vrot.slane %v571, 4
        %v577 = vsel %vm498, 0, %v576
        %v578 = vrot.slane %v575, 4
        %v579 = vsel %vm498, 0, %v578
        %v582 = vunpack.c.l.s4 1983009808
        %v583 = vunpack.c.0.s8 %v582
        %v584 = vperm.slane %v490, %v583
        %v587 = vunpack.c.l.s4 1983009808
        %v588 = vunpack.c.0.s8 %v587
        %v589 = vperm.slane %v496, %v588
        %v590 = vrot.slane %v589, 4
        %v591 = vsel %vm498, %v590, %v584
        %v592 = vrot.slane %v584, 4
        %v593 = vsel %vm498, %v589, %v592
        %v595 = vunpack.c.l.s4 1934713408
        %v596 = vunpack.c.0.s8 %v595
        %v597 = vperm.slane %v591, %v596
        %v599 = vunpack.c.l.s4 1934713408
        %v600 = vunpack.c.0.s8 %v599
        %v601 = vperm.slane %v593, %v600
        %v602 = vrot.slane %v597, 4
        %v603 = vsel %vm498, 0, %v602
        %v604 = vrot.slane %v601, 4
        %v605 = vsel %vm498, 0, %v604
        %v606 = vsel %vm498, %v524, %v517
        %v608 = vunpack.c.l.s4 1983009808
        %v609 = vunpack.c.0.s8 %v608
        %v610 = vperm.slane %v606, %v609
        %v611 = vrot.slane %v525, 4
        %v612 = vsel %vm498, %v611, %v523
        %v614 = vunpack.c.l.s4 1983009808
        %v615 = vunpack.c.0.s8 %v614
        %v616 = vperm.slane %v612, %v615
        %v617 = vrot.slane %v616, 4
        %v618 = vsel %vm498, %v617, %v610
        %v619 = vrot.slane %v610, 4
        %v620 = vsel %vm498, %v616, %v619
        %v622 = vunpack.c.l.s4 1934713408
        %v623 = vunpack.c.0.s8 %v622
        %v624 = vperm.slane %v618, %v623
        %v626 = vunpack.c.l.s4 1934713408
        %v627 = vunpack.c.0.s8 %v626
        %v628 = vperm.slane %v620, %v627
        %v629 = vrot.slane %v624, 4
        %v630 = vsel %vm498, 0, %v629
        %v631 = vrot.slane %v628, 4
        %v632 = vsel %vm498, 0, %v631
        %v633 = vsel %vm498, %v552, %v545
        %v635 = vunpack.c.l.s4 1983009808
        %v636 = vunpack.c.0.s8 %v635
        %v637 = vperm.slane %v633, %v636
        %v638 = vrot.slane %v553, 4
        %v639 = vsel %vm498, %v638, %v551
        %v641 = vunpack.c.l.s4 1983009808
        %v642 = vunpack.c.0.s8 %v641
        %v643 = vperm.slane %v639, %v642
        %v644 = vrot.slane %v643, 4
        %v645 = vsel %vm498, %v644, %v637
        %v646 = vrot.slane %v637, 4
        %v647 = vsel %vm498, %v643, %v646
        %v649 = vunpack.c.l.s4 1934713408
        %v650 = vunpack.c.0.s8 %v649
        %v651 = vperm.slane %v645, %v650
        %v653 = vunpack.c.l.s4 1934713408
        %v654 = vunpack.c.0.s8 %v653
        %v655 = vperm.slane %v647, %v654
        %v656 = vrot.slane %v651, 4
        %v657 = vsel %vm498, 0, %v656
        %v658 = vrot.slane %v655, 4
        %v659 = vsel %vm498, 0, %v658
        %v660 = vsel %vm498, %v578, %v571
        %v662 = vunpack.c.l.s4 1983009808
        %v663 = vunpack.c.0.s8 %v662
        %v664 = vperm.slane %v660, %v663
        %v665 = vrot.slane %v579, 4
        %v666 = vsel %vm498, %v665, %v577
        %v668 = vunpack.c.l.s4 1983009808
        %v669 = vunpack.c.0.s8 %v668
        %v670 = vperm.slane %v666, %v669
        %v671 = vrot.slane %v670, 4
        %v672 = vsel %vm498, %v671, %v664
        %v674 = vunpack.c.l.s4 1934713408
        %v675 = vunpack.c.0.s8 %v674
        %v676 = vperm.slane %v672, %v675
        %v677 = vrot.slane %v676, 4
        %v678 = vsel %vm498, 0, %v677
        %v679 = vsel %vm498, %v604, %v597
        %v681 = vunpack.c.l.s4 1983009808
        %v682 = vunpack.c.0.s8 %v681
        %v683 = vperm.slane %v679, %v682
        %v684 = vrot.slane %v605, 4
        %v685 = vsel %vm498, %v684, %v603
        %v687 = vunpack.c.l.s4 1983009808
        %v688 = vunpack.c.0.s8 %v687
        %v689 = vperm.slane %v685, %v688
        %v690 = vrot.slane %v689, 4
        %v691 = vsel %vm498, %v690, %v683
        %v693 = vunpack.c.l.s4 1934713408
        %v694 = vunpack.c.0.s8 %v693
        %v695 = vperm.slane %v691, %v694
        %v696 = vrot.slane %v695, 4
        %v697 = vsel %vm498, 0, %v696
        %v700 = vpack.i.b16 %v651, %v624
        %v701 = vshrl.u32 %v624, 16
        %v702 = vshrl.u32 %v651, 16
        %v703 = vpack.i.b16 %v702, %v701
        %v706 = vpack.i.b16 %v657, %v630
        %v707 = vshrl.u32 %v630, 16
        %v708 = vshrl.u32 %v657, 16
        %v709 = vpack.i.b16 %v708, %v707
        %v712 = vpack.i.b16 %v655, %v628
        %v713 = vshrl.u32 %v628, 16
        %v714 = vshrl.u32 %v655, 16
        %v715 = vpack.i.b16 %v714, %v713
        %v718 = vpack.i.b16 %v659, %v632
        %v719 = vshrl.u32 %v632, 16
        %v720 = vshrl.u32 %v659, 16
        %v721 = vpack.i.b16 %v720, %v719
        %v724 = vpack.i.b16 %v695, %v676
        %v725 = vshrl.u32 %v676, 16
        %v726 = vshrl.u32 %v695, 16
        %v727 = vpack.i.b16 %v726, %v725
        %v730 = vpack.i.b16 %v697, %v678
        %v731 = vshrl.u32 %v678, 16
        %v732 = vshrl.u32 %v697, 16
        %v733 = vpack.i.b16 %v732, %v731
        %vm734 = vcmask 64512
        %v736 = vsel %vm734, %v700, 0
        %v739 = vsel %vm734, %v712, 0
        %741 = vmatpush.bf16.xpose.msra.mxu0 0
        %742 = vmatpush.bf16.xpose.msra.mxu0 0
        %743 = vmatpush.bf16.xpose.msra.mxu0 0
        %744 = vmatpush.bf16.xpose.msra.mxu0 0
        %745 = vmatpush.bf16.xpose.msra.mxu0 0
        %746 = vmatpush.bf16.xpose.msra.mxu0 0
        %747 = vmatpush.bf16.xpose.msra.mxu0 0
        %748 = vmatpush.bf16.xpose.msra.mxu0 %v739
        %749 = vmatmul.bf16.gmra.mxu0 %v736
        %v750 = vpop.f32.mrf.mxu0
        %v751 = vadd.f32 0.0, %v750
        %v752 = vpop.f32.mrf.mxu0
        %753 = vdwg.mxu0
        %v755 = vsel %vm734, %v703, 0
        %v758 = vsel %vm734, %v715, 0
        %760 = vmatpush.bf16.xpose.msra.mxu0 0
        %761 = vmatpush.bf16.xpose.msra.mxu0 0
        %762 = vmatpush.bf16.xpose.msra.mxu0 0
        %763 = vmatpush.bf16.xpose.msra.mxu0 0
        %764 = vmatpush.bf16.xpose.msra.mxu0 0
        %765 = vmatpush.bf16.xpose.msra.mxu0 0
        %766 = vmatpush.bf16.xpose.msra.mxu0 0
        %767 = vmatpush.bf16.xpose.msra.mxu0 %v758
        %768 = vmatmul.bf16.gmra.mxu0 %v755
        %v769 = vpop.f32.mrf.mxu0
        %v770 = vadd.f32 0.0, %v769
        %v771 = vpop.f32.mrf.mxu0
        %772 = vdwg.mxu0
        %v774 = vsel %vm734, %v706, 0
        %v777 = vsel %vm734, %v718, 0
        %779 = vmatpush.bf16.xpose.msra.mxu0 0
        %780 = vmatpush.bf16.xpose.msra.mxu0 0
        %781 = vmatpush.bf16.xpose.msra.mxu0 0
        %782 = vmatpush.bf16.xpose.msra.mxu0 0
        %783 = vmatpush.bf16.xpose.msra.mxu0 0
        %784 = vmatpush.bf16.xpose.msra.mxu0 0
        %785 = vmatpush.bf16.xpose.msra.mxu0 0
        %786 = vmatpush.bf16.xpose.msra.mxu0 %v777
        %787 = vmatmul.bf16.gmra.mxu0 %v774
        %v788 = vpop.f32.mrf.mxu0
        %v789 = vadd.f32 0.0, %v788
        %v790 = vpop.f32.mrf.mxu0
        %791 = vdwg.mxu0
        %v793 = vsel %vm734, %v709, 0
        %v796 = vsel %vm734, %v721, 0
        %798 = vmatpush.bf16.xpose.msra.mxu0 0
        %799 = vmatpush.bf16.xpose.msra.mxu0 0
        %800 = vmatpush.bf16.xpose.msra.mxu0 0
        %801 = vmatpush.bf16.xpose.msra.mxu0 0
        %802 = vmatpush.bf16.xpose.msra.mxu0 0
        %803 = vmatpush.bf16.xpose.msra.mxu0 0
        %804 = vmatpush.bf16.xpose.msra.mxu0 0
        %805 = vmatpush.bf16.xpose.msra.mxu0 %v796
        %806 = vmatmul.bf16.gmra.mxu0 %v793
        %v807 = vpop.f32.mrf.mxu0
        %v808 = vadd.f32 0.0, %v807
        %v809 = vpop.f32.mrf.mxu0
        %810 = vdwg.mxu0
        %v811 = vsel %vm734, %v751, -inf
        %812 = vmax.xlane.f32.xlu0 %v811
        %v813 = vpop.xlane.xlu0 %812
        %v814 = vsel %vm734, %v770, -inf
        %815 = vmax.xlane.f32.xlu0 %v814
        %v816 = vpop.xlane.xlu0 %815
        %v817 = vsel %vm734, %v789, -inf
        %818 = vmax.xlane.f32.xlu0 %v817
        %v819 = vpop.xlane.xlu0 %818
        %v820 = vsel %vm734, %v808, -inf
        %821 = vmax.xlane.f32.xlu0 %v820
        %v822 = vpop.xlane.xlu0 %821
        %v823 = vsub.f32 %v751, %v813
        %v824 = vsub.f32 %v770, %v816
        %v825 = vsub.f32 %v789, %v819
        %v826 = vsub.f32 %v808, %v822
        %v827 = vmul.f32 %v823, 1.442695
        %v828 = vpow.pop %v827
        %v829 = vmul.f32 %v824, 1.442695
        %v830 = vpow.pop %v829
        %v831 = vmul.f32 %v825, 1.442695
        %v832 = vpow.pop %v831
        %v833 = vmul.f32 %v826, 1.442695
        %v834 = vpow.pop %v833
        %v839 = vrot.slane %v830, 7
        %vm840 = vcmask 1041409
        %v841 = vsel %vm840, %v839, %v828
        %v842 = vrot.slane %v832, 6
        %vm843 = vcmask 1042434
        %v844 = vsel %vm843, %v842, %v841
        %v845 = vrot.slane %v834, 5
        %vm846 = vcmask 1043459
        %v847 = vsel %vm846, %v845, %v844
        %vm849 = vcmask 60416
        %v850 = vsel %vm849, %v847, 0.0
        %851 = vadd.xlane.f32.xlu0 %v850
        %v852 = vpop.xlane.xlu0 %851
        %v854 = vrot.slane %v852, 1
        %v855 = vrot.slane %v852, 2
        %v856 = vrot.slane %v852, 3
        %v861 = vrcp.pop %v852
        %v862 = vmul.f32 %v852, %v861
        %v863 = vsub.f32 1.0, %v862
        %v864 = vmul.f32 %v861, %v863
        %v865 = vadd.f32 %v861, %v864
        %vm866 = vweird.f32 %v852
        %vm867 = vweird.f32 %v861
        %vm868 = vmor %vm866, %vm867
        %v869 = vsel %vm868, %v861, %v865
        %v870 = vand.u32 2147483647, %v852
        %vm871 = vcmp.eq.f32.partialorder %v870, 8.507059e+37
        %v872 = vand.u32 %v852, 2147483648
        %v873 = vor.u32 1.1754944e-38, %v872
        %v874 = vsel %vm871, %v873, %v869
        %v875 = vmul.f32 %v828, %v874
        %v876 = vrcp.pop %v854
        %v877 = vmul.f32 %v854, %v876
        %v878 = vsub.f32 1.0, %v877
        %v879 = vmul.f32 %v876, %v878
        %v880 = vadd.f32 %v876, %v879
        %vm881 = vweird.f32 %v854
        %vm882 = vweird.f32 %v876
        %vm883 = vmor %vm881, %vm882
        %v884 = vsel %vm883, %v876, %v880
        %v885 = vand.u32 2147483647, %v854
        %vm886 = vcmp.eq.f32.partialorder %v885, 8.507059e+37
        %v887 = vand.u32 %v854, 2147483648
        %v888 = vor.u32 1.1754944e-38, %v887
        %v889 = vsel %vm886, %v888, %v884
        %v890 = vmul.f32 %v830, %v889
        %v891 = vrcp.pop %v855
        %v892 = vmul.f32 %v855, %v891
        %v893 = vsub.f32 1.0, %v892
        %v894 = vmul.f32 %v891, %v893
        %v895 = vadd.f32 %v891, %v894
        %vm896 = vweird.f32 %v855
        %vm897 = vweird.f32 %v891
        %vm898 = vmor %vm896, %vm897
        %v899 = vsel %vm898, %v891, %v895
        %v900 = vand.u32 2147483647, %v855
        %vm901 = vcmp.eq.f32.partialorder %v900, 8.507059e+37
        %v902 = vand.u32 %v855, 2147483648
        %v903 = vor.u32 1.1754944e-38, %v902
        %v904 = vsel %vm901, %v903, %v899
        %v905 = vmul.f32 %v832, %v904
        %v906 = vrcp.pop %v856
        %v907 = vmul.f32 %v856, %v906
        %v908 = vsub.f32 1.0, %v907
        %v909 = vmul.f32 %v906, %v908
        %v910 = vadd.f32 %v906, %v909
        %vm911 = vweird.f32 %v856
        %vm912 = vweird.f32 %v906
        %vm913 = vmor %vm911, %vm912
        %v914 = vsel %vm913, %v906, %v910
        %v915 = vand.u32 2147483647, %v856
        %vm916 = vcmp.eq.f32.partialorder %v915, 8.507059e+37
        %v917 = vand.u32 %v856, 2147483648
        %v918 = vor.u32 1.1754944e-38, %v917
        %v919 = vsel %vm916, %v918, %v914
        %v920 = vmul.f32 %v834, %v919
        %v925 = vrot.slane %v890, 7
        %v926 = vsel %vm840, %v925, %v875
        %v927 = vrot.slane %v905, 6
        %v928 = vsel %vm843, %v927, %v926
        %v929 = vrot.slane %v920, 5
        %v930 = vsel %vm846, %v929, %v928
        %v932 = vsel %vm849, %v930, 0.0
        %v933 = vrot.slane %v932, 4
        %v934 = vadd.f32 %v932, %v933
        %v935 = vrot.slane %v934, 2
        %v936 = vadd.f32 %v934, %v935
        %v937 = vrot.slane %v936, 1
        %v938 = vadd.f32 %v936, %v937
        %v939 = vrcp.pop 4.0
        %v940 = vmul.f32 4.0, %v939
        %v941 = vsub.f32 1.0, %v940
        %v942 = vmul.f32 %v939, %v941
        %v943 = vadd.f32 %v939, %v942
        %vm944 = vweird.f32 %v939
        %v945 = vsel %vm944, %v939, %v943
        %v946 = vmul.f32 %v938, %v945
        %v947 = vsel %vm734, %v946, 0.0
        %948 = vst [vmem:[%s353] sm:$0x1] %v947
        %v949 = vsel %vm734, %v828, 0.0
        %950 = vadd.xlane.f32.xlu0 %v949
        %v951 = vpop.xlane.xlu0 %950
        %v952 = vsel %vm734, %v830, 0.0
        %953 = vadd.xlane.f32.xlu0 %v952
        %v954 = vpop.xlane.xlu0 %953
        %v955 = vsel %vm734, %v832, 0.0
        %956 = vadd.xlane.f32.xlu0 %v955
        %v957 = vpop.xlane.xlu0 %956
        %v958 = vsel %vm734, %v834, 0.0
        %959 = vadd.xlane.f32.xlu0 %v958
        %v960 = vpop.xlane.xlu0 %959
        %v961 = vpack.c.bf16 %v828, %v828
        %v962 = vpack.c.bf16 %v830, %v830
        %v963 = vpack.c.bf16 %v832, %v832
        %v964 = vpack.c.bf16 %v834, %v834
        %v966 = vsel %vm734, %v961, 0
        %vm968 = vcmask 1043456
        %v970 = vsel %vm968, %v724, 0
        %972 = vmatpush.bf16.msra.mxu0 0
        %973 = vmatpush.bf16.msra.mxu0 0
        %974 = vmatpush.bf16.msra.mxu0 0
        %975 = vmatpush.bf16.msra.mxu0 0
        %976 = vmatpush.bf16.msra.mxu0 0
        %977 = vmatpush.bf16.msra.mxu0 0
        %978 = vmatpush.bf16.msra.mxu0 0
        %979 = vmatpush.bf16.msra.mxu0 %v970
        %980 = vmatmul.bf16.gmra.mxu0 %v966
        %v981 = vpop.f32.mrf.mxu0
        %v982 = vadd.f32 0.0, %v981
        %v983 = vpop.f32.mrf.mxu0
        %984 = vdwg.mxu0
        %v986 = vsel %vm734, %v962, 0
        %v989 = vsel %vm968, %v727, 0
        %991 = vmatpush.bf16.msra.mxu0 0
        %992 = vmatpush.bf16.msra.mxu0 0
        %993 = vmatpush.bf16.msra.mxu0 0
        %994 = vmatpush.bf16.msra.mxu0 0
        %995 = vmatpush.bf16.msra.mxu0 0
        %996 = vmatpush.bf16.msra.mxu0 0
        %997 = vmatpush.bf16.msra.mxu0 0
        %998 = vmatpush.bf16.msra.mxu0 %v989
        %999 = vmatmul.bf16.gmra.mxu0 %v986
        %v1000 = vpop.f32.mrf.mxu0
        %v1001 = vadd.f32 0.0, %v1000
        %v1002 = vpop.f32.mrf.mxu0
        %1003 = vdwg.mxu0
        %v1005 = vsel %vm734, %v963, 0
        %v1008 = vsel %vm968, %v730, 0
        %1010 = vmatpush.bf16.msra.mxu0 0
        %1011 = vmatpush.bf16.msra.mxu0 0
        %1012 = vmatpush.bf16.msra.mxu0 0
        %1013 = vmatpush.bf16.msra.mxu0 0
        %1014 = vmatpush.bf16.msra.mxu0 0
        %1015 = vmatpush.bf16.msra.mxu0 0
        %1016 = vmatpush.bf16.msra.mxu0 0
        %1017 = vmatpush.bf16.msra.mxu0 %v1008
        %1018 = vmatmul.bf16.gmra.mxu0 %v1005
        %v1019 = vpop.f32.mrf.mxu0
        %v1020 = vadd.f32 0.0, %v1019
        %v1021 = vpop.f32.mrf.mxu0
        %1022 = vdwg.mxu0
        %v1024 = vsel %vm734, %v964, 0
        %v1027 = vsel %vm968, %v733, 0
        %1029 = vmatpush.bf16.msra.mxu0 0
        %1030 = vmatpush.bf16.msra.mxu0 0
        %1031 = vmatpush.bf16.msra.mxu0 0
        %1032 = vmatpush.bf16.msra.mxu0 0
        %1033 = vmatpush.bf16.msra.mxu0 0
        %1034 = vmatpush.bf16.msra.mxu0 0
        %1035 = vmatpush.bf16.msra.mxu0 0
        %1036 = vmatpush.bf16.msra.mxu0 %v1027
        %1037 = vmatmul.bf16.gmra.mxu0 %v1024
        %v1038 = vpop.f32.mrf.mxu0
        %v1039 = vadd.f32 0.0, %v1038
        %v1040 = vpop.f32.mrf.mxu0
        %1041 = vdwg.mxu0
        %v1042 = vrcp.pop %v951
        %v1043 = vmul.f32 %v951, %v1042
        %v1044 = vsub.f32 1.0, %v1043
        %v1045 = vmul.f32 %v1042, %v1044
        %v1046 = vadd.f32 %v1042, %v1045
        %vm1047 = vweird.f32 %v951
        %vm1048 = vweird.f32 %v1042
        %vm1049 = vmor %vm1047, %vm1048
        %v1050 = vsel %vm1049, %v1042, %v1046
        %v1051 = vand.u32 2147483647, %v951
        %vm1052 = vcmp.eq.f32.partialorder %v1051, 8.507059e+37
        %v1053 = vand.u32 %v951, 2147483648
        %v1054 = vor.u32 1.1754944e-38, %v1053
        %v1055 = vsel %vm1052, %v1054, %v1050
        %v1056 = vrcp.pop %v954
        %v1057 = vmul.f32 %v954, %v1056
        %v1058 = vsub.f32 1.0, %v1057
        %v1059 = vmul.f32 %v1056, %v1058
        %v1060 = vadd.f32 %v1056, %v1059
        %vm1061 = vweird.f32 %v954
        %vm1062 = vweird.f32 %v1056
        %vm1063 = vmor %vm1061, %vm1062
        %v1064 = vsel %vm1063, %v1056, %v1060
        %v1065 = vand.u32 2147483647, %v954
        %vm1066 = vcmp.eq.f32.partialorder %v1065, 8.507059e+37
        %v1067 = vand.u32 %v954, 2147483648
        %v1068 = vor.u32 1.1754944e-38, %v1067
        %v1069 = vsel %vm1066, %v1068, %v1064
        %v1070 = vrcp.pop %v957
        %v1071 = vmul.f32 %v957, %v1070
        %v1072 = vsub.f32 1.0, %v1071
        %v1073 = vmul.f32 %v1070, %v1072
        %v1074 = vadd.f32 %v1070, %v1073
        %vm1075 = vweird.f32 %v957
        %vm1076 = vweird.f32 %v1070
        %vm1077 = vmor %vm1075, %vm1076
        %v1078 = vsel %vm1077, %v1070, %v1074
        %v1079 = vand.u32 2147483647, %v957
        %vm1080 = vcmp.eq.f32.partialorder %v1079, 8.507059e+37
        %v1081 = vand.u32 %v957, 2147483648
        %v1082 = vor.u32 1.1754944e-38, %v1081
        %v1083 = vsel %vm1080, %v1082, %v1078
        %v1084 = vrcp.pop %v960
        %v1085 = vmul.f32 %v960, %v1084
        %v1086 = vsub.f32 1.0, %v1085
        %v1087 = vmul.f32 %v1084, %v1086
        %v1088 = vadd.f32 %v1084, %v1087
        %vm1089 = vweird.f32 %v960
        %vm1090 = vweird.f32 %v1084
        %vm1091 = vmor %vm1089, %vm1090
        %v1092 = vsel %vm1091, %v1084, %v1088
        %v1093 = vand.u32 2147483647, %v960
        %vm1094 = vcmp.eq.f32.partialorder %v1093, 8.507059e+37
        %v1095 = vand.u32 %v960, 2147483648
        %v1096 = vor.u32 1.1754944e-38, %v1095
        %v1097 = vsel %vm1094, %v1096, %v1092
        %v1098 = vmul.f32 %v982, %v1055
        %v1099 = vmul.f32 %v1001, %v1069
        %v1100 = vmul.f32 %v1020, %v1083
        %v1101 = vmul.f32 %v1039, %v1097
        %v1102 = vpack.c.bf16 %v1098, %v1098
        %v1103 = vpack.c.bf16 %v1099, %v1099
        %v1104 = vpack.c.bf16 %v1100, %v1100
        %v1105 = vpack.c.bf16 %v1101, %v1101
        %v1108 = vpack.i.b16 %v1103, %v1102
        %v1109 = vshrl.u32 %v1102, 16
        %v1110 = vshrl.u32 %v1103, 16
        %v1111 = vpack.i.b16 %v1110, %v1109
        %v1114 = vpack.i.b16 %v1105, %v1104
        %v1115 = vshrl.u32 %v1104, 16
        %v1116 = vshrl.u32 %v1105, 16
        %v1117 = vpack.i.b16 %v1116, %v1115
        %v1120 = vunpack.c.l.s4 1983009808
        %v1121 = vunpack.c.0.s8 %v1120
        %v1122 = vperm.slane %v1108, %v1121
        %v1125 = vunpack.c.l.s4 1983009808
        %v1126 = vunpack.c.0.s8 %v1125
        %v1127 = vperm.slane %v1114, %v1126
        %v1128 = vrot.slane %v1127, 4
        %v1129 = vsel %vm498, %v1128, %v1122
        %v1130 = vrot.slane %v1122, 4
        %v1131 = vsel %vm498, %v1127, %v1130
        %v1133 = vunpack.c.l.s4 1934713408
        %v1134 = vunpack.c.0.s8 %v1133
        %v1135 = vperm.slane %v1129, %v1134
        %v1137 = vunpack.c.l.s4 1934713408
        %v1138 = vunpack.c.0.s8 %v1137
        %v1139 = vperm.slane %v1131, %v1138
        %v1140 = vrot.slane %v1135, 4
        %v1141 = vsel %vm498, 0, %v1140
        %v1142 = vrot.slane %v1139, 4
        %v1143 = vsel %vm498, 0, %v1142
        %v1146 = vunpack.c.l.s4 1983009808
        %v1147 = vunpack.c.0.s8 %v1146
        %v1148 = vperm.slane %v1111, %v1147
        %v1151 = vunpack.c.l.s4 1983009808
        %v1152 = vunpack.c.0.s8 %v1151
        %v1153 = vperm.slane %v1117, %v1152
        %v1154 = vrot.slane %v1153, 4
        %v1155 = vsel %vm498, %v1154, %v1148
        %v1156 = vrot.slane %v1148, 4
        %v1157 = vsel %vm498, %v1153, %v1156
        %v1159 = vunpack.c.l.s4 1934713408
        %v1160 = vunpack.c.0.s8 %v1159
        %v1161 = vperm.slane %v1155, %v1160
        %v1163 = vunpack.c.l.s4 1934713408
        %v1164 = vunpack.c.0.s8 %v1163
        %v1165 = vperm.slane %v1157, %v1164
        %v1166 = vrot.slane %v1161, 4
        %v1167 = vsel %vm498, 0, %v1166
        %v1168 = vrot.slane %v1165, 4
        %v1169 = vsel %vm498, 0, %v1168
        %v1170 = vsel %vm498, %v1142, %v1135
        %v1172 = vunpack.c.l.s4 1983009808
        %v1173 = vunpack.c.0.s8 %v1172
        %v1174 = vperm.slane %v1170, %v1173
        %v1175 = vrot.slane %v1143, 4
        %v1176 = vsel %vm498, %v1175, %v1141
        %v1178 = vunpack.c.l.s4 1983009808
        %v1179 = vunpack.c.0.s8 %v1178
        %v1180 = vperm.slane %v1176, %v1179
        %v1181 = vrot.slane %v1180, 4
        %v1182 = vsel %vm498, %v1181, %v1174
        %v1184 = vunpack.c.l.s4 1934713408
        %v1185 = vunpack.c.0.s8 %v1184
        %v1186 = vperm.slane %v1182, %v1185
        %v1187 = vrot.slane %v1186, 4
        %v1188 = vsel %vm498, 0, %v1187
        %v1189 = vsel %vm498, %v1168, %v1161
        %v1191 = vunpack.c.l.s4 1983009808
        %v1192 = vunpack.c.0.s8 %v1191
        %v1193 = vperm.slane %v1189, %v1192
        %v1194 = vrot.slane %v1169, 4
        %v1195 = vsel %vm498, %v1194, %v1167
        %v1197 = vunpack.c.l.s4 1983009808
        %v1198 = vunpack.c.0.s8 %v1197
        %v1199 = vperm.slane %v1195, %v1198
        %v1200 = vrot.slane %v1199, 4
        %v1201 = vsel %vm498, %v1200, %v1193
        %v1203 = vunpack.c.l.s4 1934713408
        %v1204 = vunpack.c.0.s8 %v1203
        %v1205 = vperm.slane %v1201, %v1204
        %v1206 = vrot.slane %v1205, 4
        %v1207 = vsel %vm498, 0, %v1206
        %v1210 = vpack.i.b16 %v1205, %v1186
        %v1211 = vshrl.u32 %v1186, 16
        %v1212 = vshrl.u32 %v1205, 16
        %v1213 = vpack.i.b16 %v1212, %v1211
        %v1216 = vpack.i.b16 %v1207, %v1188
        %v1217 = vshrl.u32 %v1188, 16
        %v1218 = vshrl.u32 %v1207, 16
        %v1219 = vpack.i.b16 %v1218, %v1217
        %v1220 = vunpack.c.l.b16 %v1213
        %v1221 = vpack.c.b16 %v1220, %v1220
        %1222 = vrot.lane.b32.xlu0 %v1221, 8
        %v1223 = vpop.permute.xlu0 %1222
        %v1224 = vunpack.c.l.b16 %v1216
        %v1225 = vpack.c.b16 %v1224, %v1224
        %1226 = vrot.lane.b32.xlu0 %v1225, 16
        %v1227 = vpop.permute.xlu0 %1226
        %v1228 = vunpack.c.l.b16 %v1219
        %v1229 = vpack.c.b16 %v1228, %v1228
        %1230 = vrot.lane.b32.xlu0 %v1229, 24
        %v1231 = vpop.permute.xlu0 %1230
        %v1234 = vsel %vm734, %v1210, %v1223
        %vm1235 = vcmask 130048
        %v1237 = vsel %vm1235, %v1234, %v1227
        %vm1238 = vcmask 195584
        %v1240 = vsel %vm1238, %v1237, %v1231
        %v1241 = vld [vmem:[#allocation8] sm:$0xf]
        %v1242 = vld [vmem:[#allocation8 + $0x4] sm:$0xf]
        %v1243 = vld [vmem:[#allocation8 + $0x8] sm:$0xf]
        %v1244 = vld [vmem:[#allocation8 + $0xc] sm:$0xf]
        %v1245 = vld [vmem:[%s5] sm:$0x1]
        %v1247 = vperm.slane %v1245, 0
        %v1253 = vunpack.c.l.b16 %v1241
        %v1254 = vunpack.c.l.b16 %v1242
        %v1255 = vunpack.c.l.b16 %v1243
        %v1256 = vunpack.c.l.b16 %v1244
        %v1257 = vpack.c.b16 %v1254, %v1253
        %v1258 = vpack.c.b16 %v1256, %v1255
        %v1261 = vsel %vm356, %v1240, 0
        %1263 = vmatpush.bf16.msra.mxu0 0
        %1264 = vmatpush.bf16.msra.mxu0 0
        %1265 = vmatpush.bf16.msra.mxu0 0
        %1266 = vmatpush.bf16.msra.mxu0 0
        %1267 = vmatpush.bf16.msra.mxu0 0
        %1268 = vmatpush.bf16.msra.mxu0 0
        %1269 = vmatpush.bf16.msra.mxu0 %v1258
        %1270 = vmatpush.bf16.msra.mxu0 %v1257
        %1271 = vmatmul.bf16.gmra.mxu0 %v1261
        %v1272 = vpop.f32.mrf.mxu0
        %v1273 = vadd.f32 %v1247, %v1272
        %v1274 = vpop.f32.mrf.mxu0
        %1275 = vdwg.mxu0
        %v1276 = vadd.f32 %v355, %v1273
        %1277 = vst.msk [vmem:[%s347] sm:$0xff] %vm356, %v1276
        %s1278 = sand.u32 %s169, 1
        %s1279 = scalar_lea.sflag [#allocation4], %s1278
        %s1280 = sand.u32 %s169, 1
        %s1281 = smul.addr %s1280, 8
        %s1282 = scalar_lea.vmem [#allocation10], %s1281
        %s1283 = sand.u32 %s195, 1
        %s1284 = scalar_lea.sflag [#allocation12], %s1283
        %s1285 = sand.u32 %s195, 1
        %s1286 = scalar_lea.vmem [#allocation11], %s1285
        // Predicated region
        $region61: #{tpu_custom_call.1} parent=43 // pred_check
          %p1287 = pneg %p179
        $region62: #{tpu_custom_call.1} parent=43 // pred_check_branch
          %1289 = sbr.rel (%p1287) target = $region64
        $region63: #{tpu_custom_call.1} parent=43 // pred_region
          %1291 = vsyncadd %s1279, 0
          %s1292 = smul.addr %s30, 8
          %s1293 = scalar_lea.hbm %s6, %s1292
          %s1295 = sshll.u32 %s1282, 4
          %s1296 = int_to_ptr.vmem [resolvable:$true] %s1295
          %s1297 = sshll.u32 %s1293, 4
          %s1298 = int_to_ptr.hbm [resolvable:$true] %s1297
          %1300 = dma.vmem_to_hbm [thread:$0]  %s1296, 128, %s1298, %s1279
        $region64: #{tpu_custom_call.1} parent=43 // pred_fallthru
          _
        // Predicated region
        $region65: #{tpu_custom_call.1} parent=43 // pred_check
          %p1301 = pneg %p205
        $region66: #{tpu_custom_call.1} parent=43 // pred_check_branch
          %1303 = sbr.rel (%p1301) target = $region68
        $region67: #{tpu_custom_call.1} parent=43 // pred_region
          %1305 = vsyncadd %s1284, 0
          %s1306 = scalar_lea.hbm %s7, %s30
          %s1308 = sshll.u32 %s1286, 4
          %s1309 = int_to_ptr.vmem [resolvable:$true] %s1308
          %s1310 = sshll.u32 %s1306, 4
          %s1311 = int_to_ptr.hbm [resolvable:$true] %s1310
          %1313 = dma.vmem_to_hbm [thread:$0]  %s1309, 16, %s1311, %s1284
        $region68: #{tpu_custom_call.1} parent=43 // pred_fallthru
          _
      $region44: #{tpu_custom_call.1} parent=5 // pred_fallthru
        _
      %p1314 = scmp.le.s32.totalorder 2, %s25
      // Predicated region
      $region69: #{tpu_custom_call.1} parent=5 // pred_check
        %p1315 = pneg %p1314
      $region70: #{tpu_custom_call.1} parent=5 // pred_check_branch
        %1317 = sbr.rel (%p1315) target = $region72
      $region71: #{tpu_custom_call.1} parent=5 // pred_region
        %s1318 = ssub.s32 %s25, 2
        // Predicated region
        $region73: #{tpu_custom_call.1} parent=71 // pred_check
          %p1319 = pneg %p185
        $region74: #{tpu_custom_call.1} parent=71 // pred_check_branch
          %1321 = sbr.rel (%p1319) target = $region76
        $region75: #{tpu_custom_call.1} parent=71 // pred_region
          %s1322 = sand.u32 %s170, 1
          %s1323 = scalar_lea.sflag [#allocation4], %s1322
          %s1324 = sand.u32 %s170, 1
          %s1325 = smul.addr %s1324, 8
          %s1326 = scalar_lea.vmem [#allocation10], %s1325
          %1328 = dma.done %s1323, 128
        $region76: #{tpu_custom_call.1} parent=71 // pred_fallthru
          _
        // Predicated region
        $region77: #{tpu_custom_call.1} parent=71 // pred_check
          %p1329 = pneg %p211
        $region78: #{tpu_custom_call.1} parent=71 // pred_check_branch
          %1331 = sbr.rel (%p1329) target = $region80
        $region79: #{tpu_custom_call.1} parent=71 // pred_region
          %s1332 = sand.u32 %s196, 1
          %s1333 = scalar_lea.sflag [#allocation12], %s1332
          %s1334 = sand.u32 %s196, 1
          %s1335 = scalar_lea.vmem [#allocation11], %s1334
          %1337 = dma.done %s1333, 16
        $region80: #{tpu_custom_call.1} parent=71 // pred_fallthru
          _
      $region72: #{tpu_custom_call.1} parent=5 // pred_fallthru
        _
    $region6: #{tpu_custom_call.1} parent=1 // loop_footer
      %s29 = sadd.s32 1, %s25
    $region7: #{tpu_custom_call.1} parent=1 // loop_footer_branch
      %24 = sbr.rel target = $region3
    $region8: #{tpu_custom_call.1} parent=1 // loop_exit
      _
    %1338 = vsyncpa [#allocation3], 1
    %s1339 = scalar_lea.sflag [#allocation3], 1
    %1340 = vsyncpa %s1339, 1
    %1341 = vsyncpa [#allocation6], 1
    %1342 = vsyncpa [#allocation9], 1
    %1343 = vsyncpa [#allocation4], 1
    %s1344 = scalar_lea.sflag [#allocation4], 1
    %1345 = vsyncpa %s1344, 1
    %1346 = vsyncpa [#allocation12], 1
    %s1347 = scalar_lea.sflag [#allocation12], 1
    %1348 = vsyncpa %s1347, 1

// kernel: tpu_custom_call.1
$region0: #{tpu_custom_call.1}
  #allocation0 [shape = 'u32[]', space=smem, size = 0x4, offset = 0x4, fixed_abs, tag = 'smem constant byte address 0x4 - core index']
  #allocation1 [shape = 'u32[72,128]{1,0:T(1,128)}', space=vmem, size = 0x9000, scoped, tag = 'internal scratch']
  %s0 = inlined_call_operand.hbm [shape: f32[2,8,32], index: 0, kind: input, shape index: {}]
  %s1 = inlined_call_operand.hbm [shape: f32[1,32], index: 1, kind: input, shape index: {}]
  %s2 = inlined_call_operand.vmem [shape: f32[1,32], index: 2, kind: input, shape index: {}]
  %s3 = inlined_call_operand.hbm [shape: bf16[32,96], index: 3, kind: input, shape index: {}]
  %s4 = inlined_call_operand.hbm [shape: bf16[32,32], index: 4, kind: input, shape index: {}]
  %s5 = inlined_call_operand.vmem [shape: f32[1,32], index: 5, kind: input, shape index: {}]
  %s6 = inlined_call_operand.hbm [shape: f32[2,8,32], index: 6, kind: output, shape index: {0}]
  %s7 = inlined_call_operand.hbm [shape: f32[2,1,128], index: 7, kind: output, shape index: {1}]
  %8 = xla_tuple %s6, %s7
  %s9 = sld [smem:[#allocation0]]
  $region81: #{tpu_custom_call.1} parent=0
    _
  %s11 = ssub.s32 1, %s9
  %s12 = scalar_select 0, %s11, %s9
  $region1: #{tpu_custom_call.1} parent=0
    #allocation2 [shape = 'u8[8192]{0}', space=vmem, size = 0x2000, scoped, tag = 'input window, operand 0']
    #allocation3 [shape = 's32[2]{0}', space=sflag, size = 0x8, scoped, tag = 'scoped memory for tpu_custom_call.1']
    #allocation4 [shape = 's32[2]{0}', space=sflag, size = 0x8, scoped, tag = 'scoped memory for tpu_custom_call.1']
    #allocation5 [shape = 'u8[512]{0}', space=vmem, size = 0x400, scoped, tag = 'input window, operand 1, single buffered']
    #allocation6 [shape = 's32[1]{0}', space=sflag, size = 0x4, scoped, tag = 'scoped memory for tpu_custom_call.1']
    #allocation7 [shape = 'u8[8192]{0}', space=vmem, size = 0x2000, scoped, tag = 'input window, operand 3, single buffered']
    #allocation8 [shape = 'u8[8192]{0}', space=vmem, size = 0x2000, scoped, tag = 'input window, operand 4, single buffered']
    #allocation9 [shape = 's32[1]{0}', space=sflag, size = 0x4, scoped, tag = 'scoped memory for tpu_custom_call.1']
    #allocation10 [shape = 'u8[8192]{0}', space=vmem, size = 0x2000, scoped, tag = 'output window, operand 0']
    #allocation11 [shape = 'u8[1024]{0}', space=vmem, size = 0x400, scoped, tag = 'output window, operand 1']
    #allocation12 [shape = 's32[2]{0}', space=sflag, size = 0x8, scoped, tag = 'scoped memory for tpu_custom_call.1']
    %13 = vsyncpa [#allocation3], 0
    %s14 = scalar_lea.sflag [#allocation3], 1
    %15 = vsyncpa %s14, 0
    %16 = vsyncpa [#allocation6], 0
    %17 = vsyncpa [#allocation9], 0
    %18 = vsyncpa [#allocation4], 0
    %s19 = scalar_lea.sflag [#allocation4], 1
    %20 = vsyncpa %s19, 0
    %21 = vsyncpa [#allocation12], 0
    %s22 = scalar_lea.sflag [#allocation12], 1
    %23 = vsyncpa %s22, 0
    loop: start=0, step=1, limit=4
    $region2: #{tpu_custom_call.1} parent=1 // loop_pre_header
      _
    $region3: #{tpu_custom_call.1} parent=1 // loop_header
      %s25 = sphi 0, %s29
      %p26 = scmp.ge.s32.totalorder %s25, 4
      %s35 = sphi 0, %s37
      %s38 = sphi 0, %s35
      %s39 = sphi 0, %s38
      %s55 = sphi 0, %s39
      %s59 = sphi 0, %s59
      %s61 = sphi 0, %s59
      %s62 = sphi 0, %s61
      %s76 = sphi 0, %s62
      %s80 = sphi 0, %s80
      %s82 = sphi 0, %s80
      %s83 = sphi 0, %s82
      %s97 = sphi 0, %s83
      %s101 = sphi 0, %s101
      %s103 = sphi 0, %s101
      %s104 = sphi 0, %s103
      %s118 = sphi 0, %s104
      %s122 = sphi 0, %s122
      %s124 = sphi 0, %s122
      %s125 = sphi 0, %s124
      %s139 = sphi 0, %s125
      %s143 = sphi 0, %s143
      %s145 = sphi 0, %s143
      %s146 = sphi 0, %s145
      %s160 = sphi 0, %s146
      %s166 = sphi 0, %s168
      %s169 = sphi 0, %s166
      %s170 = sphi 0, %s169
      %s186 = sphi 0, %s170
      %s192 = sphi 0, %s194
      %s195 = sphi 0, %s192
      %s196 = sphi 0, %s195
      %s212 = sphi 0, %s196
    $region4: #{tpu_custom_call.1} parent=1 // loop_header_branch
      %28 = sbr.rel (%p26) target = $region8
    $region5: #{tpu_custom_call.1} parent=1 // loop_body
      %s30 = ssub.s32 %s25, 1
      %s31 = ssub.s32 %s25, 2
      %s32 = sadd.s32 %s25, 1
      %s33 = ssub.s32 %s25, %s32
      %p34 = scmp.eq.s32.totalorder %s33, 0
      %s36 = sadd.s32 %s35, 1
      %s37 = scalar_select %p34, %s35, %s36
      %p40 = pneg %p34
      %p41 = scmp.eq.s32.totalorder %s25, 1
      %p42 = por %p40, %p41
      %p43 = scmp.ne.s32.totalorder %s35, %s38
      %p44 = scmp.eq.s32.totalorder %s25, 0
      %p45 = por %p43, %p44
      %p46 = scmp.ne.s32.totalorder %s35, %s38
      %p47 = scmp.eq.s32.totalorder %s30, 1
      %p48 = por %p46, %p47
      %p49 = scmp.ne.s32.totalorder %s38, %s39
      %p50 = scmp.eq.s32.totalorder %s30, 0
      %p51 = por %p49, %p50
      %p52 = scmp.ne.s32.totalorder %s38, %s39
      %p53 = scmp.eq.s32.totalorder %s31, 1
      %p54 = por %p52, %p53
      %p56 = scmp.ne.s32.totalorder %s39, %s55
      %p57 = scmp.eq.s32.totalorder %s31, 0
      %p58 = por %p56, %p57
      %s60 = sadd.s32 %s59, 1
      %p63 = scmp.eq.s32.totalorder %s25, 1
      %p64 = scmp.ne.s32.totalorder %s59, %s61
      %p65 = scmp.eq.s32.totalorder %s25, 0
      %p66 = por %p64, %p65
      %p67 = scmp.ne.s32.totalorder %s59, %s61
      %p68 = scmp.eq.s32.totalorder %s30, 1
      %p69 = por %p67, %p68
      %p70 = scmp.ne.s32.totalorder %s61, %s62
      %p71 = scmp.eq.s32.totalorder %s30, 0
      %p72 = por %p70, %p71
      %p73 = scmp.ne.s32.totalorder %s61, %s62
      %p74 = scmp.eq.s32.totalorder %s31, 1
      %p75 = por %p73, %p74
      %p77 = scmp.ne.s32.totalorder %s62, %s76
      %p78 = scmp.eq.s32.totalorder %s31, 0
      %p79 = por %p77, %p78
      %s81 = sadd.s32 %s80, 1
      %p84 = scmp.eq.s32.totalorder %s25, 1
      %p85 = scmp.ne.s32.totalorder %s80, %s82
      %p86 = scmp.eq.s32.totalorder %s25, 0
      %p87 = por %p85, %p86
      %p88 = scmp.ne.s32.totalorder %s80, %s82
      %p89 = scmp.eq.s32.totalorder %s30, 1
      %p90 = por %p88, %p89
      %p91 = scmp.ne.s32.totalorder %s82, %s83
      %p92 = scmp.eq.s32.totalorder %s30, 0
      %p93 = por %p91, %p92
      %p94 = scmp.ne.s32.totalorder %s82, %s83
      %p95 = scmp.eq.s32.totalorder %s31, 1
      %p96 = por %p94, %p95
      %p98 = scmp.ne.s32.totalorder %s83, %s97
      %p99 = scmp.eq.s32.totalorder %s31, 0
      %p100 = por %p98, %p99
      %s102 = sadd.s32 %s101, 1
      %p105 = scmp.eq.s32.totalorder %s25, 1
      %p106 = scmp.ne.s32.totalorder %s101, %s103
      %p107 = scmp.eq.s32.totalorder %s25, 0
      %p108 = por %p106, %p107
      %p109 = scmp.ne.s32.totalorder %s101, %s103
      %p110 = scmp.eq.s32.totalorder %s30, 1
      %p111 = por %p109, %p110
      %p112 = scmp.ne.s32.totalorder %s103, %s104
      %p113 = scmp.eq.s32.totalorder %s30, 0
      %p114 = por %p112, %p113
      %p115 = scmp.ne.s32.totalorder %s103, %s104
      %p116 = scmp.eq.s32.totalorder %s31, 1
      %p117 = por %p115, %p116
      %p119 = scmp.ne.s32.totalorder %s104, %s118
      %p120 = scmp.eq.s32.totalorder %s31, 0
      %p121 = por %p119, %p120
      %s123 = sadd.s32 %s122, 1
      %p126 = scmp.eq.s32.totalorder %s25, 1
      %p127 = scmp.ne.s32.totalorder %s122, %s124
      %p128 = scmp.eq.s32.totalorder %s25, 0
      %p129 = por %p127, %p128
      %p130 = scmp.ne.s32.totalorder %s122, %s124
      %p131 = scmp.eq.s32.totalorder %s30, 1
      %p132 = por %p130, %p131
      %p133 = scmp.ne.s32.totalorder %s124, %s125
      %p134 = scmp.eq.s32.totalorder %s30, 0
      %p135 = por %p133, %p134
      %p136 = scmp.ne.s32.totalorder %s124, %s125
      %p137 = scmp.eq.s32.totalorder %s31, 1
      %p138 = por %p136, %p137
      %p140 = scmp.ne.s32.totalorder %s125, %s139
      %p141 = scmp.eq.s32.totalorder %s31, 0
      %p142 = por %p140, %p141
      %s144 = sadd.s32 %s143, 1
      %p147 = scmp.eq.s32.totalorder %s25, 1
      %p148 = scmp.ne.s32.totalorder %s143, %s145
      %p149 = scmp.eq.s32.totalorder %s25, 0
      %p150 = por %p148, %p149
      %p151 = scmp.ne.s32.totalorder %s143, %s145
      %p152 = scmp.eq.s32.totalorder %s30, 1
      %p153 = por %p151, %p152
      %p154 = scmp.ne.s32.totalorder %s145, %s146
      %p155 = scmp.eq.s32.totalorder %s30, 0
      %p156 = por %p154, %p155
      %p157 = scmp.ne.s32.totalorder %s145, %s146
      %p158 = scmp.eq.s32.totalorder %s31, 1
      %p159 = por %p157, %p158
      %p161 = scmp.ne.s32.totalorder %s146, %s160
      %p162 = scmp.eq.s32.totalorder %s31, 0
      %p163 = por %p161, %p162
      %s164 = ssub.s32 %s25, %s32
      %p165 = scmp.eq.s32.totalorder %s164, 0
      %s167 = sadd.s32 %s166, 1
      %s168 = scalar_select %p165, %s166, %s167
      %p171 = pneg %p165
      %p172 = scmp.eq.s32.totalorder %s25, 1
      %p173 = por %p171, %p172
      %p174 = scmp.ne.s32.totalorder %s166, %s169
      %p175 = scmp.eq.s32.totalorder %s25, 0
      %p176 = por %p174, %p175
      %p177 = scmp.ne.s32.totalorder %s166, %s169
      %p178 = scmp.eq.s32.totalorder %s30, 1
      %p179 = por %p177, %p178
      %p180 = scmp.ne.s32.totalorder %s169, %s170
      %p181 = scmp.eq.s32.totalorder %s30, 0
      %p182 = por %p180, %p181
      %p183 = scmp.ne.s32.totalorder %s169, %s170
      %p184 = scmp.eq.s32.totalorder %s31, 1
      %p185 = por %p183, %p184
      %p187 = scmp.ne.s32.totalorder %s170, %s186
      %p188 = scmp.eq.s32.totalorder %s31, 0
      %p189 = por %p187, %p188
      %s190 = ssub.s32 %s25, %s32
      %p191 = scmp.eq.s32.totalorder %s190, 0
      %s193 = sadd.s32 %s192, 1
      %s194 = scalar_select %p191, %s192, %s193
      %p197 = pneg %p191
      %p198 = scmp.eq.s32.totalorder %s25, 1
      %p199 = por %p197, %p198
      %p200 = scmp.ne.s32.totalorder %s192, %s195
      %p201 = scmp.eq.s32.totalorder %s25, 0
      %p202 = por %p200, %p201
      %p203 = scmp.ne.s32.totalorder %s192, %s195
      %p204 = scmp.eq.s32.totalorder %s30, 1
      %p205 = por %p203, %p204
      %p206 = scmp.ne.s32.totalorder %s195, %s196
      %p207 = scmp.eq.s32.totalorder %s30, 0
      %p208 = por %p206, %p207
      %p209 = scmp.ne.s32.totalorder %s195, %s196
      %p210 = scmp.eq.s32.totalorder %s31, 1
      %p211 = por %p209, %p210
      %p213 = scmp.ne.s32.totalorder %s196, %s212
      %p214 = scmp.eq.s32.totalorder %s31, 0
      %p215 = por %p213, %p214
      %p216 = scmp.le.s32.totalorder 1, %s25
      %p217 = scmp.lt.s32.totalorder %s25, 3
      %p218 = pnand %p216, %p217
      %p219 = pneg %p218
      // Predicated region
      $region9: #{tpu_custom_call.1} parent=5 // pred_check
        _
      $region10: #{tpu_custom_call.1} parent=5 // pred_check_branch
        %221 = sbr.rel (%p218) target = $region12
      $region11: #{tpu_custom_call.1} parent=5 // pred_region
        %s222 = ssub.s32 %s25, 1
        // Predicated region
        $region13: #{tpu_custom_call.1} parent=11 // pred_check
          %p223 = pneg %p72
        $region14: #{tpu_custom_call.1} parent=11 // pred_check_branch
          %225 = sbr.rel (%p223) target = $region16
        $region15: #{tpu_custom_call.1} parent=11 // pred_region
          %227 = vsyncadd [#allocation6], 0
          %s229 = sshll.u32 %s1, 4
          %s230 = int_to_ptr.hbm [resolvable:$true] %s229
          %s231 = sshll.u32 [#allocation5], 4
          %s232 = int_to_ptr.vmem [resolvable:$true] %s231
          %234 = dma.hbm_to_vmem [thread:$0]  %s230, 16, %s232, [#allocation6]
        $region16: #{tpu_custom_call.1} parent=11 // pred_fallthru
          _
        // Predicated region
        $region17: #{tpu_custom_call.1} parent=11 // pred_check
          %p235 = pneg %p93
        $region18: #{tpu_custom_call.1} parent=11 // pred_check_branch
          %237 = sbr.rel (%p235) target = $region20
        $region19: #{tpu_custom_call.1} parent=11 // pred_region
          _
        $region20: #{tpu_custom_call.1} parent=11 // pred_fallthru
          _
        // Predicated region
        $region21: #{tpu_custom_call.1} parent=11 // pred_check
          %p238 = pneg %p114
        $region22: #{tpu_custom_call.1} parent=11 // pred_check_branch
          %240 = sbr.rel (%p238) target = $region24
        $region23: #{tpu_custom_call.1} parent=11 // pred_region
          %242 = vsyncadd [#allocation6], 0
          %s243 = sshll.u32 %s3, 4
          %s244 = int_to_ptr.hbm [resolvable:$true] %s243
          %s245 = sshll.u32 [#allocation7], 4
          %s246 = int_to_ptr.vmem [resolvable:$true] %s245
          %251 = dma.hbm_to_vmem [thread:$0]  %s244, 256, %s246, [#allocation6], 64, 64, 4
        $region24: #{tpu_custom_call.1} parent=11 // pred_fallthru
          _
        // Predicated region
        $region25: #{tpu_custom_call.1} parent=11 // pred_check
          %p252 = pneg %p135
        $region26: #{tpu_custom_call.1} parent=11 // pred_check_branch
          %254 = sbr.rel (%p252) target = $region28
        $region27: #{tpu_custom_call.1} parent=11 // pred_region
          %256 = vsyncadd [#allocation9], 0
          %s257 = sshll.u32 %s4, 4
          %s258 = int_to_ptr.hbm [resolvable:$true] %s257
          %s259 = sshll.u32 [#allocation8], 4
          %s260 = int_to_ptr.vmem [resolvable:$true] %s259
          %265 = dma.hbm_to_vmem [thread:$0]  %s258, 256, %s260, [#allocation9], 64, 64, 4
        $region28: #{tpu_custom_call.1} parent=11 // pred_fallthru
          _
        // Predicated region
        $region29: #{tpu_custom_call.1} parent=11 // pred_check
          %p266 = pneg %p156
        $region30: #{tpu_custom_call.1} parent=11 // pred_check_branch
          %268 = sbr.rel (%p266) target = $region32
        $region31: #{tpu_custom_call.1} parent=11 // pred_region
          _
        $region32: #{tpu_custom_call.1} parent=11 // pred_fallthru
          _
      $region12: #{tpu_custom_call.1} parent=5 // pred_fallthru
        _
      %p269 = scmp.lt.s32.totalorder %s25, 2
      // Predicated region
      $region33: #{tpu_custom_call.1} parent=5 // pred_check
        %p270 = pneg %p269
      $region34: #{tpu_custom_call.1} parent=5 // pred_check_branch
        %272 = sbr.rel (%p270) target = $region36
      $region35: #{tpu_custom_call.1} parent=5 // pred_region
        // Predicated region
        $region37: #{tpu_custom_call.1} parent=35 // pred_check
          %p273 = pneg %p45
        $region38: #{tpu_custom_call.1} parent=35 // pred_check_branch
          %275 = sbr.rel (%p273) target = $region40
        $region39: #{tpu_custom_call.1} parent=35 // pred_region
          %s276 = sand.u32 %s35, 1
          %s277 = scalar_lea.sflag [#allocation3], %s276
          %s278 = sand.u32 %s35, 1
          %s279 = smul.addr %s278, 8
          %s280 = scalar_lea.vmem [#allocation2], %s279
          %282 = vsyncadd %s277, 0
          %s283 = smul.addr %s25, 8
          %s284 = scalar_lea.hbm %s0, %s283
          %s286 = sshll.u32 %s284, 4
          %s287 = int_to_ptr.hbm [resolvable:$true] %s286
          %s288 = sshll.u32 %s280, 4
          %s289 = int_to_ptr.vmem [resolvable:$true] %s288
          %291 = dma.hbm_to_vmem [thread:$0]  %s287, 128, %s289, %s277
        $region40: #{tpu_custom_call.1} parent=35 // pred_fallthru
          _
      $region36: #{tpu_custom_call.1} parent=5 // pred_fallthru
        _
      %p292 = scmp.le.s32.totalorder 1, %s25
      %p293 = scmp.lt.s32.totalorder %s25, 3
      %p294 = pnand %p292, %p293
      %p295 = pneg %p294
      // Predicated region
      $region41: #{tpu_custom_call.1} parent=5 // pred_check
        _
      $region42: #{tpu_custom_call.1} parent=5 // pred_check_branch
        %297 = sbr.rel (%p294) target = $region44
      $region43: #{tpu_custom_call.1} parent=5 // pred_region
        %s298 = ssub.s32 %s25, 1
        %s299 = sand.u32 %s38, 1
        %s300 = scalar_lea.sflag [#allocation3], %s299
        %s301 = sand.u32 %s38, 1
        %s302 = smul.addr %s301, 8
        %s303 = scalar_lea.vmem [#allocation2], %s302
        // Predicated region
        $region45: #{tpu_custom_call.1} parent=43 // pred_check
          %p304 = pneg %p51
        $region46: #{tpu_custom_call.1} parent=43 // pred_check_branch
          %306 = sbr.rel (%p304) target = $region48
        $region47: #{tpu_custom_call.1} parent=43 // pred_region
          %308 = dma.done %s300, 128
        $region48: #{tpu_custom_call.1} parent=43 // pred_fallthru
          _
        // Predicated region
        $region49: #{tpu_custom_call.1} parent=43 // pred_check
          %p309 = pneg %p72
        $region50: #{tpu_custom_call.1} parent=43 // pred_check_branch
          %311 = sbr.rel (%p309) target = $region52
        $region51: #{tpu_custom_call.1} parent=43 // pred_region
          %313 = dma.done [#allocation6], 16
        $region52: #{tpu_custom_call.1} parent=43 // pred_fallthru
          _
        // Predicated region
        $region53: #{tpu_custom_call.1} parent=43 // pred_check
          %p314 = pneg %p114
        $region54: #{tpu_custom_call.1} parent=43 // pred_check_branch
          %316 = sbr.rel (%p314) target = $region56
        $region55: #{tpu_custom_call.1} parent=43 // pred_region
          %318 = dma.done [#allocation6], 256
        $region56: #{tpu_custom_call.1} parent=43 // pred_fallthru
          _
        // Predicated region
        $region57: #{tpu_custom_call.1} parent=43 // pred_check
          %p319 = pneg %p135
        $region58: #{tpu_custom_call.1} parent=43 // pred_check_branch
          %321 = sbr.rel (%p319) target = $region60
        $region59: #{tpu_custom_call.1} parent=43 // pred_region
          %323 = dma.done [#allocation9], 256
        $region60: #{tpu_custom_call.1} parent=43 // pred_fallthru
          _
        %s324 = sand.u32 %s38, 1
        %s325 = scalar_lea.sflag [#allocation3], %s324
        %s326 = sand.u32 %s38, 1
        %s327 = smul.addr %s326, 8
        %s328 = scalar_lea.vmem [#allocation2], %s327
        %p329 = pneg %p51
        %p330 = pneg %p48
        %p331 = pneg %p72
        %p332 = pneg %p69
        %p333 = pneg %p93
        %p334 = pneg %p90
        %p335 = pneg %p114
        %p336 = pneg %p111
        %p337 = pneg %p135
        %p338 = pneg %p132
        %p339 = pneg %p156
        %p340 = pneg %p153
        %p341 = pneg %p182
        %p342 = pneg %p179
        %s343 = sand.u32 %s169, 1
        %s344 = scalar_lea.sflag [#allocation4], %s343
        %s345 = sand.u32 %s169, 1
        %s346 = smul.addr %s345, 8
        %s347 = scalar_lea.vmem [#allocation10], %s346
        %p348 = pneg %p208
        %p349 = pneg %p205
        %s350 = sand.u32 %s195, 1
        %s351 = scalar_lea.sflag [#allocation12], %s350
        %s352 = sand.u32 %s195, 1
        %s353 = scalar_lea.vmem [#allocation11], %s352
        %v355 = vld [vmem:[%s303] sm:$0xff]
        %vm356 = vcmask 261120
        %v357 = vsel %vm356, %v355, 0.0
        %358 = vadd.xlane.f32.xlu0 %v357
        %v359 = vpop.xlane.xlu0 %358
        %v360 = vrcp.pop 32.0
        %v361 = vmul.f32 32.0, %v360
        %v362 = vsub.f32 1.0, %v361
        %v363 = vmul.f32 %v360, %v362
        %v364 = vadd.f32 %v360, %v363
        %vm365 = vweird.f32 %v360
        %v366 = vsel %vm365, %v360, %v364
        %v367 = vmul.f32 %v359, %v366
        %v368 = vsub.f32 %v355, %v367
        %v369 = vmul.f32 %v368, %v368
        %v370 = vsel %vm356, %v369, 0.0
        %371 = vadd.xlane.f32.xlu0 %v370
        %v372 = vpop.xlane.xlu0 %371
        %v373 = vmul.f32 %v372, %v366
        %v374 = vadd.f32 %v373, 1e-05
        %v375 = vrsqrt.pop %v374
        %v376 = vmul.f32 %v375, %v374
        %v377 = vmul.f32 %v376, %v375
        %v378 = vmul.f32 0.5, %v377
        %v379 = vsub.f32 1.5, %v378
        %v380 = vmul.f32 %v375, %v379
        %vm381 = vweird.f32 %v374
        %vm382 = vweird.f32 %v375
        %vm383 = vmor %vm381, %vm382
        %v384 = vsel %vm383, %v375, %v380
        %v385 = vmul.f32 %v368, %v384
        %v386 = vld [vmem:[#allocation5] sm:$0x1]
        %v388 = vperm.slane %v386, 0
        %v390 = vmul.f32 %v385, %v388
        %v391 = vld [vmem:[%s2] sm:$0x1]
        %v393 = vperm.slane %v391, 0
        %v395 = vadd.f32 %v390, %v393
        %v396 = vpack.c.bf16 %v395, %v395
        %v397 = vld [vmem:[#allocation7] sm:$0xf]
        %v398 = vld [vmem:[#allocation7 + $0x4] sm:$0xf]
        %v399 = vld [vmem:[#allocation7 + $0x8] sm:$0xf]
        %v400 = vld [vmem:[#allocation7 + $0xc] sm:$0xf]
        %v405 = vunpack.c.l.b16 %v397
        %v406 = vunpack.c.l.b16 %v398
        %v407 = vunpack.c.l.b16 %v399
        %v408 = vunpack.c.l.b16 %v400
        %v409 = vpack.c.b16 %v406, %v405
        %v410 = vpack.c.b16 %v408, %v407
        %v414 = vsel %vm356, %v396, 0
        %416 = vmatpush.bf16.msra.mxu0 0
        %417 = vmatpush.bf16.msra.mxu0 0
        %418 = vmatpush.bf16.msra.mxu0 0
        %419 = vmatpush.bf16.msra.mxu0 0
        %420 = vmatpush.bf16.msra.mxu0 0
        %421 = vmatpush.bf16.msra.mxu0 0
        %422 = vmatpush.bf16.msra.mxu0 %v410
        %423 = vmatpush.bf16.msra.mxu0 %v409
        %424 = vmatmul.bf16.gmra.mxu0 %v414
        %v425 = vpop.f32.mrf.mxu0
        %v426 = vadd.f32 0.0, %v425
        %v427 = vpop.f32.mrf.mxu0
        %428 = vdwg.mxu0
        %v429 = vpack.c.bf16 %v426, %v426
        %431 = vrot.lane.b32.xlu0 %v429, 120
        %v432 = vpop.permute.xlu0 %431
        %433 = vrot.lane.b32.xlu0 %v429, 112
        %v434 = vpop.permute.xlu0 %433
        %435 = vrot.lane.b32.xlu0 %v429, 104
        %v436 = vpop.permute.xlu0 %435
        %437 = vrot.lane.b32.xlu0 %v429, 96
        %v438 = vpop.permute.xlu0 %437
        %439 = vrot.lane.b32.xlu0 %v429, 88
        %v440 = vpop.permute.xlu0 %439
        %441 = vrot.lane.b32.xlu0 %v429, 80
        %v442 = vpop.permute.xlu0 %441
        %443 = vrot.lane.b32.xlu0 %v429, 72
        %v444 = vpop.permute.xlu0 %443
        %445 = vrot.lane.b32.xlu0 %v429, 64
        %v446 = vpop.permute.xlu0 %445
        %447 = vrot.lane.b32.xlu0 %v429, 56
        %v448 = vpop.permute.xlu0 %447
        %449 = vrot.lane.b32.xlu0 %v429, 48
        %v450 = vpop.permute.xlu0 %449
        %451 = vrot.lane.b32.xlu0 %v429, 40
        %v452 = vpop.permute.xlu0 %451
        %v455 = vpack.i.b16 %v432, %v429
        %v457 = vshrl.u32 %v429, 16
        %v458 = vshrl.u32 %v432, 16
        %v459 = vpack.i.b16 %v458, %v457
        %v463 = vpack.i.b16 %v436, %v434
        %v465 = vshrl.u32 %v434, 16
        %v466 = vshrl.u32 %v436, 16
        %v467 = vpack.i.b16 %v466, %v465
        %v471 = vpack.i.b16 %v440, %v438
        %v473 = vshrl.u32 %v438, 16
        %v474 = vshrl.u32 %v440, 16
        %v475 = vpack.i.b16 %v474, %v473
        %v479 = vpack.i.b16 %v444, %v442
        %v481 = vshrl.u32 %v442, 16
        %v482 = vshrl.u32 %v444, 16
        %v483 = vpack.i.b16 %v482, %v481
        %v487 = vpack.i.b16 %v448, %v446
        %v488 = vshrl.u32 %v446, 16
        %v489 = vshrl.u32 %v448, 16
        %v490 = vpack.i.b16 %v489, %v488
        %v493 = vpack.i.b16 %v452, %v450
        %v494 = vshrl.u32 %v450, 16
        %v495 = vshrl.u32 %v452, 16
        %v496 = vpack.i.b16 %v495, %v494
        %v497 = vrot.slane %v471, 4
        %vm498 = vcmask 1047556
        %v499 = vsel %vm498, %v497, %v455
        %v501 = vunpack.c.l.s4 1983009808
        %v502 = vunpack.c.0.s8 %v501
        %v503 = vperm.slane %v499, %v502
        %v504 = vrot.slane %v479, 4
        %v505 = vsel %vm498, %v504, %v463
        %v507 = vunpack.c.l.s4 1983009808
        %v508 = vunpack.c.0.s8 %v507
        %v509 = vperm.slane %v505, %v508
        %v510 = vrot.slane %v509, 4
        %v511 = vsel %vm498, %v510, %v503
        %v512 = vrot.slane %v503, 4
        %v513 = vsel %vm498, %v509, %v512
        %v515 = vunpack.c.l.s4 1934713408
        %v516 = vunpack.c.0.s8 %v515
        %v517 = vperm.slane %v511, %v516
        %v519 = vunpack.c.l.s4 1934713408
        %v520 = vunpack.c.0.s8 %v519
        %v521 = vperm.slane %v513, %v520
        %v522 = vrot.slane %v517, 4
        %v523 = vsel %vm498, 0, %v522
        %v524 = vrot.slane %v521, 4
        %v525 = vsel %vm498, 0, %v524
        %v526 = vrot.slane %v475, 4
        %v527 = vsel %vm498, %v526, %v459
        %v529 = vunpack.c.l.s4 1983009808
        %v530 = vunpack.c.0.s8 %v529
        %v531 = vperm.slane %v527, %v530
        %v532 = vrot.slane %v483, 4
        %v533 = vsel %vm498, %v532, %v467
        %v535 = vunpack.c.l.s4 1983009808
        %v536 = vunpack.c.0.s8 %v535
        %v537 = vperm.slane %v533, %v536
        %v538 = vrot.slane %v537, 4
        %v539 = vsel %vm498, %v538, %v531
        %v540 = vrot.slane %v531, 4
        %v541 = vsel %vm498, %v537, %v540
        %v543 = vunpack.c.l.s4 1934713408
        %v544 = vunpack.c.0.s8 %v543
        %v545 = vperm.slane %v539, %v544
        %v547 = vunpack.c.l.s4 1934713408
        %v548 = vunpack.c.0.s8 %v547
        %v549 = vperm.slane %v541, %v548
        %v550 = vrot.slane %v545, 4
        %v551 = vsel %vm498, 0, %v550
        %v552 = vrot.slane %v549, 4
        %v553 = vsel %vm498, 0, %v552
        %v556 = vunpack.c.l.s4 1983009808
        %v557 = vunpack.c.0.s8 %v556
        %v558 = vperm.slane %v487, %v557
        %v561 = vunpack.c.l.s4 1983009808
        %v562 = vunpack.c.0.s8 %v561
        %v563 = vperm.slane %v493, %v562
        %v564 = vrot.slane %v563, 4
        %v565 = vsel %vm498, %v564, %v558
        %v566 = vrot.slane %v558, 4
        %v567 = vsel %vm498, %v563, %v566
        %v569 = vunpack.c.l.s4 1934713408
        %v570 = vunpack.c.0.s8 %v569
        %v571 = vperm.slane %v565, %v570
        %v573 = vunpack.c.l.s4 1934713408
        %v574 = vunpack.c.0.s8 %v573
        %v575 = vperm.slane %v567, %v574
        %v576 = vrot.slane %v571, 4
        %v577 = vsel %vm498, 0, %v576
        %v578 = vrot.slane %v575, 4
        %v579 = vsel %vm498, 0, %v578
        %v582 = vunpack.c.l.s4 1983009808
        %v583 = vunpack.c.0.s8 %v582
        %v584 = vperm.slane %v490, %v583
        %v587 = vunpack.c.l.s4 1983009808
        %v588 = vunpack.c.0.s8 %v587
        %v589 = vperm.slane %v496, %v588
        %v590 = vrot.slane %v589, 4
        %v591 = vsel %vm498, %v590, %v584
        %v592 = vrot.slane %v584, 4
        %v593 = vsel %vm498, %v589, %v592
        %v595 = vunpack.c.l.s4 1934713408
        %v596 = vunpack.c.0.s8 %v595
        %v597 = vperm.slane %v591, %v596
        %v599 = vunpack.c.l.s4 1934713408
        %v600 = vunpack.c.0.s8 %v599
        %v601 = vperm.slane %v593, %v600
        %v602 = vrot.slane %v597, 4
        %v603 = vsel %vm498, 0, %v602
        %v604 = vrot.slane %v601, 4
        %v605 = vsel %vm498, 0, %v604
        %v606 = vsel %vm498, %v524, %v517
        %v608 = vunpack.c.l.s4 1983009808
        %v609 = vunpack.c.0.s8 %v608
        %v610 = vperm.slane %v606, %v609
        %v611 = vrot.slane %v525, 4
        %v612 = vsel %vm498, %v611, %v523
        %v614 = vunpack.c.l.s4 1983009808
        %v615 = vunpack.c.0.s8 %v614
        %v616 = vperm.slane %v612, %v615
        %v617 = vrot.slane %v616, 4
        %v618 = vsel %vm498, %v617, %v610
        %v619 = vrot.slane %v610, 4
        %v620 = vsel %vm498, %v616, %v619
        %v622 = vunpack.c.l.s4 1934713408
        %v623 = vunpack.c.0.s8 %v622
        %v624 = vperm.slane %v618, %v623
        %v626 = vunpack.c.l.s4 1934713408
        %v627 = vunpack.c.0.s8 %v626
        %v628 = vperm.slane %v620, %v627
        %v629 = vrot.slane %v624, 4
        %v630 = vsel %vm498, 0, %v629
        %v631 = vrot.slane %v628, 4
        %v632 = vsel %vm498, 0, %v631
        %v633 = vsel %vm498, %v552, %v545
        %v635 = vunpack.c.l.s4 1983009808
        %v636 = vunpack.c.0.s8 %v635
        %v637 = vperm.slane %v633, %v636
        %v638 = vrot.slane %v553, 4
        %v639 = vsel %vm498, %v638, %v551
        %v641 = vunpack.c.l.s4 1983009808
        %v642 = vunpack.c.0.s8 %v641
        %v643 = vperm.slane %v639, %v642
        %v644 = vrot.slane %v643, 4
        %v645 = vsel %vm498, %v644, %v637
        %v646 = vrot.slane %v637, 4
        %v647 = vsel %vm498, %v643, %v646
        %v649 = vunpack.c.l.s4 1934713408
        %v650 = vunpack.c.0.s8 %v649
        %v651 = vperm.slane %v645, %v650
        %v653 = vunpack.c.l.s4 1934713408
        %v654 = vunpack.c.0.s8 %v653
        %v655 = vperm.slane %v647, %v654
        %v656 = vrot.slane %v651, 4
        %v657 = vsel %vm498, 0, %v656
        %v658 = vrot.slane %v655, 4
        %v659 = vsel %vm498, 0, %v658
        %v660 = vsel %vm498, %v578, %v571
        %v662 = vunpack.c.l.s4 1983009808
        %v663 = vunpack.c.0.s8 %v662
        %v664 = vperm.slane %v660, %v663
        %v665 = vrot.slane %v579, 4
        %v666 = vsel %vm498, %v665, %v577
        %v668 = vunpack.c.l.s4 1983009808
        %v669 = vunpack.c.0.s8 %v668
        %v670 = vperm.slane %v666, %v669
        %v671 = vrot.slane %v670, 4
        %v672 = vsel %vm498, %v671, %v664
        %v674 = vunpack.c.l.s4 1934713408
        %v675 = vunpack.c.0.s8 %v674
        %v676 = vperm.slane %v672, %v675
        %v677 = vrot.slane %v676, 4
        %v678 = vsel %vm498, 0, %v677
        %v679 = vsel %vm498, %v604, %v597
        %v681 = vunpack.c.l.s4 1983009808
        %v682 = vunpack.c.0.s8 %v681
        %v683 = vperm.slane %v679, %v682
        %v684 = vrot.slane %v605, 4
        %v685 = vsel %vm498, %v684, %v603
        %v687 = vunpack.c.l.s4 1983009808
        %v688 = vunpack.c.0.s8 %v687
        %v689 = vperm.slane %v685, %v688
        %v690 = vrot.slane %v689, 4
        %v691 = vsel %vm498, %v690, %v683
        %v693 = vunpack.c.l.s4 1934713408
        %v694 = vunpack.c.0.s8 %v693
        %v695 = vperm.slane %v691, %v694
        %v696 = vrot.slane %v695, 4
        %v697 = vsel %vm498, 0, %v696
        %v700 = vpack.i.b16 %v651, %v624
        %v701 = vshrl.u32 %v624, 16
        %v702 = vshrl.u32 %v651, 16
        %v703 = vpack.i.b16 %v702, %v701
        %v706 = vpack.i.b16 %v657, %v630
        %v707 = vshrl.u32 %v630, 16
        %v708 = vshrl.u32 %v657, 16
        %v709 = vpack.i.b16 %v708, %v707
        %v712 = vpack.i.b16 %v655, %v628
        %v713 = vshrl.u32 %v628, 16
        %v714 = vshrl.u32 %v655, 16
        %v715 = vpack.i.b16 %v714, %v713
        %v718 = vpack.i.b16 %v659, %v632
        %v719 = vshrl.u32 %v632, 16
        %v720 = vshrl.u32 %v659, 16
        %v721 = vpack.i.b16 %v720, %v719
        %v724 = vpack.i.b16 %v695, %v676
        %v725 = vshrl.u32 %v676, 16
        %v726 = vshrl.u32 %v695, 16
        %v727 = vpack.i.b16 %v726, %v725
        %v730 = vpack.i.b16 %v697, %v678
        %v731 = vshrl.u32 %v678, 16
        %v732 = vshrl.u32 %v697, 16
        %v733 = vpack.i.b16 %v732, %v731
        %vm734 = vcmask 64512
        %v736 = vsel %vm734, %v700, 0
        %v739 = vsel %vm734, %v712, 0
        %741 = vmatpush.bf16.xpose.msra.mxu0 0
        %742 = vmatpush.bf16.xpose.msra.mxu0 0
        %743 = vmatpush.bf16.xpose.msra.mxu0 0
        %744 = vmatpush.bf16.xpose.msra.mxu0 0
        %745 = vmatpush.bf16.xpose.msra.mxu0 0
        %746 = vmatpush.bf16.xpose.msra.mxu0 0
        %747 = vmatpush.bf16.xpose.msra.mxu0 0
        %748 = vmatpush.bf16.xpose.msra.mxu0 %v739
        %749 = vmatmul.bf16.gmra.mxu0 %v736
        %v750 = vpop.f32.mrf.mxu0
        %v751 = vadd.f32 0.0, %v750
        %v752 = vpop.f32.mrf.mxu0
        %753 = vdwg.mxu0
        %v755 = vsel %vm734, %v703, 0
        %v758 = vsel %vm734, %v715, 0
        %760 = vmatpush.bf16.xpose.msra.mxu0 0
        %761 = vmatpush.bf16.xpose.msra.mxu0 0
        %762 = vmatpush.bf16.xpose.msra.mxu0 0
        %763 = vmatpush.bf16.xpose.msra.mxu0 0
        %764 = vmatpush.bf16.xpose.msra.mxu0 0
        %765 = vmatpush.bf16.xpose.msra.mxu0 0
        %766 = vmatpush.bf16.xpose.msra.mxu0 0
        %767 = vmatpush.bf16.xpose.msra.mxu0 %v758
        %768 = vmatmul.bf16.gmra.mxu0 %v755
        %v769 = vpop.f32.mrf.mxu0
        %v770 = vadd.f32 0.0, %v769
        %v771 = vpop.f32.mrf.mxu0
        %772 = vdwg.mxu0
        %v774 = vsel %vm734, %v706, 0
        %v777 = vsel %vm734, %v718, 0
        %779 = vmatpush.bf16.xpose.msra.mxu0 0
        %780 = vmatpush.bf16.xpose.msra.mxu0 0
        %781 = vmatpush.bf16.xpose.msra.mxu0 0
        %782 = vmatpush.bf16.xpose.msra.mxu0 0
        %783 = vmatpush.bf16.xpose.msra.mxu0 0
        %784 = vmatpush.bf16.xpose.msra.mxu0 0
        %785 = vmatpush.bf16.xpose.msra.mxu0 0
        %786 = vmatpush.bf16.xpose.msra.mxu0 %v777
        %787 = vmatmul.bf16.gmra.mxu0 %v774
        %v788 = vpop.f32.mrf.mxu0
        %v789 = vadd.f32 0.0, %v788
        %v790 = vpop.f32.mrf.mxu0
        %791 = vdwg.mxu0
        %v793 = vsel %vm734, %v709, 0
        %v796 = vsel %vm734, %v721, 0
        %798 = vmatpush.bf16.xpose.msra.mxu0 0
        %799 = vmatpush.bf16.xpose.msra.mxu0 0
        %800 = vmatpush.bf16.xpose.msra.mxu0 0
        %801 = vmatpush.bf16.xpose.msra.mxu0 0
        %802 = vmatpush.bf16.xpose.msra.mxu0 0
        %803 = vmatpush.bf16.xpose.msra.mxu0 0
        %804 = vmatpush.bf16.xpose.msra.mxu0 0
        %805 = vmatpush.bf16.xpose.msra.mxu0 %v796
        %806 = vmatmul.bf16.gmra.mxu0 %v793
        %v807 = vpop.f32.mrf.mxu0
        %v808 = vadd.f32 0.0, %v807
        %v809 = vpop.f32.mrf.mxu0
        %810 = vdwg.mxu0
        %v811 = vsel %vm734, %v751, -inf
        %812 = vmax.xlane.f32.xlu0 %v811
        %v813 = vpop.xlane.xlu0 %812
        %v814 = vsel %vm734, %v770, -inf
        %815 = vmax.xlane.f32.xlu0 %v814
        %v816 = vpop.xlane.xlu0 %815
        %v817 = vsel %vm734, %v789, -inf
        %818 = vmax.xlane.f32.xlu0 %v817
        %v819 = vpop.xlane.xlu0 %818
        %v820 = vsel %vm734, %v808, -inf
        %821 = vmax.xlane.f32.xlu0 %v820
        %v822 = vpop.xlane.xlu0 %821
        %v823 = vsub.f32 %v751, %v813
        %v824 = vsub.f32 %v770, %v816
        %v825 = vsub.f32 %v789, %v819
        %v826 = vsub.f32 %v808, %v822
        %v827 = vmul.f32 %v823, 1.442695
        %v828 = vpow.pop %v827
        %v829 = vmul.f32 %v824, 1.442695
        %v830 = vpow.pop %v829
        %v831 = vmul.f32 %v825, 1.442695
        %v832 = vpow.pop %v831
        %v833 = vmul.f32 %v826, 1.442695
        %v834 = vpow.pop %v833
        %v839 = vrot.slane %v830, 7
        %vm840 = vcmask 1041409
        %v841 = vsel %vm840, %v839, %v828
        %v842 = vrot.slane %v832, 6
        %vm843 = vcmask 1042434
        %v844 = vsel %vm843, %v842, %v841
        %v845 = vrot.slane %v834, 5
        %vm846 = vcmask 1043459
        %v847 = vsel %vm846, %v845, %v844
        %vm849 = vcmask 60416
        %v850 = vsel %vm849, %v847, 0.0
        %851 = vadd.xlane.f32.xlu0 %v850
        %v852 = vpop.xlane.xlu0 %851
        %v854 = vrot.slane %v852, 1
        %v855 = vrot.slane %v852, 2
        %v856 = vrot.slane %v852, 3
        %v861 = vrcp.pop %v852
        %v862 = vmul.f32 %v852, %v861
        %v863 = vsub.f32 1.0, %v862
        %v864 = vmul.f32 %v861, %v863
        %v865 = vadd.f32 %v861, %v864
        %vm866 = vweird.f32 %v852
        %vm867 = vweird.f32 %v861
        %vm868 = vmor %vm866, %vm867
        %v869 = vsel %vm868, %v861, %v865
        %v870 = vand.u32 2147483647, %v852
        %vm871 = vcmp.eq.f32.partialorder %v870, 8.507059e+37
        %v872 = vand.u32 %v852, 2147483648
        %v873 = vor.u32 1.1754944e-38, %v872
        %v874 = vsel %vm871, %v873, %v869
        %v875 = vmul.f32 %v828, %v874
        %v876 = vrcp.pop %v854
        %v877 = vmul.f32 %v854, %v876
        %v878 = vsub.f32 1.0, %v877
        %v879 = vmul.f32 %v876, %v878
        %v880 = vadd.f32 %v876, %v879
        %vm881 = vweird.f32 %v854
        %vm882 = vweird.f32 %v876
        %vm883 = vmor %vm881, %vm882
        %v884 = vsel %vm883, %v876, %v880
        %v885 = vand.u32 2147483647, %v854
        %vm886 = vcmp.eq.f32.partialorder %v885, 8.507059e+37
        %v887 = vand.u32 %v854, 2147483648
        %v888 = vor.u32 1.1754944e-38, %v887
        %v889 = vsel %vm886, %v888, %v884
        %v890 = vmul.f32 %v830, %v889
        %v891 = vrcp.pop %v855
        %v892 = vmul.f32 %v855, %v891
        %v893 = vsub.f32 1.0, %v892
        %v894 = vmul.f32 %v891, %v893
        %v895 = vadd.f32 %v891, %v894
        %vm896 = vweird.f32 %v855
        %vm897 = vweird.f32 %v891
        %vm898 = vmor %vm896, %vm897
        %v899 = vsel %vm898, %v891, %v895
        %v900 = vand.u32 2147483647, %v855
        %vm901 = vcmp.eq.f32.partialorder %v900, 8.507059e+37
        %v902 = vand.u32 %v855, 2147483648
        %v903 = vor.u32 1.1754944e-38, %v902
        %v904 = vsel %vm901, %v903, %v899
        %v905 = vmul.f32 %v832, %v904
        %v906 = vrcp.pop %v856
        %v907 = vmul.f32 %v856, %v906
        %v908 = vsub.f32 1.0, %v907
        %v909 = vmul.f32 %v906, %v908
        %v910 = vadd.f32 %v906, %v909
        %vm911 = vweird.f32 %v856
        %vm912 = vweird.f32 %v906
        %vm913 = vmor %vm911, %vm912
        %v914 = vsel %vm913, %v906, %v910
        %v915 = vand.u32 2147483647, %v856
        %vm916 = vcmp.eq.f32.partialorder %v915, 8.507059e+37
        %v917 = vand.u32 %v856, 2147483648
        %v918 = vor.u32 1.1754944e-38, %v917
        %v919 = vsel %vm916, %v918, %v914
        %v920 = vmul.f32 %v834, %v919
        %v925 = vrot.slane %v890, 7
        %v926 = vsel %vm840, %v925, %v875
        %v927 = vrot.slane %v905, 6
        %v928 = vsel %vm843, %v927, %v926
        %v929 = vrot.slane %v920, 5
        %v930 = vsel %vm846, %v929, %v928
        %v932 = vsel %vm849, %v930, 0.0
        %v933 = vrot.slane %v932, 4
        %v934 = vadd.f32 %v932, %v933
        %v935 = vrot.slane %v934, 2
        %v936 = vadd.f32 %v934, %v935
        %v937 = vrot.slane %v936, 1
        %v938 = vadd.f32 %v936, %v937
        %v939 = vrcp.pop 4.0
        %v940 = vmul.f32 4.0, %v939
        %v941 = vsub.f32 1.0, %v940
        %v942 = vmul.f32 %v939, %v941
        %v943 = vadd.f32 %v939, %v942
        %vm944 = vweird.f32 %v939
        %v945 = vsel %vm944, %v939, %v943
        %v946 = vmul.f32 %v938, %v945
        %v947 = vsel %vm734, %v946, 0.0
        %948 = vst [vmem:[%s353] sm:$0x1] %v947
        %v949 = vsel %vm734, %v828, 0.0
        %950 = vadd.xlane.f32.xlu0 %v949
        %v951 = vpop.xlane.xlu0 %950
        %v952 = vsel %vm734, %v830, 0.0
        %953 = vadd.xlane.f32.xlu0 %v952
        %v954 = vpop.xlane.xlu0 %953
        %v955 = vsel %vm734, %v832, 0.0
        %956 = vadd.xlane.f32.xlu0 %v955
        %v957 = vpop.xlane.xlu0 %956
        %v958 = vsel %vm734, %v834, 0.0
        %959 = vadd.xlane.f32.xlu0 %v958
        %v960 = vpop.xlane.xlu0 %959
        %v961 = vpack.c.bf16 %v828, %v828
        %v962 = vpack.c.bf16 %v830, %v830
        %v963 = vpack.c.bf16 %v832, %v832
        %v964 = vpack.c.bf16 %v834, %v834
        %v966 = vsel %vm734, %v961, 0
        %vm968 = vcmask 1043456
        %v970 = vsel %vm968, %v724, 0
        %972 = vmatpush.bf16.msra.mxu0 0
        %973 = vmatpush.bf16.msra.mxu0 0
        %974 = vmatpush.bf16.msra.mxu0 0
        %975 = vmatpush.bf16.msra.mxu0 0
        %976 = vmatpush.bf16.msra.mxu0 0
        %977 = vmatpush.bf16.msra.mxu0 0
        %978 = vmatpush.bf16.msra.mxu0 0
        %979 = vmatpush.bf16.msra.mxu0 %v970
        %980 = vmatmul.bf16.gmra.mxu0 %v966
        %v981 = vpop.f32.mrf.mxu0
        %v982 = vadd.f32 0.0, %v981
        %v983 = vpop.f32.mrf.mxu0
        %984 = vdwg.mxu0
        %v986 = vsel %vm734, %v962, 0
        %v989 = vsel %vm968, %v727, 0
        %991 = vmatpush.bf16.msra.mxu0 0
        %992 = vmatpush.bf16.msra.mxu0 0
        %993 = vmatpush.bf16.msra.mxu0 0
        %994 = vmatpush.bf16.msra.mxu0 0
        %995 = vmatpush.bf16.msra.mxu0 0
        %996 = vmatpush.bf16.msra.mxu0 0
        %997 = vmatpush.bf16.msra.mxu0 0
        %998 = vmatpush.bf16.msra.mxu0 %v989
        %999 = vmatmul.bf16.gmra.mxu0 %v986
        %v1000 = vpop.f32.mrf.mxu0
        %v1001 = vadd.f32 0.0, %v1000
        %v1002 = vpop.f32.mrf.mxu0
        %1003 = vdwg.mxu0
        %v1005 = vsel %vm734, %v963, 0
        %v1008 = vsel %vm968, %v730, 0
        %1010 = vmatpush.bf16.msra.mxu0 0
        %1011 = vmatpush.bf16.msra.mxu0 0
        %1012 = vmatpush.bf16.msra.mxu0 0
        %1013 = vmatpush.bf16.msra.mxu0 0
        %1014 = vmatpush.bf16.msra.mxu0 0
        %1015 = vmatpush.bf16.msra.mxu0 0
        %1016 = vmatpush.bf16.msra.mxu0 0
        %1017 = vmatpush.bf16.msra.mxu0 %v1008
        %1018 = vmatmul.bf16.gmra.mxu0 %v1005
        %v1019 = vpop.f32.mrf.mxu0
        %v1020 = vadd.f32 0.0, %v1019
        %v1021 = vpop.f32.mrf.mxu0
        %1022 = vdwg.mxu0
        %v1024 = vsel %vm734, %v964, 0
        %v1027 = vsel %vm968, %v733, 0
        %1029 = vmatpush.bf16.msra.mxu0 0
        %1030 = vmatpush.bf16.msra.mxu0 0
        %1031 = vmatpush.bf16.msra.mxu0 0
        %1032 = vmatpush.bf16.msra.mxu0 0
        %1033 = vmatpush.bf16.msra.mxu0 0
        %1034 = vmatpush.bf16.msra.mxu0 0
        %1035 = vmatpush.bf16.msra.mxu0 0
        %1036 = vmatpush.bf16.msra.mxu0 %v1027
        %1037 = vmatmul.bf16.gmra.mxu0 %v1024
        %v1038 = vpop.f32.mrf.mxu0
        %v1039 = vadd.f32 0.0, %v1038
        %v1040 = vpop.f32.mrf.mxu0
        %1041 = vdwg.mxu0
        %v1042 = vrcp.pop %v951
        %v1043 = vmul.f32 %v951, %v1042
        %v1044 = vsub.f32 1.0, %v1043
        %v1045 = vmul.f32 %v1042, %v1044
        %v1046 = vadd.f32 %v1042, %v1045
        %vm1047 = vweird.f32 %v951
        %vm1048 = vweird.f32 %v1042
        %vm1049 = vmor %vm1047, %vm1048
        %v1050 = vsel %vm1049, %v1042, %v1046
        %v1051 = vand.u32 2147483647, %v951
        %vm1052 = vcmp.eq.f32.partialorder %v1051, 8.507059e+37
        %v1053 = vand.u32 %v951, 2147483648
        %v1054 = vor.u32 1.1754944e-38, %v1053
        %v1055 = vsel %vm1052, %v1054, %v1050
        %v1056 = vrcp.pop %v954
        %v1057 = vmul.f32 %v954, %v1056
        %v1058 = vsub.f32 1.0, %v1057
        %v1059 = vmul.f32 %v1056, %v1058
        %v1060 = vadd.f32 %v1056, %v1059
        %vm1061 = vweird.f32 %v954
        %vm1062 = vweird.f32 %v1056
        %vm1063 = vmor %vm1061, %vm1062
        %v1064 = vsel %vm1063, %v1056, %v1060
        %v1065 = vand.u32 2147483647, %v954
        %vm1066 = vcmp.eq.f32.partialorder %v1065, 8.507059e+37
        %v1067 = vand.u32 %v954, 2147483648
        %v1068 = vor.u32 1.1754944e-38, %v1067
        %v1069 = vsel %vm1066, %v1068, %v1064
        %v1070 = vrcp.pop %v957
        %v1071 = vmul.f32 %v957, %v1070
        %v1072 = vsub.f32 1.0, %v1071
        %v1073 = vmul.f32 %v1070, %v1072
        %v1074 = vadd.f32 %v1070, %v1073
        %vm1075 = vweird.f32 %v957
        %vm1076 = vweird.f32 %v1070
        %vm1077 = vmor %vm1075, %vm1076
        %v1078 = vsel %vm1077, %v1070, %v1074
        %v1079 = vand.u32 2147483647, %v957
        %vm1080 = vcmp.eq.f32.partialorder %v1079, 8.507059e+37
        %v1081 = vand.u32 %v957, 2147483648
        %v1082 = vor.u32 1.1754944e-38, %v1081
        %v1083 = vsel %vm1080, %v1082, %v1078
        %v1084 = vrcp.pop %v960
        %v1085 = vmul.f32 %v960, %v1084
        %v1086 = vsub.f32 1.0, %v1085
        %v1087 = vmul.f32 %v1084, %v1086
        %v1088 = vadd.f32 %v1084, %v1087
        %vm1089 = vweird.f32 %v960
        %vm1090 = vweird.f32 %v1084
        %vm1091 = vmor %vm1089, %vm1090
        %v1092 = vsel %vm1091, %v1084, %v1088
        %v1093 = vand.u32 2147483647, %v960
        %vm1094 = vcmp.eq.f32.partialorder %v1093, 8.507059e+37
        %v1095 = vand.u32 %v960, 2147483648
        %v1096 = vor.u32 1.1754944e-38, %v1095
        %v1097 = vsel %vm1094, %v1096, %v1092
        %v1098 = vmul.f32 %v982, %v1055
        %v1099 = vmul.f32 %v1001, %v1069
        %v1100 = vmul.f32 %v1020, %v1083
        %v1101 = vmul.f32 %v1039, %v1097
        %v1102 = vpack.c.bf16 %v1098, %v1098
        %v1103 = vpack.c.bf16 %v1099, %v1099
        %v1104 = vpack.c.bf16 %v1100, %v1100
        %v1105 = vpack.c.bf16 %v1101, %v1101
        %v1108 = vpack.i.b16 %v1103, %v1102
        %v1109 = vshrl.u32 %v1102, 16
        %v1110 = vshrl.u32 %v1103, 16
        %v1111 = vpack.i.b16 %v1110, %v1109
        %v1114 = vpack.i.b16 %v1105, %v1104
        %v1115 = vshrl.u32 %v1104, 16
        %v1116 = vshrl.u32 %v1105, 16
        %v1117 = vpack.i.b16 %v1116, %v1115
        %v1120 = vunpack.c.l.s4 1983009808
        %v1121 = vunpack.c.0.s8 %v1120
        %v1122 = vperm.slane %v1108, %v1121
        %v1125 = vunpack.c.l.s4 1983009808
        %v1126 = vunpack.c.0.s8 %v1125
        %v1127 = vperm.slane %v1114, %v1126
        %v1128 = vrot.slane %v1127, 4
        %v1129 = vsel %vm498, %v1128, %v1122
        %v1130 = vrot.slane %v1122, 4
        %v1131 = vsel %vm498, %v1127, %v1130
        %v1133 = vunpack.c.l.s4 1934713408
        %v1134 = vunpack.c.0.s8 %v1133
        %v1135 = vperm.slane %v1129, %v1134
        %v1137 = vunpack.c.l.s4 1934713408
        %v1138 = vunpack.c.0.s8 %v1137
        %v1139 = vperm.slane %v1131, %v1138
        %v1140 = vrot.slane %v1135, 4
        %v1141 = vsel %vm498, 0, %v1140
        %v1142 = vrot.slane %v1139, 4
        %v1143 = vsel %vm498, 0, %v1142
        %v1146 = vunpack.c.l.s4 1983009808
        %v1147 = vunpack.c.0.s8 %v1146
        %v1148 = vperm.slane %v1111, %v1147
        %v1151 = vunpack.c.l.s4 1983009808
        %v1152 = vunpack.c.0.s8 %v1151
        %v1153 = vperm.slane %v1117, %v1152
        %v1154 = vrot.slane %v1153, 4
        %v1155 = vsel %vm498, %v1154, %v1148
        %v1156 = vrot.slane %v1148, 4
        %v1157 = vsel %vm498, %v1153, %v1156
        %v1159 = vunpack.c.l.s4 1934713408
        %v1160 = vunpack.c.0.s8 %v1159
        %v1161 = vperm.slane %v1155, %v1160
        %v1163 = vunpack.c.l.s4 1934713408
        %v1164 = vunpack.c.0.s8 %v1163
        %v1165 = vperm.slane %v1157, %v1164
        %v1166 = vrot.slane %v1161, 4
        %v1167 = vsel %vm498, 0, %v1166
        %v1168 = vrot.slane %v1165, 4
        %v1169 = vsel %vm498, 0, %v1168
        %v1170 = vsel %vm498, %v1142, %v1135
        %v1172 = vunpack.c.l.s4 1983009808
        %v1173 = vunpack.c.0.s8 %v1172
        %v1174 = vperm.slane %v1170, %v1173
        %v1175 = vrot.slane %v1143, 4
        %v1176 = vsel %vm498, %v1175, %v1141
        %v1178 = vunpack.c.l.s4 1983009808
        %v1179 = vunpack.c.0.s8 %v1178
        %v1180 = vperm.slane %v1176, %v1179
        %v1181 = vrot.slane %v1180, 4
        %v1182 = vsel %vm498, %v1181, %v1174
        %v1184 = vunpack.c.l.s4 1934713408
        %v1185 = vunpack.c.0.s8 %v1184
        %v1186 = vperm.slane %v1182, %v1185
        %v1187 = vrot.slane %v1186, 4
        %v1188 = vsel %vm498, 0, %v1187
        %v1189 = vsel %vm498, %v1168, %v1161
        %v1191 = vunpack.c.l.s4 1983009808
        %v1192 = vunpack.c.0.s8 %v1191
        %v1193 = vperm.slane %v1189, %v1192
        %v1194 = vrot.slane %v1169, 4
        %v1195 = vsel %vm498, %v1194, %v1167
        %v1197 = vunpack.c.l.s4 1983009808
        %v1198 = vunpack.c.0.s8 %v1197
        %v1199 = vperm.slane %v1195, %v1198
        %v1200 = vrot.slane %v1199, 4
        %v1201 = vsel %vm498, %v1200, %v1193
        %v1203 = vunpack.c.l.s4 1934713408
        %v1204 = vunpack.c.0.s8 %v1203
        %v1205 = vperm.slane %v1201, %v1204
        %v1206 = vrot.slane %v1205, 4
        %v1207 = vsel %vm498, 0, %v1206
        %v1210 = vpack.i.b16 %v1205, %v1186
        %v1211 = vshrl.u32 %v1186, 16
        %v1212 = vshrl.u32 %v1205, 16
        %v1213 = vpack.i.b16 %v1212, %v1211
        %v1216 = vpack.i.b16 %v1207, %v1188
        %v1217 = vshrl.u32 %v1188, 16
        %v1218 = vshrl.u32 %v1207, 16
        %v1219 = vpack.i.b16 %v1218, %v1217
        %v1220 = vunpack.c.l.b16 %v1213
        %v1221 = vpack.c.b16 %v1220, %v1220
        %1222 = vrot.lane.b32.xlu0 %v1221, 8
        %v1223 = vpop.permute.xlu0 %1222
        %v1224 = vunpack.c.l.b16 %v1216
        %v1225 = vpack.c.b16 %v1224, %v1224
        %1226 = vrot.lane.b32.xlu0 %v1225, 16
        %v1227 = vpop.permute.xlu0 %1226
        %v1228 = vunpack.c.l.b16 %v1219
        %v1229 = vpack.c.b16 %v1228, %v1228
        %1230 = vrot.lane.b32.xlu0 %v1229, 24
        %v1231 = vpop.permute.xlu0 %1230
        %v1234 = vsel %vm734, %v1210, %v1223
        %vm1235 = vcmask 130048
        %v1237 = vsel %vm1235, %v1234, %v1227
        %vm1238 = vcmask 195584
        %v1240 = vsel %vm1238, %v1237, %v1231
        %v1241 = vld [vmem:[#allocation8] sm:$0xf]
        %v1242 = vld [vmem:[#allocation8 + $0x4] sm:$0xf]
        %v1243 = vld [vmem:[#allocation8 + $0x8] sm:$0xf]
        %v1244 = vld [vmem:[#allocation8 + $0xc] sm:$0xf]
        %v1245 = vld [vmem:[%s5] sm:$0x1]
        %v1247 = vperm.slane %v1245, 0
        %v1253 = vunpack.c.l.b16 %v1241
        %v1254 = vunpack.c.l.b16 %v1242
        %v1255 = vunpack.c.l.b16 %v1243
        %v1256 = vunpack.c.l.b16 %v1244
        %v1257 = vpack.c.b16 %v1254, %v1253
        %v1258 = vpack.c.b16 %v1256, %v1255
        %v1261 = vsel %vm356, %v1240, 0
        %1263 = vmatpush.bf16.msra.mxu0 0
        %1264 = vmatpush.bf16.msra.mxu0 0
        %1265 = vmatpush.bf16.msra.mxu0 0
        %1266 = vmatpush.bf16.msra.mxu0 0
        %1267 = vmatpush.bf16.msra.mxu0 0
        %1268 = vmatpush.bf16.msra.mxu0 0
        %1269 = vmatpush.bf16.msra.mxu0 %v1258
        %1270 = vmatpush.bf16.msra.mxu0 %v1257
        %1271 = vmatmul.bf16.gmra.mxu0 %v1261
        %v1272 = vpop.f32.mrf.mxu0
        %v1273 = vadd.f32 %v1247, %v1272
        %v1274 = vpop.f32.mrf.mxu0
        %1275 = vdwg.mxu0
        %v1276 = vadd.f32 %v355, %v1273
        %1277 = vst.msk [vmem:[%s347] sm:$0xff] %vm356, %v1276
        %s1278 = sand.u32 %s169, 1
        %s1279 = scalar_lea.sflag [#allocation4], %s1278
        %s1280 = sand.u32 %s169, 1
        %s1281 = smul.addr %s1280, 8
        %s1282 = scalar_lea.vmem [#allocation10], %s1281
        %s1283 = sand.u32 %s195, 1
        %s1284 = scalar_lea.sflag [#allocation12], %s1283
        %s1285 = sand.u32 %s195, 1
        %s1286 = scalar_lea.vmem [#allocation11], %s1285
        // Predicated region
        $region61: #{tpu_custom_call.1} parent=43 // pred_check
          %p1287 = pneg %p179
        $region62: #{tpu_custom_call.1} parent=43 // pred_check_branch
          %1289 = sbr.rel (%p1287) target = $region64
        $region63: #{tpu_custom_call.1} parent=43 // pred_region
          %1291 = vsyncadd %s1279, 0
          %s1292 = smul.addr %s30, 8
          %s1293 = scalar_lea.hbm %s6, %s1292
          %s1295 = sshll.u32 %s1282, 4
          %s1296 = int_to_ptr.vmem [resolvable:$true] %s1295
          %s1297 = sshll.u32 %s1293, 4
          %s1298 = int_to_ptr.hbm [resolvable:$true] %s1297
          %1300 = dma.vmem_to_hbm [thread:$0]  %s1296, 128, %s1298, %s1279
        $region64: #{tpu_custom_call.1} parent=43 // pred_fallthru
          _
        // Predicated region
        $region65: #{tpu_custom_call.1} parent=43 // pred_check
          %p1301 = pneg %p205
        $region66: #{tpu_custom_call.1} parent=43 // pred_check_branch
          %1303 = sbr.rel (%p1301) target = $region68
        $region67: #{tpu_custom_call.1} parent=43 // pred_region
          %1305 = vsyncadd %s1284, 0
          %s1306 = scalar_lea.hbm %s7, %s30
          %s1308 = sshll.u32 %s1286, 4
          %s1309 = int_to_ptr.vmem [resolvable:$true] %s1308
          %s1310 = sshll.u32 %s1306, 4
          %s1311 = int_to_ptr.hbm [resolvable:$true] %s1310
          %1313 = dma.vmem_to_hbm [thread:$0]  %s1309, 16, %s1311, %s1284
        $region68: #{tpu_custom_call.1} parent=43 // pred_fallthru
          _
      $region44: #{tpu_custom_call.1} parent=5 // pred_fallthru
        _
      %p1314 = scmp.le.s32.totalorder 2, %s25
      // Predicated region
      $region69: #{tpu_custom_call.1} parent=5 // pred_check
        %p1315 = pneg %p1314
      $region70: #{tpu_custom_call.1} parent=5 // pred_check_branch
        %1317 = sbr.rel (%p1315) target = $region72
      $region71: #{tpu_custom_call.1} parent=5 // pred_region
        %s1318 = ssub.s32 %s25, 2
        // Predicated region
        $region73: #{tpu_custom_call.1} parent=71 // pred_check
          %p1319 = pneg %p185
        $region74: #{tpu_custom_call.1} parent=71 // pred_check_branch
          %1321 = sbr.rel (%p1319) target = $region76
        $region75: #{tpu_custom_call.1} parent=71 // pred_region
          %s1322 = sand.u32 %s170, 1
          %s1323 = scalar_lea.sflag [#allocation4], %s1322
          %s1324 = sand.u32 %s170, 1
          %s1325 = smul.addr %s1324, 8
          %s1326 = scalar_lea.vmem [#allocation10], %s1325
          %1328 = dma.done %s1323, 128
        $region76: #{tpu_custom_call.1} parent=71 // pred_fallthru
          _
        // Predicated region
        $region77: #{tpu_custom_call.1} parent=71 // pred_check
          %p1329 = pneg %p211
        $region78: #{tpu_custom_call.1} parent=71 // pred_check_branch
          %1331 = sbr.rel (%p1329) target = $region80
        $region79: #{tpu_custom_call.1} parent=71 // pred_region
          %s1332 = sand.u32 %s196, 1
          %s1333 = scalar_lea.sflag [#allocation12], %s1332
          %s1334 = sand.u32 %s196, 1
          %s1335 = scalar_lea.vmem [#allocation11], %s1334
          %1337 = dma.done %s1333, 16
        $region80: #{tpu_custom_call.1} parent=71 // pred_fallthru
          _
      $region72: #{tpu_custom_call.1} parent=5 // pred_fallthru
        _
    $region6: #{tpu_custom_call.1} parent=1 // loop_footer
      %s29 = sadd.s32 1, %s25
    $region7: #{tpu_custom_call.1} parent=1 // loop_footer_branch
      %24 = sbr.rel target = $region3
    $region8: #{tpu_custom_call.1} parent=1 // loop_exit
      _
    %1338 = vsyncpa [#allocation3], 1
    %s1339 = scalar_lea.sflag [#allocation3], 1
    %1340 = vsyncpa %s1339, 1
    %1341 = vsyncpa [#allocation6], 1
    %1342 = vsyncpa [#allocation9], 1
    %1343 = vsyncpa [#allocation4], 1
    %s1344 = scalar_lea.sflag [#allocation4], 1
    %1345 = vsyncpa %s1344, 1
    %1346 = vsyncpa [#allocation12], 1
    %s1347 = scalar_lea.sflag [#allocation12], 1
    %1348 = vsyncpa %s1347, 1

// kernel: tpu_custom_call.1
$region0: #{tpu_custom_call.1}
  #allocation0 [shape = 'u32[]', space=smem, size = 0x4, offset = 0x4, fixed_abs, tag = 'smem constant byte address 0x4 - core index']
  #allocation1 [shape = 'u32[72,128]{1,0:T(1,128)}', space=vmem, size = 0x9000, scoped, tag = 'internal scratch']
  %s0 = inlined_call_operand.hbm [shape: f32[2,8,32], index: 0, kind: input, shape index: {}]
  %s1 = inlined_call_operand.hbm [shape: f32[1,32], index: 1, kind: input, shape index: {}]
  %s2 = inlined_call_operand.vmem [shape: f32[1,32], index: 2, kind: input, shape index: {}]
  %s3 = inlined_call_operand.hbm [shape: bf16[32,96], index: 3, kind: input, shape index: {}]
  %s4 = inlined_call_operand.hbm [shape: bf16[32,32], index: 4, kind: input, shape index: {}]
  %s5 = inlined_call_operand.vmem [shape: f32[1,32], index: 5, kind: input, shape index: {}]
  %s6 = inlined_call_operand.hbm [shape: f32[2,8,32], index: 6, kind: output, shape index: {0}]
  %s7 = inlined_call_operand.hbm [shape: f32[2,1,128], index: 7, kind: output, shape index: {1}]
  %8 = xla_tuple %s6, %s7
  %s9 = sld [smem:[#allocation0]]
  $region81: #{tpu_custom_call.1} parent=0
    _
  %s11 = ssub.s32 1, %s9
  %s12 = scalar_select 0, %s11, %s9
  $region1: #{tpu_custom_call.1} parent=0
    #allocation2 [shape = 'u8[8192]{0}', space=vmem, size = 0x2000, scoped, tag = 'input window, operand 0']
    #allocation3 [shape = 's32[2]{0}', space=sflag, size = 0x8, scoped, tag = 'scoped memory for tpu_custom_call.1']
    #allocation4 [shape = 's32[2]{0}', space=sflag, size = 0x8, scoped, tag = 'scoped memory for tpu_custom_call.1']
    #allocation5 [shape = 'u8[512]{0}', space=vmem, size = 0x400, scoped, tag = 'input window, operand 1, single buffered']
    #allocation6 [shape = 's32[1]{0}', space=sflag, size = 0x4, scoped, tag = 'scoped memory for tpu_custom_call.1']
    #allocation7 [shape = 'u8[8192]{0}', space=vmem, size = 0x2000, scoped, tag = 'input window, operand 3, single buffered']
    #allocation8 [shape = 'u8[8192]{0}', space=vmem, size = 0x2000, scoped, tag = 'input window, operand 4, single buffered']
    #allocation9 [shape = 's32[1]{0}', space=sflag, size = 0x4, scoped, tag = 'scoped memory for tpu_custom_call.1']
    #allocation10 [shape = 'u8[8192]{0}', space=vmem, size = 0x2000, scoped, tag = 'output window, operand 0']
    #allocation11 [shape = 'u8[1024]{0}', space=vmem, size = 0x400, scoped, tag = 'output window, operand 1']
    #allocation12 [shape = 's32[2]{0}', space=sflag, size = 0x8, scoped, tag = 'scoped memory for tpu_custom_call.1']
    %13 = vsyncpa [#allocation3], 0
    %s14 = scalar_lea.sflag [#allocation3], 1
    %15 = vsyncpa %s14, 0
    %16 = vsyncpa [#allocation6], 0
    %17 = vsyncpa [#allocation9], 0
    %18 = vsyncpa [#allocation4], 0
    %s19 = scalar_lea.sflag [#allocation4], 1
    %20 = vsyncpa %s19, 0
    %21 = vsyncpa [#allocation12], 0
    %s22 = scalar_lea.sflag [#allocation12], 1
    %23 = vsyncpa %s22, 0
    loop: start=0, step=1, limit=4
    $region2: #{tpu_custom_call.1} parent=1 // loop_pre_header
      _
    $region3: #{tpu_custom_call.1} parent=1 // loop_header
      %s25 = sphi 0, %s29
      %p26 = scmp.ge.s32.totalorder %s25, 4
      %s35 = sphi 0, %s37
      %s38 = sphi 0, %s35
      %s39 = sphi 0, %s38
      %s55 = sphi 0, %s39
      %s59 = sphi 0, %s59
      %s61 = sphi 0, %s59
      %s62 = sphi 0, %s61
      %s76 = sphi 0, %s62
      %s80 = sphi 0, %s80
      %s82 = sphi 0, %s80
      %s83 = sphi 0, %s82
      %s97 = sphi 0, %s83
      %s101 = sphi 0, %s101
      %s103 = sphi 0, %s101
      %s104 = sphi 0, %s103
      %s118 = sphi 0, %s104
      %s122 = sphi 0, %s122
      %s124 = sphi 0, %s122
      %s125 = sphi 0, %s124
      %s139 = sphi 0, %s125
      %s143 = sphi 0, %s143
      %s145 = sphi 0, %s143
      %s146 = sphi 0, %s145
      %s160 = sphi 0, %s146
      %s166 = sphi 0, %s168
      %s169 = sphi 0, %s166
      %s170 = sphi 0, %s169
      %s186 = sphi 0, %s170
      %s192 = sphi 0, %s194
      %s195 = sphi 0, %s192
      %s196 = sphi 0, %s195
      %s212 = sphi 0, %s196
    $region4: #{tpu_custom_call.1} parent=1 // loop_header_branch
      %28 = sbr.rel (%p26) target = $region8
    $region5: #{tpu_custom_call.1} parent=1 // loop_body
      %s30 = ssub.s32 %s25, 1
      %s31 = ssub.s32 %s25, 2
      %s32 = sadd.s32 %s25, 1
      %s33 = ssub.s32 %s25, %s32
      %p34 = scmp.eq.s32.totalorder %s33, 0
      %s36 = sadd.s32 %s35, 1
      %s37 = scalar_select %p34, %s35, %s36
      %p40 = pneg %p34
      %p41 = scmp.eq.s32.totalorder %s25, 1
      %p42 = por %p40, %p41
      %p43 = scmp.ne.s32.totalorder %s35, %s38
      %p44 = scmp.eq.s32.totalorder %s25, 0
      %p45 = por %p43, %p44
      %p46 = scmp.ne.s32.totalorder %s35, %s38
      %p47 = scmp.eq.s32.totalorder %s30, 1
      %p48 = por %p46, %p47
      %p49 = scmp.ne.s32.totalorder %s38, %s39
      %p50 = scmp.eq.s32.totalorder %s30, 0
      %p51 = por %p49, %p50
      %p52 = scmp.ne.s32.totalorder %s38, %s39
      %p53 = scmp.eq.s32.totalorder %s31, 1
      %p54 = por %p52, %p53
      %p56 = scmp.ne.s32.totalorder %s39, %s55
      %p57 = scmp.eq.s32.totalorder %s31, 0
      %p58 = por %p56, %p57
      %s60 = sadd.s32 %s59, 1
      %p63 = scmp.eq.s32.totalorder %s25, 1
      %p64 = scmp.ne.s32.totalorder %s59, %s61
      %p65 = scmp.eq.s32.totalorder %s25, 0
      %p66 = por %p64, %p65
      %p67 = scmp.ne.s32.totalorder %s59, %s61
      %p68 = scmp.eq.s32.totalorder %s30, 1
      %p69 = por %p67, %p68
      %p70 = scmp.ne.s32.totalorder %s61, %s62
      %p71 = scmp.eq.s32.totalorder %s30, 0
      %p72 = por %p70, %p71
      %p73 = scmp.ne.s32.totalorder %s61, %s62
      %p74 = scmp.eq.s32.totalorder %s31, 1
      %p75 = por %p73, %p74
      %p77 = scmp.ne.s32.totalorder %s62, %s76
      %p78 = scmp.eq.s32.totalorder %s31, 0
      %p79 = por %p77, %p78
      %s81 = sadd.s32 %s80, 1
      %p84 = scmp.eq.s32.totalorder %s25, 1
      %p85 = scmp.ne.s32.totalorder %s80, %s82
      %p86 = scmp.eq.s32.totalorder %s25, 0
      %p87 = por %p85, %p86
      %p88 = scmp.ne.s32.totalorder %s80, %s82
      %p89 = scmp.eq.s32.totalorder %s30, 1
      %p90 = por %p88, %p89
      %p91 = scmp.ne.s32.totalorder %s82, %s83
      %p92 = scmp.eq.s32.totalorder %s30, 0
      %p93 = por %p91, %p92
      %p94 = scmp.ne.s32.totalorder %s82, %s83
      %p95 = scmp.eq.s32.totalorder %s31, 1
      %p96 = por %p94, %p95
      %p98 = scmp.ne.s32.totalorder %s83, %s97
      %p99 = scmp.eq.s32.totalorder %s31, 0
      %p100 = por %p98, %p99
      %s102 = sadd.s32 %s101, 1
      %p105 = scmp.eq.s32.totalorder %s25, 1
      %p106 = scmp.ne.s32.totalorder %s101, %s103
      %p107 = scmp.eq.s32.totalorder %s25, 0
      %p108 = por %p106, %p107
      %p109 = scmp.ne.s32.totalorder %s101, %s103
      %p110 = scmp.eq.s32.totalorder %s30, 1
      %p111 = por %p109, %p110
      %p112 = scmp.ne.s32.totalorder %s103, %s104
      %p113 = scmp.eq.s32.totalorder %s30, 0
      %p114 = por %p112, %p113
      %p115 = scmp.ne.s32.totalorder %s103, %s104
      %p116 = scmp.eq.s32.totalorder %s31, 1
      %p117 = por %p115, %p116
      %p119 = scmp.ne.s32.totalorder %s104, %s118
      %p120 = scmp.eq.s32.totalorder %s31, 0
      %p121 = por %p119, %p120
      %s123 = sadd.s32 %s122, 1
      %p126 = scmp.eq.s32.totalorder %s25, 1
      %p127 = scmp.ne.s32.totalorder %s122, %s124
      %p128 = scmp.eq.s32.totalorder %s25, 0
      %p129 = por %p127, %p128
      %p130 = scmp.ne.s32.totalorder %s122, %s124
      %p131 = scmp.eq.s32.totalorder %s30, 1
      %p132 = por %p130, %p131
      %p133 = scmp.ne.s32.totalorder %s124, %s125
      %p134 = scmp.eq.s32.totalorder %s30, 0
      %p135 = por %p133, %p134
      %p136 = scmp.ne.s32.totalorder %s124, %s125
      %p137 = scmp.eq.s32.totalorder %s31, 1
      %p138 = por %p136, %p137
      %p140 = scmp.ne.s32.totalorder %s125, %s139
      %p141 = scmp.eq.s32.totalorder %s31, 0
      %p142 = por %p140, %p141
      %s144 = sadd.s32 %s143, 1
      %p147 = scmp.eq.s32.totalorder %s25, 1
      %p148 = scmp.ne.s32.totalorder %s143, %s145
      %p149 = scmp.eq.s32.totalorder %s25, 0
      %p150 = por %p148, %p149
      %p151 = scmp.ne.s32.totalorder %s143, %s145
      %p152 = scmp.eq.s32.totalorder %s30, 1
      %p153 = por %p151, %p152
      %p154 = scmp.ne.s32.totalorder %s145, %s146
      %p155 = scmp.eq.s32.totalorder %s30, 0
      %p156 = por %p154, %p155
      %p157 = scmp.ne.s32.totalorder %s145, %s146
      %p158 = scmp.eq.s32.totalorder %s31, 1
      %p159 = por %p157, %p158
      %p161 = scmp.ne.s32.totalorder %s146, %s160
      %p162 = scmp.eq.s32.totalorder %s31, 0
      %p163 = por %p161, %p162
      %s164 = ssub.s32 %s25, %s32
      %p165 = scmp.eq.s32.totalorder %s164, 0
      %s167 = sadd.s32 %s166, 1
      %s168 = scalar_select %p165, %s166, %s167
      %p171 = pneg %p165
      %p172 = scmp.eq.s32.totalorder %s25, 1
      %p173 = por %p171, %p172
      %p174 = scmp.ne.s32.totalorder %s166, %s169
      %p175 = scmp.eq.s32.totalorder %s25, 0
      %p176 = por %p174, %p175
      %p177 = scmp.ne.s32.totalorder %s166, %s169
      %p178 = scmp.eq.s32.totalorder %s30, 1
      %p179 = por %p177, %p178
      %p180 = scmp.ne.s32.totalorder %s169, %s170
      %p181 = scmp.eq.s32.totalorder %s30, 0
      %p182 = por %p180, %p181
      %p183 = scmp.ne.s32.totalorder %s169, %s170
      %p184 = scmp.eq.s32.totalorder %s31, 1
      %p185 = por %p183, %p184
      %p187 = scmp.ne.s32.totalorder %s170, %s186
      %p188 = scmp.eq.s32.totalorder %s31, 0
      %p189 = por %p187, %p188
      %s190 = ssub.s32 %s25, %s32
      %p191 = scmp.eq.s32.totalorder %s190, 0
      %s193 = sadd.s32 %s192, 1
      %s194 = scalar_select %p191, %s192, %s193
      %p197 = pneg %p191
      %p198 = scmp.eq.s32.totalorder %s25, 1
      %p199 = por %p197, %p198
      %p200 = scmp.ne.s32.totalorder %s192, %s195
      %p201 = scmp.eq.s32.totalorder %s25, 0
      %p202 = por %p200, %p201
      %p203 = scmp.ne.s32.totalorder %s192, %s195
      %p204 = scmp.eq.s32.totalorder %s30, 1
      %p205 = por %p203, %p204
      %p206 = scmp.ne.s32.totalorder %s195, %s196
      %p207 = scmp.eq.s32.totalorder %s30, 0
      %p208 = por %p206, %p207
      %p209 = scmp.ne.s32.totalorder %s195, %s196
      %p210 = scmp.eq.s32.totalorder %s31, 1
      %p211 = por %p209, %p210
      %p213 = scmp.ne.s32.totalorder %s196, %s212
      %p214 = scmp.eq.s32.totalorder %s31, 0
      %p215 = por %p213, %p214
      %p216 = scmp.le.s32.totalorder 1, %s25
      %p217 = scmp.lt.s32.totalorder %s25, 3
      %p218 = pnand %p216, %p217
      %p219 = pneg %p218
      // Predicated region
      $region9: #{tpu_custom_call.1} parent=5 // pred_check
        _
      $region10: #{tpu_custom_call.1} parent=5 // pred_check_branch
        %221 = sbr.rel (%p218) target = $region12
      $region11: #{tpu_custom_call.1} parent=5 // pred_region
        %s222 = ssub.s32 %s25, 1
        // Predicated region
        $region13: #{tpu_custom_call.1} parent=11 // pred_check
          %p223 = pneg %p72
        $region14: #{tpu_custom_call.1} parent=11 // pred_check_branch
          %225 = sbr.rel (%p223) target = $region16
        $region15: #{tpu_custom_call.1} parent=11 // pred_region
          %227 = vsyncadd [#allocation6], 0
          %s229 = sshll.u32 %s1, 4
          %s230 = int_to_ptr.hbm [resolvable:$true] %s229
          %s231 = sshll.u32 [#allocation5], 4
          %s232 = int_to_ptr.vmem [resolvable:$true] %s231
          %234 = dma.hbm_to_vmem [thread:$0]  %s230, 16, %s232, [#allocation6]
        $region16: #{tpu_custom_call.1} parent=11 // pred_fallthru
          _
        // Predicated region
        $region17: #{tpu_custom_call.1} parent=11 // pred_check
          %p235 = pneg %p93
        $region18: #{tpu_custom_call.1} parent=11 // pred_check_branch
          %237 = sbr.rel (%p235) target = $region20
        $region19: #{tpu_custom_call.1} parent=11 // pred_region
          _
        $region20: #{tpu_custom_call.1} parent=11 // pred_fallthru
          _
        // Predicated region
        $region21: #{tpu_custom_call.1} parent=11 // pred_check
          %p238 = pneg %p114
        $region22: #{tpu_custom_call.1} parent=11 // pred_check_branch
          %240 = sbr.rel (%p238) target = $region24
        $region23: #{tpu_custom_call.1} parent=11 // pred_region
          %242 = vsyncadd [#allocation6], 0
          %s243 = sshll.u32 %s3, 4
          %s244 = int_to_ptr.hbm [resolvable:$true] %s243
          %s245 = sshll.u32 [#allocation7], 4
          %s246 = int_to_ptr.vmem [resolvable:$true] %s245
          %251 = dma.hbm_to_vmem [thread:$0]  %s244, 256, %s246, [#allocation6], 64, 64, 4
        $region24: #{tpu_custom_call.1} parent=11 // pred_fallthru
          _
        // Predicated region
        $region25: #{tpu_custom_call.1} parent=11 // pred_check
          %p252 = pneg %p135
        $region26: #{tpu_custom_call.1} parent=11 // pred_check_branch
          %254 = sbr.rel (%p252) target = $region28
        $region27: #{tpu_custom_call.1} parent=11 // pred_region
          %256 = vsyncadd [#allocation9], 0
          %s257 = sshll.u32 %s4, 4
          %s258 = int_to_ptr.hbm [resolvable:$true] %s257
          %s259 = sshll.u32 [#allocation8], 4
          %s260 = int_to_ptr.vmem [resolvable:$true] %s259
          %265 = dma.hbm_to_vmem [thread:$0]  %s258, 256, %s260, [#allocation9], 64, 64, 4
        $region28: #{tpu_custom_call.1} parent=11 // pred_fallthru
          _
        // Predicated region
        $region29: #{tpu_custom_call.1} parent=11 // pred_check
          %p266 = pneg %p156
        $region30: #{tpu_custom_call.1} parent=11 // pred_check_branch
          %268 = sbr.rel (%p266) target = $region32
        $region31: #{tpu_custom_call.1} parent=11 // pred_region
          _
        $region32: #{tpu_custom_call.1} parent=11 // pred_fallthru
          _
      $region12: #{tpu_custom_call.1} parent=5 // pred_fallthru
        _
      %p269 = scmp.lt.s32.totalorder %s25, 2
      // Predicated region
      $region33: #{tpu_custom_call.1} parent=5 // pred_check
        %p270 = pneg %p269
      $region34: #{tpu_custom_call.1} parent=5 // pred_check_branch
        %272 = sbr.rel (%p270) target = $region36
      $region35: #{tpu_custom_call.1} parent=5 // pred_region
        // Predicated region
        $region37: #{tpu_custom_call.1} parent=35 // pred_check
          %p273 = pneg %p45
        $region38: #{tpu_custom_call.1} parent=35 // pred_check_branch
          %275 = sbr.rel (%p273) target = $region40
        $region39: #{tpu_custom_call.1} parent=35 // pred_region
          %s276 = sand.u32 %s35, 1
          %s277 = scalar_lea.sflag [#allocation3], %s276
          %s278 = sand.u32 %s35, 1
          %s279 = smul.addr %s278, 8
          %s280 = scalar_lea.vmem [#allocation2], %s279
          %282 = vsyncadd %s277, 0
          %s283 = smul.addr %s25, 8
          %s284 = scalar_lea.hbm %s0, %s283
          %s286 = sshll.u32 %s284, 4
          %s287 = int_to_ptr.hbm [resolvable:$true] %s286
          %s288 = sshll.u32 %s280, 4
          %s289 = int_to_ptr.vmem [resolvable:$true] %s288
          %291 = dma.hbm_to_vmem [thread:$0]  %s287, 128, %s289, %s277
        $region40: #{tpu_custom_call.1} parent=35 // pred_fallthru
          _
      $region36: #{tpu_custom_call.1} parent=5 // pred_fallthru
        _
      %p292 = scmp.le.s32.totalorder 1, %s25
      %p293 = scmp.lt.s32.totalorder %s25, 3
      %p294 = pnand %p292, %p293
      %p295 = pneg %p294
      // Predicated region
      $region41: #{tpu_custom_call.1} parent=5 // pred_check
        _
      $region42: #{tpu_custom_call.1} parent=5 // pred_check_branch
        %297 = sbr.rel (%p294) target = $region44
      $region43: #{tpu_custom_call.1} parent=5 // pred_region
        %s298 = ssub.s32 %s25, 1
        %s299 = sand.u32 %s38, 1
        %s300 = scalar_lea.sflag [#allocation3], %s299
        %s301 = sand.u32 %s38, 1
        %s302 = smul.addr %s301, 8
        %s303 = scalar_lea.vmem [#allocation2], %s302
        // Predicated region
        $region45: #{tpu_custom_call.1} parent=43 // pred_check
          %p304 = pneg %p51
        $region46: #{tpu_custom_call.1} parent=43 // pred_check_branch
          %306 = sbr.rel (%p304) target = $region48
        $region47: #{tpu_custom_call.1} parent=43 // pred_region
          %308 = dma.done %s300, 128
        $region48: #{tpu_custom_call.1} parent=43 // pred_fallthru
          _
        // Predicated region
        $region49: #{tpu_custom_call.1} parent=43 // pred_check
          %p309 = pneg %p72
        $region50: #{tpu_custom_call.1} parent=43 // pred_check_branch
          %311 = sbr.rel (%p309) target = $region52
        $region51: #{tpu_custom_call.1} parent=43 // pred_region
          %313 = dma.done [#allocation6], 16
        $region52: #{tpu_custom_call.1} parent=43 // pred_fallthru
          _
        // Predicated region
        $region53: #{tpu_custom_call.1} parent=43 // pred_check
          %p314 = pneg %p114
        $region54: #{tpu_custom_call.1} parent=43 // pred_check_branch
          %316 = sbr.rel (%p314) target = $region56
        $region55: #{tpu_custom_call.1} parent=43 // pred_region
          %318 = dma.done [#allocation6], 256
        $region56: #{tpu_custom_call.1} parent=43 // pred_fallthru
          _
        // Predicated region
        $region57: #{tpu_custom_call.1} parent=43 // pred_check
          %p319 = pneg %p135
        $region58: #{tpu_custom_call.1} parent=43 // pred_check_branch
          %321 = sbr.rel (%p319) target = $region60
        $region59: #{tpu_custom_call.1} parent=43 // pred_region
          %323 = dma.done [#allocation9], 256
        $region60: #{tpu_custom_call.1} parent=43 // pred_fallthru
          _
        %s324 = sand.u32 %s38, 1
        %s325 = scalar_lea.sflag [#allocation3], %s324
        %s326 = sand.u32 %s38, 1
        %s327 = smul.addr %s326, 8
        %s328 = scalar_lea.vmem [#allocation2], %s327
        %p329 = pneg %p51
        %p330 = pneg %p48
        %p331 = pneg %p72
        %p332 = pneg %p69
        %p333 = pneg %p93
        %p334 = pneg %p90
        %p335 = pneg %p114
        %p336 = pneg %p111
        %p337 = pneg %p135
        %p338 = pneg %p132
        %p339 = pneg %p156
        %p340 = pneg %p153
        %p341 = pneg %p182
        %p342 = pneg %p179
        %s343 = sand.u32 %s169, 1
        %s344 = scalar_lea.sflag [#allocation4], %s343
        %s345 = sand.u32 %s169, 1
        %s346 = smul.addr %s345, 8
        %s347 = scalar_lea.vmem [#allocation10], %s346
        %p348 = pneg %p208
        %p349 = pneg %p205
        %s350 = sand.u32 %s195, 1
        %s351 = scalar_lea.sflag [#allocation12], %s350
        %s352 = sand.u32 %s195, 1
        %s353 = scalar_lea.vmem [#allocation11], %s352
        %v355 = vld [vmem:[%s303] sm:$0xff]
        %vm356 = vcmask 261120
        %v357 = vsel %vm356, %v355, 0.0
        %358 = vadd.xlane.f32.xlu0 %v357
        %v359 = vpop.xlane.xlu0 %358
        %v360 = vrcp.pop 32.0
        %v361 = vmul.f32 32.0, %v360
        %v362 = vsub.f32 1.0, %v361
        %v363 = vmul.f32 %v360, %v362
        %v364 = vadd.f32 %v360, %v363
        %vm365 = vweird.f32 %v360
        %v366 = vsel %vm365, %v360, %v364
        %v367 = vmul.f32 %v359, %v366
        %v368 = vsub.f32 %v355, %v367
        %v369 = vmul.f32 %v368, %v368
        %v370 = vsel %vm356, %v369, 0.0
        %371 = vadd.xlane.f32.xlu0 %v370
        %v372 = vpop.xlane.xlu0 %371
        %v373 = vmul.f32 %v372, %v366
        %v374 = vadd.f32 %v373, 1e-05
        %v375 = vrsqrt.pop %v374
        %v376 = vmul.f32 %v375, %v374
        %v377 = vmul.f32 %v376, %v375
        %v378 = vmul.f32 0.5, %v377
        %v379 = vsub.f32 1.5, %v378
        %v380 = vmul.f32 %v375, %v379
        %vm381 = vweird.f32 %v374
        %vm382 = vweird.f32 %v375
        %vm383 = vmor %vm381, %vm382
        %v384 = vsel %vm383, %v375, %v380
        %v385 = vmul.f32 %v368, %v384
        %v386 = vld [vmem:[#allocation5] sm:$0x1]
        %v388 = vperm.slane %v386, 0
        %v390 = vmul.f32 %v385, %v388
        %v391 = vld [vmem:[%s2] sm:$0x1]
        %v393 = vperm.slane %v391, 0
        %v395 = vadd.f32 %v390, %v393
        %v396 = vpack.c.bf16 %v395, %v395
        %v397 = vld [vmem:[#allocation7] sm:$0xf]
        %v398 = vld [vmem:[#allocation7 + $0x4] sm:$0xf]
        %v399 = vld [vmem:[#allocation7 + $0x8] sm:$0xf]
        %v400 = vld [vmem:[#allocation7 + $0xc] sm:$0xf]
        %v405 = vunpack.c.l.b16 %v397
        %v406 = vunpack.c.l.b16 %v398
        %v407 = vunpack.c.l.b16 %v399
        %v408 = vunpack.c.l.b16 %v400
        %v409 = vpack.c.b16 %v406, %v405
        %v410 = vpack.c.b16 %v408, %v407
        %v414 = vsel %vm356, %v396, 0
        %416 = vmatpush.bf16.msra.mxu0 0
        %417 = vmatpush.bf16.msra.mxu0 0
        %418 = vmatpush.bf16.msra.mxu0 0
        %419 = vmatpush.bf16.msra.mxu0 0
        %420 = vmatpush.bf16.msra.mxu0 0
        %421 = vmatpush.bf16.msra.mxu0 0
        %422 = vmatpush.bf16.msra.mxu0 %v410
        %423 = vmatpush.bf16.msra.mxu0 %v409
        %424 = vmatmul.bf16.gmra.mxu0 %v414
        %v425 = vpop.f32.mrf.mxu0
        %v426 = vadd.f32 0.0, %v425
        %v427 = vpop.f32.mrf.mxu0
        %428 = vdwg.mxu0
        %430 = vrot.lane.b32.xlu0 %v426, 120
        %v431 = vpop.permute.xlu0 %430
        %433 = vrot.lane.b32.xlu0 %v426, 112
        %v434 = vpop.permute.xlu0 %433
        %436 = vrot.lane.b32.xlu0 %v426, 104
        %v437 = vpop.permute.xlu0 %436
        %439 = vrot.lane.b32.xlu0 %v426, 96
        %v440 = vpop.permute.xlu0 %439
        %442 = vrot.lane.b32.xlu0 %v426, 88
        %v443 = vpop.permute.xlu0 %442
        %445 = vrot.lane.b32.xlu0 %v426, 80
        %v446 = vpop.permute.xlu0 %445
        %448 = vrot.lane.b32.xlu0 %v426, 72
        %v449 = vpop.permute.xlu0 %448
        %451 = vrot.lane.b32.xlu0 %v426, 64
        %v452 = vpop.permute.xlu0 %451
        %454 = vrot.lane.b32.xlu0 %v426, 56
        %v455 = vpop.permute.xlu0 %454
        %457 = vrot.lane.b32.xlu0 %v426, 48
        %v458 = vpop.permute.xlu0 %457
        %460 = vrot.lane.b32.xlu0 %v426, 40
        %v461 = vpop.permute.xlu0 %460
        %v463 = vrot.slane %v434, 4
        %vm464 = vcmask 1047556
        %v465 = vsel %vm464, %v463, %v426
        %v466 = vrot.slane %v426, 4
        %v467 = vsel %vm464, %v434, %v466
        %v469 = vunpack.c.l.s4 1983009808
        %v470 = vunpack.c.0.s8 %v469
        %v471 = vperm.slane %v465, %v470
        %v473 = vunpack.c.l.s4 1983009808
        %v474 = vunpack.c.0.s8 %v473
        %v475 = vperm.slane %v467, %v474
        %v476 = vrot.slane %v437, 4
        %v477 = vsel %vm464, %v476, %v431
        %v478 = vrot.slane %v431, 4
        %v479 = vsel %vm464, %v437, %v478
        %v481 = vunpack.c.l.s4 1983009808
        %v482 = vunpack.c.0.s8 %v481
        %v483 = vperm.slane %v477, %v482
        %v485 = vunpack.c.l.s4 1983009808
        %v486 = vunpack.c.0.s8 %v485
        %v487 = vperm.slane %v479, %v486
        %v488 = vrot.slane %v446, 4
        %v489 = vsel %vm464, %v488, %v440
        %v490 = vrot.slane %v440, 4
        %v491 = vsel %vm464, %v446, %v490
        %v493 = vunpack.c.l.s4 1983009808
        %v494 = vunpack.c.0.s8 %v493
        %v495 = vperm.slane %v489, %v494
        %v497 = vunpack.c.l.s4 1983009808
        %v498 = vunpack.c.0.s8 %v497
        %v499 = vperm.slane %v491, %v498
        %v500 = vrot.slane %v449, 4
        %v501 = vsel %vm464, %v500, %v443
        %v502 = vrot.slane %v443, 4
        %v503 = vsel %vm464, %v449, %v502
        %v505 = vunpack.c.l.s4 1983009808
        %v506 = vunpack.c.0.s8 %v505
        %v507 = vperm.slane %v501, %v506
        %v509 = vunpack.c.l.s4 1983009808
        %v510 = vunpack.c.0.s8 %v509
        %v511 = vperm.slane %v503, %v510
        %v512 = vrot.slane %v483, 4
        %v513 = vsel %vm464, %v512, %v471
        %v514 = vrot.slane %v471, 4
        %v515 = vsel %vm464, %v483, %v514
        %v517 = vunpack.c.l.s4 1934713408
        %v518 = vunpack.c.0.s8 %v517
        %v519 = vperm.slane %v513, %v518
        %v521 = vunpack.c.l.s4 1934713408
        %v522 = vunpack.c.0.s8 %v521
        %v523 = vperm.slane %v515, %v522
        %v524 = vrot.slane %v487, 4
        %v525 = vsel %vm464, %v524, %v475
        %v526 = vrot.slane %v475, 4
        %v527 = vsel %vm464, %v487, %v526
        %v529 = vunpack.c.l.s4 1934713408
        %v530 = vunpack.c.0.s8 %v529
        %v531 = vperm.slane %v525, %v530
        %v533 = vunpack.c.l.s4 1934713408
        %v534 = vunpack.c.0.s8 %v533
        %v535 = vperm.slane %v527, %v534
        %v536 = vrot.slane %v507, 4
        %v537 = vsel %vm464, %v536, %v495
        %v538 = vrot.slane %v495, 4
        %v539 = vsel %vm464, %v507, %v538
        %v541 = vunpack.c.l.s4 1934713408
        %v542 = vunpack.c.0.s8 %v541
        %v543 = vperm.slane %v537, %v542
        %v545 = vunpack.c.l.s4 1934713408
        %v546 = vunpack.c.0.s8 %v545
        %v547 = vperm.slane %v539, %v546
        %v548 = vrot.slane %v511, 4
        %v549 = vsel %vm464, %v548, %v499
        %v550 = vrot.slane %v499, 4
        %v551 = vsel %vm464, %v511, %v550
        %v553 = vunpack.c.l.s4 1934713408
        %v554 = vunpack.c.0.s8 %v553
        %v555 = vperm.slane %v549, %v554
        %v557 = vunpack.c.l.s4 1934713408
        %v558 = vunpack.c.0.s8 %v557
        %v559 = vperm.slane %v551, %v558
        %v560 = vrot.slane %v543, 4
        %v561 = vsel %vm464, %v560, %v519
        %v562 = vrot.slane %v519, 4
        %v563 = vsel %vm464, %v543, %v562
        %v564 = vrot.slane %v547, 4
        %v565 = vsel %vm464, %v564, %v523
        %v566 = vrot.slane %v523, 4
        %v567 = vsel %vm464, %v547, %v566
        %v568 = vrot.slane %v555, 4
        %v569 = vsel %vm464, %v568, %v531
        %v570 = vrot.slane %v531, 4
        %v571 = vsel %vm464, %v555, %v570
        %v572 = vrot.slane %v559, 4
        %v573 = vsel %vm464, %v572, %v535
        %v574 = vrot.slane %v535, 4
        %v575 = vsel %vm464, %v559, %v574
        %v576 = vrot.slane %v458, 4
        %v577 = vsel %vm464, %v576, %v452
        %v578 = vrot.slane %v452, 4
        %v579 = vsel %vm464, %v458, %v578
        %v581 = vunpack.c.l.s4 1983009808
        %v582 = vunpack.c.0.s8 %v581
        %v583 = vperm.slane %v577, %v582
        %v585 = vunpack.c.l.s4 1983009808
        %v586 = vunpack.c.0.s8 %v585
        %v587 = vperm.slane %v579, %v586
        %v588 = vrot.slane %v461, 4
        %v589 = vsel %vm464, %v588, %v455
        %v590 = vrot.slane %v455, 4
        %v591 = vsel %vm464, %v461, %v590
        %v593 = vunpack.c.l.s4 1983009808
        %v594 = vunpack.c.0.s8 %v593
        %v595 = vperm.slane %v589, %v594
        %v597 = vunpack.c.l.s4 1983009808
        %v598 = vunpack.c.0.s8 %v597
        %v599 = vperm.slane %v591, %v598
        %v600 = vrot.slane %v595, 4
        %v601 = vsel %vm464, %v600, %v583
        %v602 = vrot.slane %v583, 4
        %v603 = vsel %vm464, %v595, %v602
        %v605 = vunpack.c.l.s4 1934713408
        %v606 = vunpack.c.0.s8 %v605
        %v607 = vperm.slane %v601, %v606
        %v609 = vunpack.c.l.s4 1934713408
        %v610 = vunpack.c.0.s8 %v609
        %v611 = vperm.slane %v603, %v610
        %v612 = vrot.slane %v599, 4
        %v613 = vsel %vm464, %v612, %v587
        %v614 = vrot.slane %v587, 4
        %v615 = vsel %vm464, %v599, %v614
        %v617 = vunpack.c.l.s4 1934713408
        %v618 = vunpack.c.0.s8 %v617
        %v619 = vperm.slane %v613, %v618
        %v621 = vunpack.c.l.s4 1934713408
        %v622 = vunpack.c.0.s8 %v621
        %v623 = vperm.slane %v615, %v622
        %v624 = vrot.slane %v607, 4
        %v625 = vsel %vm464, 0.0, %v624
        %v626 = vrot.slane %v611, 4
        %v627 = vsel %vm464, 0.0, %v626
        %v628 = vrot.slane %v619, 4
        %v629 = vsel %vm464, 0.0, %v628
        %v630 = vrot.slane %v623, 4
        %v631 = vsel %vm464, 0.0, %v630
        %v632 = vrot.slane %v565, 4
        %v633 = vsel %vm464, %v632, %v561
        %v634 = vrot.slane %v561, 4
        %v635 = vsel %vm464, %v565, %v634
        %v637 = vunpack.c.l.s4 1983009808
        %v638 = vunpack.c.0.s8 %v637
        %v639 = vperm.slane %v633, %v638
        %v641 = vunpack.c.l.s4 1983009808
        %v642 = vunpack.c.0.s8 %v641
        %v643 = vperm.slane %v635, %v642
        %v644 = vrot.slane %v567, 4
        %v645 = vsel %vm464, %v644, %v563
        %v646 = vrot.slane %v563, 4
        %v647 = vsel %vm464, %v567, %v646
        %v649 = vunpack.c.l.s4 1983009808
        %v650 = vunpack.c.0.s8 %v649
        %v651 = vperm.slane %v645, %v650
        %v653 = vunpack.c.l.s4 1983009808
        %v654 = vunpack.c.0.s8 %v653
        %v655 = vperm.slane %v647, %v654
        %v656 = vrot.slane %v573, 4
        %v657 = vsel %vm464, %v656, %v569
        %v658 = vrot.slane %v569, 4
        %v659 = vsel %vm464, %v573, %v658
        %v661 = vunpack.c.l.s4 1983009808
        %v662 = vunpack.c.0.s8 %v661
        %v663 = vperm.slane %v657, %v662
        %v665 = vunpack.c.l.s4 1983009808
        %v666 = vunpack.c.0.s8 %v665
        %v667 = vperm.slane %v659, %v666
        %v668 = vrot.slane %v575, 4
        %v669 = vsel %vm464, %v668, %v571
        %v670 = vrot.slane %v571, 4
        %v671 = vsel %vm464, %v575, %v670
        %v673 = vunpack.c.l.s4 1983009808
        %v674 = vunpack.c.0.s8 %v673
        %v675 = vperm.slane %v669, %v674
        %v677 = vunpack.c.l.s4 1983009808
        %v678 = vunpack.c.0.s8 %v677
        %v679 = vperm.slane %v671, %v678
        %v680 = vrot.slane %v651, 4
        %v681 = vsel %vm464, %v680, %v639
        %v682 = vrot.slane %v639, 4
        %v683 = vsel %vm464, %v651, %v682
        %v685 = vunpack.c.l.s4 1934713408
        %v686 = vunpack.c.0.s8 %v685
        %v687 = vperm.slane %v681, %v686
        %v689 = vunpack.c.l.s4 1934713408
        %v690 = vunpack.c.0.s8 %v689
        %v691 = vperm.slane %v683, %v690
        %v692 = vrot.slane %v655, 4
        %v693 = vsel %vm464, %v692, %v643
        %v694 = vrot.slane %v643, 4
        %v695 = vsel %vm464, %v655, %v694
        %v697 = vunpack.c.l.s4 1934713408
        %v698 = vunpack.c.0.s8 %v697
        %v699 = vperm.slane %v693, %v698
        %v701 = vunpack.c.l.s4 1934713408
        %v702 = vunpack.c.0.s8 %v701
        %v703 = vperm.slane %v695, %v702
        %v704 = vrot.slane %v675, 4
        %v705 = vsel %vm464, %v704, %v663
        %v706 = vrot.slane %v663, 4
        %v707 = vsel %vm464, %v675, %v706
        %v709 = vunpack.c.l.s4 1934713408
        %v710 = vunpack.c.0.s8 %v709
        %v711 = vperm.slane %v705, %v710
        %v713 = vunpack.c.l.s4 1934713408
        %v714 = vunpack.c.0.s8 %v713
        %v715 = vperm.slane %v707, %v714
        %v716 = vrot.slane %v679, 4
        %v717 = vsel %vm464, %v716, %v667
        %v718 = vrot.slane %v667, 4
        %v719 = vsel %vm464, %v679, %v718
        %v721 = vunpack.c.l.s4 1934713408
        %v722 = vunpack.c.0.s8 %v721
        %v723 = vperm.slane %v717, %v722
        %v725 = vunpack.c.l.s4 1934713408
        %v726 = vunpack.c.0.s8 %v725
        %v727 = vperm.slane %v719, %v726
        %v728 = vrot.slane %v711, 4
        %v729 = vsel %vm464, %v728, %v687
        %v730 = vrot.slane %v687, 4
        %v731 = vsel %vm464, %v711, %v730
        %v732 = vrot.slane %v715, 4
        %v733 = vsel %vm464, %v732, %v691
        %v734 = vrot.slane %v691, 4
        %v735 = vsel %vm464, %v715, %v734
        %v736 = vrot.slane %v723, 4
        %v737 = vsel %vm464, %v736, %v699
        %v738 = vrot.slane %v699, 4
        %v739 = vsel %vm464, %v723, %v738
        %v740 = vrot.slane %v727, 4
        %v741 = vsel %vm464, %v740, %v703
        %v742 = vrot.slane %v703, 4
        %v743 = vsel %vm464, %v727, %v742
        %v744 = vsel %vm464, %v626, %v607
        %v746 = vunpack.c.l.s4 1983009808
        %v747 = vunpack.c.0.s8 %v746
        %v748 = vperm.slane %v744, %v747
        %v749 = vrot.slane %v627, 4
        %v750 = vsel %vm464, %v749, %v625
        %v752 = vunpack.c.l.s4 1983009808
        %v753 = vunpack.c.0.s8 %v752
        %v754 = vperm.slane %v750, %v753
        %v755 = vsel %vm464, %v630, %v619
        %v757 = vunpack.c.l.s4 1983009808
        %v758 = vunpack.c.0.s8 %v757
        %v759 = vperm.slane %v755, %v758
        %v760 = vrot.slane %v631, 4
        %v761 = vsel %vm464, %v760, %v629
        %v763 = vunpack.c.l.s4 1983009808
        %v764 = vunpack.c.0.s8 %v763
        %v765 = vperm.slane %v761, %v764
        %v766 = vrot.slane %v754, 4
        %v767 = vsel %vm464, %v766, %v748
        %v768 = vrot.slane %v748, 4
        %v769 = vsel %vm464, %v754, %v768
        %v771 = vunpack.c.l.s4 1934713408
        %v772 = vunpack.c.0.s8 %v771
        %v773 = vperm.slane %v767, %v772
        %v775 = vunpack.c.l.s4 1934713408
        %v776 = vunpack.c.0.s8 %v775
        %v777 = vperm.slane %v769, %v776
        %v778 = vrot.slane %v765, 4
        %v779 = vsel %vm464, %v778, %v759
        %v780 = vrot.slane %v759, 4
        %v781 = vsel %vm464, %v765, %v780
        %v783 = vunpack.c.l.s4 1934713408
        %v784 = vunpack.c.0.s8 %v783
        %v785 = vperm.slane %v779, %v784
        %v787 = vunpack.c.l.s4 1934713408
        %v788 = vunpack.c.0.s8 %v787
        %v789 = vperm.slane %v781, %v788
        %v790 = vrot.slane %v785, 4
        %v791 = vsel %vm464, %v790, %v773
        %v792 = vrot.slane %v773, 4
        %v793 = vsel %vm464, %v785, %v792
        %v794 = vrot.slane %v789, 4
        %v795 = vsel %vm464, %v794, %v777
        %v796 = vrot.slane %v777, 4
        %v797 = vsel %vm464, %v789, %v796
        %v798 = vpack.c.bf16 %v729, %v729
        %v799 = vpack.c.bf16 %v731, %v731
        %v800 = vpack.c.bf16 %v733, %v733
        %v801 = vpack.c.bf16 %v735, %v735
        %v802 = vpack.c.bf16 %v737, %v737
        %v803 = vpack.c.bf16 %v739, %v739
        %v804 = vpack.c.bf16 %v741, %v741
        %v805 = vpack.c.bf16 %v743, %v743
        %v806 = vpack.c.bf16 %v791, %v791
        %v807 = vpack.c.bf16 %v793, %v793
        %v808 = vpack.c.bf16 %v795, %v795
        %v809 = vpack.c.bf16 %v797, %v797
        %vm810 = vcmask 64512
        %v812 = vsel %vm810, %v798, 0
        %v815 = vsel %vm810, %v802, 0
        %817 = vmatpush.bf16.xpose.msra.mxu0 0
        %818 = vmatpush.bf16.xpose.msra.mxu0 0
        %819 = vmatpush.bf16.xpose.msra.mxu0 0
        %820 = vmatpush.bf16.xpose.msra.mxu0 0
        %821 = vmatpush.bf16.xpose.msra.mxu0 0
        %822 = vmatpush.bf16.xpose.msra.mxu0 0
        %823 = vmatpush.bf16.xpose.msra.mxu0 0
        %824 = vmatpush.bf16.xpose.msra.mxu0 %v815
        %825 = vmatmul.bf16.gmra.mxu0 %v812
        %v826 = vpop.f32.mrf.mxu0
        %v827 = vadd.f32 0.0, %v826
        %v828 = vpop.f32.mrf.mxu0
        %829 = vdwg.mxu0
        %v831 = vsel %vm810, %v799, 0
        %v834 = vsel %vm810, %v803, 0
        %836 = vmatpush.bf16.xpose.msra.mxu0 0
        %837 = vmatpush.bf16.xpose.msra.mxu0 0
        %838 = vmatpush.bf16.xpose.msra.mxu0 0
        %839 = vmatpush.bf16.xpose.msra.mxu0 0
        %840 = vmatpush.bf16.xpose.msra.mxu0 0
        %841 = vmatpush.bf16.xpose.msra.mxu0 0
        %842 = vmatpush.bf16.xpose.msra.mxu0 0
        %843 = vmatpush.bf16.xpose.msra.mxu0 %v834
        %844 = vmatmul.bf16.gmra.mxu0 %v831
        %v845 = vpop.f32.mrf.mxu0
        %v846 = vadd.f32 0.0, %v845
        %v847 = vpop.f32.mrf.mxu0
        %848 = vdwg.mxu0
        %v850 = vsel %vm810, %v800, 0
        %v853 = vsel %vm810, %v804, 0
        %855 = vmatpush.bf16.xpose.msra.mxu0 0
        %856 = vmatpush.bf16.xpose.msra.mxu0 0
        %857 = vmatpush.bf16.xpose.msra.mxu0 0
        %858 = vmatpush.bf16.xpose.msra.mxu0 0
        %859 = vmatpush.bf16.xpose.msra.mxu0 0
        %860 = vmatpush.bf16.xpose.msra.mxu0 0
        %861 = vmatpush.bf16.xpose.msra.mxu0 0
        %862 = vmatpush.bf16.xpose.msra.mxu0 %v853
        %863 = vmatmul.bf16.gmra.mxu0 %v850
        %v864 = vpop.f32.mrf.mxu0
        %v865 = vadd.f32 0.0, %v864
        %v866 = vpop.f32.mrf.mxu0
        %867 = vdwg.mxu0
        %v869 = vsel %vm810, %v801, 0
        %v872 = vsel %vm810, %v805, 0
        %874 = vmatpush.bf16.xpose.msra.mxu0 0
        %875 = vmatpush.bf16.xpose.msra.mxu0 0
        %876 = vmatpush.bf16.xpose.msra.mxu0 0
        %877 = vmatpush.bf16.xpose.msra.mxu0 0
        %878 = vmatpush.bf16.xpose.msra.mxu0 0
        %879 = vmatpush.bf16.xpose.msra.mxu0 0
        %880 = vmatpush.bf16.xpose.msra.mxu0 0
        %881 = vmatpush.bf16.xpose.msra.mxu0 %v872
        %882 = vmatmul.bf16.gmra.mxu0 %v869
        %v883 = vpop.f32.mrf.mxu0
        %v884 = vadd.f32 0.0, %v883
        %v885 = vpop.f32.mrf.mxu0
        %886 = vdwg.mxu0
        %v887 = vsel %vm810, %v827, -inf
        %888 = vmax.xlane.f32.xlu0 %v887
        %v889 = vpop.xlane.xlu0 %888
        %v890 = vsel %vm810, %v846, -inf
        %891 = vmax.xlane.f32.xlu0 %v890
        %v892 = vpop.xlane.xlu0 %891
        %v893 = vsel %vm810, %v865, -inf
        %894 = vmax.xlane.f32.xlu0 %v893
        %v895 = vpop.xlane.xlu0 %894
        %v896 = vsel %vm810, %v884, -inf
        %897 = vmax.xlane.f32.xlu0 %v896
        %v898 = vpop.xlane.xlu0 %897
        %v899 = vsub.f32 %v827, %v889
        %v900 = vsub.f32 %v846, %v892
        %v901 = vsub.f32 %v865, %v895
        %v902 = vsub.f32 %v884, %v898
        %v903 = vmul.f32 %v899, 1.442695
        %v904 = vpow.pop %v903
        %v905 = vmul.f32 %v900, 1.442695
        %v906 = vpow.pop %v905
        %v907 = vmul.f32 %v901, 1.442695
        %v908 = vpow.pop %v907
        %v909 = vmul.f32 %v902, 1.442695
        %v910 = vpow.pop %v909
        %v915 = vrot.slane %v906, 7
        %vm916 = vcmask 1041409
        %v917 = vsel %vm916, %v915, %v904
        %v918 = vrot.slane %v908, 6
        %vm919 = vcmask 1042434
        %v920 = vsel %vm919, %v918, %v917
        %v921 = vrot.slane %v910, 5
        %vm922 = vcmask 1043459
        %v923 = vsel %vm922, %v921, %v920
        %vm925 = vcmask 60416
        %v926 = vsel %vm925, %v923, 0.0
        %927 = vadd.xlane.f32.xlu0 %v926
        %v928 = vpop.xlane.xlu0 %927
        %v930 = vrot.slane %v928, 1
        %v931 = vrot.slane %v928, 2
        %v932 = vrot.slane %v928, 3
        %v937 = vrcp.pop %v928
        %v938 = vmul.f32 %v928, %v937
        %v939 = vsub.f32 1.0, %v938
        %v940 = vmul.f32 %v937, %v939
        %v941 = vadd.f32 %v937, %v940
        %vm942 = vweird.f32 %v928
        %vm943 = vweird.f32 %v937
        %vm944 = vmor %vm942, %vm943
        %v945 = vsel %vm944, %v937, %v941
        %v946 = vand.u32 2147483647, %v928
        %vm947 = vcmp.eq.f32.partialorder %v946, 8.507059e+37
        %v948 = vand.u32 %v928, 2147483648
        %v949 = vor.u32 1.1754944e-38, %v948
        %v950 = vsel %vm947, %v949, %v945
        %v951 = vmul.f32 %v904, %v950
        %v952 = vrcp.pop %v930
        %v953 = vmul.f32 %v930, %v952
        %v954 = vsub.f32 1.0, %v953
        %v955 = vmul.f32 %v952, %v954
        %v956 = vadd.f32 %v952, %v955
        %vm957 = vweird.f32 %v930
        %vm958 = vweird.f32 %v952
        %vm959 = vmor %vm957, %vm958
        %v960 = vsel %vm959, %v952, %v956
        %v961 = vand.u32 2147483647, %v930
        %vm962 = vcmp.eq.f32.partialorder %v961, 8.507059e+37
        %v963 = vand.u32 %v930, 2147483648
        %v964 = vor.u32 1.1754944e-38, %v963
        %v965 = vsel %vm962, %v964, %v960
        %v966 = vmul.f32 %v906, %v965
        %v967 = vrcp.pop %v931
        %v968 = vmul.f32 %v931, %v967
        %v969 = vsub.f32 1.0, %v968
        %v970 = vmul.f32 %v967, %v969
        %v971 = vadd.f32 %v967, %v970
        %vm972 = vweird.f32 %v931
        %vm973 = vweird.f32 %v967
        %vm974 = vmor %vm972, %vm973
        %v975 = vsel %vm974, %v967, %v971
        %v976 = vand.u32 2147483647, %v931
        %vm977 = vcmp.eq.f32.partialorder %v976, 8.507059e+37
        %v978 = vand.u32 %v931, 2147483648
        %v979 = vor.u32 1.1754944e-38, %v978
        %v980 = vsel %vm977, %v979, %v975
        %v981 = vmul.f32 %v908, %v980
        %v982 = vrcp.pop %v932
        %v983 = vmul.f32 %v932, %v982
        %v984 = vsub.f32 1.0, %v983
        %v985 = vmul.f32 %v982, %v984
        %v986 = vadd.f32 %v982, %v985
        %vm987 = vweird.f32 %v932
        %vm988 = vweird.f32 %v982
        %vm989 = vmor %vm987, %vm988
        %v990 = vsel %vm989, %v982, %v986
        %v991 = vand.u32 2147483647, %v932
        %vm992 = vcmp.eq.f32.partialorder %v991, 8.507059e+37
        %v993 = vand.u32 %v932, 2147483648
        %v994 = vor.u32 1.1754944e-38, %v993
        %v995 = vsel %vm992, %v994, %v990
        %v996 = vmul.f32 %v910, %v995
        %v1001 = vrot.slane %v966, 7
        %v1002 = vsel %vm916, %v1001, %v951
        %v1003 = vrot.slane %v981, 6
        %v1004 = vsel %vm919, %v1003, %v1002
        %v1005 = vrot.slane %v996, 5
        %v1006 = vsel %vm922, %v1005, %v1004
        %v1008 = vsel %vm925, %v1006, 0.0
        %v1009 = vrot.slane %v1008, 4
        %v1010 = vadd.f32 %v1008, %v1009
        %v1011 = vrot.slane %v1010, 2
        %v1012 = vadd.f32 %v1010, %v1011
        %v1013 = vrot.slane %v1012, 1
        %v1014 = vadd.f32 %v1012, %v1013
        %v1015 = vrcp.pop 4.0
        %v1016 = vmul.f32 4.0, %v1015
        %v1017 = vsub.f32 1.0, %v1016
        %v1018 = vmul.f32 %v1015, %v1017
        %v1019 = vadd.f32 %v1015, %v1018
        %vm1020 = vweird.f32 %v1015
        %v1021 = vsel %vm1020, %v1015, %v1019
        %v1022 = vmul.f32 %v1014, %v1021
        %v1023 = vsel %vm810, %v1022, 0.0
        %1024 = vst [vmem:[%s353] sm:$0x1] %v1023
        %v1025 = vsel %vm810, %v904, 0.0
        %1026 = vadd.xlane.f32.xlu0 %v1025
        %v1027 = vpop.xlane.xlu0 %1026
        %v1028 = vsel %vm810, %v906, 0.0
        %1029 = vadd.xlane.f32.xlu0 %v1028
        %v1030 = vpop.xlane.xlu0 %1029
        %v1031 = vsel %vm810, %v908, 0.0
        %1032 = vadd.xlane.f32.xlu0 %v1031
        %v1033 = vpop.xlane.xlu0 %1032
        %v1034 = vsel %vm810, %v910, 0.0
        %1035 = vadd.xlane.f32.xlu0 %v1034
        %v1036 = vpop.xlane.xlu0 %1035
        %v1037 = vpack.c.bf16 %v904, %v904
        %v1038 = vpack.c.bf16 %v906, %v906
        %v1039 = vpack.c.bf16 %v908, %v908
        %v1040 = vpack.c.bf16 %v910, %v910
        %v1042 = vsel %vm810, %v1037, 0
        %vm1044 = vcmask 1043456
        %v1046 = vsel %vm1044, %v806, 0
        %1048 = vmatpush.bf16.msra.mxu0 0
        %1049 = vmatpush.bf16.msra.mxu0 0
        %1050 = vmatpush.bf16.msra.mxu0 0
        %1051 = vmatpush.bf16.msra.mxu0 0
        %1052 = vmatpush.bf16.msra.mxu0 0
        %1053 = vmatpush.bf16.msra.mxu0 0
        %1054 = vmatpush.bf16.msra.mxu0 0
        %1055 = vmatpush.bf16.msra.mxu0 %v1046
        %1056 = vmatmul.bf16.gmra.mxu0 %v1042
        %v1057 = vpop.f32.mrf.mxu0
        %v1058 = vadd.f32 0.0, %v1057
        %v1059 = vpop.f32.mrf.mxu0
        %1060 = vdwg.mxu0
        %v1062 = vsel %vm810, %v1038, 0
        %v1065 = vsel %vm1044, %v807, 0
        %1067 = vmatpush.bf16.msra.mxu0 0
        %1068 = vmatpush.bf16.msra.mxu0 0
        %1069 = vmatpush.bf16.msra.mxu0 0
        %1070 = vmatpush.bf16.msra.mxu0 0
        %1071 = vmatpush.bf16.msra.mxu0 0
        %1072 = vmatpush.bf16.msra.mxu0 0
        %1073 = vmatpush.bf16.msra.mxu0 0
        %1074 = vmatpush.bf16.msra.mxu0 %v1065
        %1075 = vmatmul.bf16.gmra.mxu0 %v1062
        %v1076 = vpop.f32.mrf.mxu0
        %v1077 = vadd.f32 0.0, %v1076
        %v1078 = vpop.f32.mrf.mxu0
        %1079 = vdwg.mxu0
        %v1081 = vsel %vm810, %v1039, 0
        %v1084 = vsel %vm1044, %v808, 0
        %1086 = vmatpush.bf16.msra.mxu0 0
        %1087 = vmatpush.bf16.msra.mxu0 0
        %1088 = vmatpush.bf16.msra.mxu0 0
        %1089 = vmatpush.bf16.msra.mxu0 0
        %1090 = vmatpush.bf16.msra.mxu0 0
        %1091 = vmatpush.bf16.msra.mxu0 0
        %1092 = vmatpush.bf16.msra.mxu0 0
        %1093 = vmatpush.bf16.msra.mxu0 %v1084
        %1094 = vmatmul.bf16.gmra.mxu0 %v1081
        %v1095 = vpop.f32.mrf.mxu0
        %v1096 = vadd.f32 0.0, %v1095
        %v1097 = vpop.f32.mrf.mxu0
        %1098 = vdwg.mxu0
        %v1100 = vsel %vm810, %v1040, 0
        %v1103 = vsel %vm1044, %v809, 0
        %1105 = vmatpush.bf16.msra.mxu0 0
        %1106 = vmatpush.bf16.msra.mxu0 0
        %1107 = vmatpush.bf16.msra.mxu0 0
        %1108 = vmatpush.bf16.msra.mxu0 0
        %1109 = vmatpush.bf16.msra.mxu0 0
        %1110 = vmatpush.bf16.msra.mxu0 0
        %1111 = vmatpush.bf16.msra.mxu0 0
        %1112 = vmatpush.bf16.msra.mxu0 %v1103
        %1113 = vmatmul.bf16.gmra.mxu0 %v1100
        %v1114 = vpop.f32.mrf.mxu0
        %v1115 = vadd.f32 0.0, %v1114
        %v1116 = vpop.f32.mrf.mxu0
        %1117 = vdwg.mxu0
        %v1118 = vrcp.pop %v1027
        %v1119 = vmul.f32 %v1027, %v1118
        %v1120 = vsub.f32 1.0, %v1119
        %v1121 = vmul.f32 %v1118, %v1120
        %v1122 = vadd.f32 %v1118, %v1121
        %vm1123 = vweird.f32 %v1027
        %vm1124 = vweird.f32 %v1118
        %vm1125 = vmor %vm1123, %vm1124
        %v1126 = vsel %vm1125, %v1118, %v1122
        %v1127 = vand.u32 2147483647, %v1027
        %vm1128 = vcmp.eq.f32.partialorder %v1127, 8.507059e+37
        %v1129 = vand.u32 %v1027, 2147483648
        %v1130 = vor.u32 1.1754944e-38, %v1129
        %v1131 = vsel %vm1128, %v1130, %v1126
        %v1132 = vrcp.pop %v1030
        %v1133 = vmul.f32 %v1030, %v1132
        %v1134 = vsub.f32 1.0, %v1133
        %v1135 = vmul.f32 %v1132, %v1134
        %v1136 = vadd.f32 %v1132, %v1135
        %vm1137 = vweird.f32 %v1030
        %vm1138 = vweird.f32 %v1132
        %vm1139 = vmor %vm1137, %vm1138
        %v1140 = vsel %vm1139, %v1132, %v1136
        %v1141 = vand.u32 2147483647, %v1030
        %vm1142 = vcmp.eq.f32.partialorder %v1141, 8.507059e+37
        %v1143 = vand.u32 %v1030, 2147483648
        %v1144 = vor.u32 1.1754944e-38, %v1143
        %v1145 = vsel %vm1142, %v1144, %v1140
        %v1146 = vrcp.pop %v1033
        %v1147 = vmul.f32 %v1033, %v1146
        %v1148 = vsub.f32 1.0, %v1147
        %v1149 = vmul.f32 %v1146, %v1148
        %v1150 = vadd.f32 %v1146, %v1149
        %vm1151 = vweird.f32 %v1033
        %vm1152 = vweird.f32 %v1146
        %vm1153 = vmor %vm1151, %vm1152
        %v1154 = vsel %vm1153, %v1146, %v1150
        %v1155 = vand.u32 2147483647, %v1033
        %vm1156 = vcmp.eq.f32.partialorder %v1155, 8.507059e+37
        %v1157 = vand.u32 %v1033, 2147483648
        %v1158 = vor.u32 1.1754944e-38, %v1157
        %v1159 = vsel %vm1156, %v1158, %v1154
        %v1160 = vrcp.pop %v1036
        %v1161 = vmul.f32 %v1036, %v1160
        %v1162 = vsub.f32 1.0, %v1161
        %v1163 = vmul.f32 %v1160, %v1162
        %v1164 = vadd.f32 %v1160, %v1163
        %vm1165 = vweird.f32 %v1036
        %vm1166 = vweird.f32 %v1160
        %vm1167 = vmor %vm1165, %vm1166
        %v1168 = vsel %vm1167, %v1160, %v1164
        %v1169 = vand.u32 2147483647, %v1036
        %vm1170 = vcmp.eq.f32.partialorder %v1169, 8.507059e+37
        %v1171 = vand.u32 %v1036, 2147483648
        %v1172 = vor.u32 1.1754944e-38, %v1171
        %v1173 = vsel %vm1170, %v1172, %v1168
        %v1174 = vmul.f32 %v1058, %v1131
        %v1175 = vmul.f32 %v1077, %v1145
        %v1176 = vmul.f32 %v1096, %v1159
        %v1177 = vmul.f32 %v1115, %v1173
        %v1178 = vrot.slane %v1176, 4
        %v1179 = vsel %vm464, %v1178, %v1174
        %v1180 = vrot.slane %v1174, 4
        %v1181 = vsel %vm464, %v1176, %v1180
        %v1183 = vunpack.c.l.s4 1983009808
        %v1184 = vunpack.c.0.s8 %v1183
        %v1185 = vperm.slane %v1179, %v1184
        %v1187 = vunpack.c.l.s4 1983009808
        %v1188 = vunpack.c.0.s8 %v1187
        %v1189 = vperm.slane %v1181, %v1188
        %v1190 = vrot.slane %v1177, 4
        %v1191 = vsel %vm464, %v1190, %v1175
        %v1192 = vrot.slane %v1175, 4
        %v1193 = vsel %vm464, %v1177, %v1192
        %v1195 = vunpack.c.l.s4 1983009808
        %v1196 = vunpack.c.0.s8 %v1195
        %v1197 = vperm.slane %v1191, %v1196
        %v1199 = vunpack.c.l.s4 1983009808
        %v1200 = vunpack.c.0.s8 %v1199
        %v1201 = vperm.slane %v1193, %v1200
        %v1202 = vrot.slane %v1197, 4
        %v1203 = vsel %vm464, %v1202, %v1185
        %v1204 = vrot.slane %v1185, 4
        %v1205 = vsel %vm464, %v1197, %v1204
        %v1207 = vunpack.c.l.s4 1934713408
        %v1208 = vunpack.c.0.s8 %v1207
        %v1209 = vperm.slane %v1203, %v1208
        %v1211 = vunpack.c.l.s4 1934713408
        %v1212 = vunpack.c.0.s8 %v1211
        %v1213 = vperm.slane %v1205, %v1212
        %v1214 = vrot.slane %v1201, 4
        %v1215 = vsel %vm464, %v1214, %v1189
        %v1216 = vrot.slane %v1189, 4
        %v1217 = vsel %vm464, %v1201, %v1216
        %v1219 = vunpack.c.l.s4 1934713408
        %v1220 = vunpack.c.0.s8 %v1219
        %v1221 = vperm.slane %v1215, %v1220
        %v1223 = vunpack.c.l.s4 1934713408
        %v1224 = vunpack.c.0.s8 %v1223
        %v1225 = vperm.slane %v1217, %v1224
        %v1226 = vrot.slane %v1209, 4
        %v1227 = vsel %vm464, 0.0, %v1226
        %v1228 = vrot.slane %v1213, 4
        %v1229 = vsel %vm464, 0.0, %v1228
        %v1230 = vrot.slane %v1221, 4
        %v1231 = vsel %vm464, 0.0, %v1230
        %v1232 = vrot.slane %v1225, 4
        %v1233 = vsel %vm464, 0.0, %v1232
        %v1234 = vsel %vm464, %v1228, %v1209
        %v1236 = vunpack.c.l.s4 1983009808
        %v1237 = vunpack.c.0.s8 %v1236
        %v1238 = vperm.slane %v1234, %v1237
        %v1239 = vrot.slane %v1229, 4
        %v1240 = vsel %vm464, %v1239, %v1227
        %v1242 = vunpack.c.l.s4 1983009808
        %v1243 = vunpack.c.0.s8 %v1242
        %v1244 = vperm.slane %v1240, %v1243
        %v1245 = vsel %vm464, %v1232, %v1221
        %v1247 = vunpack.c.l.s4 1983009808
        %v1248 = vunpack.c.0.s8 %v1247
        %v1249 = vperm.slane %v1245, %v1248
        %v1250 = vrot.slane %v1233, 4
        %v1251 = vsel %vm464, %v1250, %v1231
        %v1253 = vunpack.c.l.s4 1983009808
        %v1254 = vunpack.c.0.s8 %v1253
        %v1255 = vperm.slane %v1251, %v1254
        %v1256 = vrot.slane %v1244, 4
        %v1257 = vsel %vm464, %v1256, %v1238
        %v1258 = vrot.slane %v1238, 4
        %v1259 = vsel %vm464, %v1244, %v1258
        %v1261 = vunpack.c.l.s4 1934713408
        %v1262 = vunpack.c.0.s8 %v1261
        %v1263 = vperm.slane %v1257, %v1262
        %v1265 = vunpack.c.l.s4 1934713408
        %v1266 = vunpack.c.0.s8 %v1265
        %v1267 = vperm.slane %v1259, %v1266
        %v1268 = vrot.slane %v1255, 4
        %v1269 = vsel %vm464, %v1268, %v1249
        %v1270 = vrot.slane %v1249, 4
        %v1271 = vsel %vm464, %v1255, %v1270
        %v1273 = vunpack.c.l.s4 1934713408
        %v1274 = vunpack.c.0.s8 %v1273
        %v1275 = vperm.slane %v1269, %v1274
        %v1277 = vunpack.c.l.s4 1934713408
        %v1278 = vunpack.c.0.s8 %v1277
        %v1279 = vperm.slane %v1271, %v1278
        %v1280 = vrot.slane %v1275, 4
        %v1281 = vsel %vm464, %v1280, %v1263
        %v1282 = vrot.slane %v1263, 4
        %v1283 = vsel %vm464, %v1275, %v1282
        %v1284 = vrot.slane %v1279, 4
        %v1285 = vsel %vm464, %v1284, %v1267
        %v1286 = vrot.slane %v1267, 4
        %v1287 = vsel %vm464, %v1279, %v1286
        %1289 = vrot.lane.b32.xlu0 %v1283, 8
        %v1290 = vpop.permute.xlu0 %1289
        %1293 = vrot.lane.b32.xlu0 %v1285, 16
        %v1294 = vpop.permute.xlu0 %1293
        %1297 = vrot.lane.b32.xlu0 %v1287, 24
        %v1298 = vpop.permute.xlu0 %1297
        %v1300 = vsel %vm810, %v1281, %v1290
        %vm1301 = vcmask 130048
        %v1302 = vsel %vm1301, %v1300, %v1294
        %vm1303 = vcmask 195584
        %v1304 = vsel %vm1303, %v1302, %v1298
        %v1305 = vpack.c.bf16 %v1304, %v1304
        %v1306 = vld [vmem:[#allocation8] sm:$0xf]
        %v1307 = vld [vmem:[#allocation8 + $0x4] sm:$0xf]
        %v1308 = vld [vmem:[#allocation8 + $0x8] sm:$0xf]
        %v1309 = vld [vmem:[#allocation8 + $0xc] sm:$0xf]
        %v1310 = vld [vmem:[%s5] sm:$0x1]
        %v1312 = vperm.slane %v1310, 0
        %v1318 = vunpack.c.l.b16 %v1306
        %v1319 = vunpack.c.l.b16 %v1307
        %v1320 = vunpack.c.l.b16 %v1308
        %v1321 = vunpack.c.l.b16 %v1309
        %v1322 = vpack.c.b16 %v1319, %v1318
        %v1323 = vpack.c.b16 %v1321, %v1320
        %v1327 = vsel %vm356, %v1305, 0
        %1329 = vmatpush.bf16.msra.mxu0 0
        %1330 = vmatpush.bf16.msra.mxu0 0
        %1331 = vmatpush.bf16.msra.mxu0 0
        %1332 = vmatpush.bf16.msra.mxu0 0
        %1333 = vmatpush.bf16.msra.mxu0 0
        %1334 = vmatpush.bf16.msra.mxu0 0
        %1335 = vmatpush.bf16.msra.mxu0 %v1323
        %1336 = vmatpush.bf16.msra.mxu0 %v1322
        %1337 = vmatmul.bf16.gmra.mxu0 %v1327
        %v1338 = vpop.f32.mrf.mxu0
        %v1339 = vadd.f32 %v1312, %v1338
        %v1340 = vpop.f32.mrf.mxu0
        %1341 = vdwg.mxu0
        %v1342 = vadd.f32 %v355, %v1339
        %1343 = vst.msk [vmem:[%s347] sm:$0xff] %vm356, %v1342
        %s1344 = sand.u32 %s169, 1
        %s1345 = scalar_lea.sflag [#allocation4], %s1344
        %s1346 = sand.u32 %s169, 1
        %s1347 = smul.addr %s1346, 8
        %s1348 = scalar_lea.vmem [#allocation10], %s1347
        %s1349 = sand.u32 %s195, 1
        %s1350 = scalar_lea.sflag [#allocation12], %s1349
        %s1351 = sand.u32 %s195, 1
        %s1352 = scalar_lea.vmem [#allocation11], %s1351
        // Predicated region
        $region61: #{tpu_custom_call.1} parent=43 // pred_check
          %p1353 = pneg %p179
        $region62: #{tpu_custom_call.1} parent=43 // pred_check_branch
          %1355 = sbr.rel (%p1353) target = $region64
        $region63: #{tpu_custom_call.1} parent=43 // pred_region
          %1357 = vsyncadd %s1345, 0
          %s1358 = smul.addr %s30, 8
          %s1359 = scalar_lea.hbm %s6, %s1358
          %s1361 = sshll.u32 %s1348, 4
          %s1362 = int_to_ptr.vmem [resolvable:$true] %s1361
          %s1363 = sshll.u32 %s1359, 4
          %s1364 = int_to_ptr.hbm [resolvable:$true] %s1363
          %1366 = dma.vmem_to_hbm [thread:$0]  %s1362, 128, %s1364, %s1345
        $region64: #{tpu_custom_call.1} parent=43 // pred_fallthru
          _
        // Predicated region
        $region65: #{tpu_custom_call.1} parent=43 // pred_check
          %p1367 = pneg %p205
        $region66: #{tpu_custom_call.1} parent=43 // pred_check_branch
          %1369 = sbr.rel (%p1367) target = $region68
        $region67: #{tpu_custom_call.1} parent=43 // pred_region
          %1371 = vsyncadd %s1350, 0
          %s1372 = scalar_lea.hbm %s7, %s30
          %s1374 = sshll.u32 %s1352, 4
          %s1375 = int_to_ptr.vmem [resolvable:$true] %s1374
          %s1376 = sshll.u32 %s1372, 4
          %s1377 = int_to_ptr.hbm [resolvable:$true] %s1376
          %1379 = dma.vmem_to_hbm [thread:$0]  %s1375, 16, %s1377, %s1350
        $region68: #{tpu_custom_call.1} parent=43 // pred_fallthru
          _
      $region44: #{tpu_custom_call.1} parent=5 // pred_fallthru
        _
      %p1380 = scmp.le.s32.totalorder 2, %s25
      // Predicated region
      $region69: #{tpu_custom_call.1} parent=5 // pred_check
        %p1381 = pneg %p1380
      $region70: #{tpu_custom_call.1} parent=5 // pred_check_branch
        %1383 = sbr.rel (%p1381) target = $region72
      $region71: #{tpu_custom_call.1} parent=5 // pred_region
        %s1384 = ssub.s32 %s25, 2
        // Predicated region
        $region73: #{tpu_custom_call.1} parent=71 // pred_check
          %p1385 = pneg %p185
        $region74: #{tpu_custom_call.1} parent=71 // pred_check_branch
          %1387 = sbr.rel (%p1385) target = $region76
        $region75: #{tpu_custom_call.1} parent=71 // pred_region
          %s1388 = sand.u32 %s170, 1
          %s1389 = scalar_lea.sflag [#allocation4], %s1388
          %s1390 = sand.u32 %s170, 1
          %s1391 = smul.addr %s1390, 8
          %s1392 = scalar_lea.vmem [#allocation10], %s1391
          %1394 = dma.done %s1389, 128
        $region76: #{tpu_custom_call.1} parent=71 // pred_fallthru
          _
        // Predicated region
        $region77: #{tpu_custom_call.1} parent=71 // pred_check
          %p1395 = pneg %p211
        $region78: #{tpu_custom_call.1} parent=71 // pred_check_branch
          %1397 = sbr.rel (%p1395) target = $region80
        $region79: #{tpu_custom_call.1} parent=71 // pred_region
          %s1398 = sand.u32 %s196, 1
          %s1399 = scalar_lea.sflag [#allocation12], %s1398
          %s1400 = sand.u32 %s196, 1
          %s1401 = scalar_lea.vmem [#allocation11], %s1400
          %1403 = dma.done %s1399, 16
        $region80: #{tpu_custom_call.1} parent=71 // pred_fallthru
          _
      $region72: #{tpu_custom_call.1} parent=5 // pred_fallthru
        _
    $region6: #{tpu_custom_call.1} parent=1 // loop_footer
      %s29 = sadd.s32 1, %s25
    $region7: #{tpu_custom_call.1} parent=1 // loop_footer_branch
      %24 = sbr.rel target = $region3
    $region8: #{tpu_custom_call.1} parent=1 // loop_exit
      _
    %1404 = vsyncpa [#allocation3], 1
    %s1405 = scalar_lea.sflag [#allocation3], 1
    %1406 = vsyncpa %s1405, 1
    %1407 = vsyncpa [#allocation6], 1
    %1408 = vsyncpa [#allocation9], 1
    %1409 = vsyncpa [#allocation4], 1
    %s1410 = scalar_lea.sflag [#allocation4], 1
    %1411 = vsyncpa %s1410, 1
    %1412 = vsyncpa [#allocation12], 1
    %s1413 = scalar_lea.sflag [#allocation12], 1
    %1414 = vsyncpa %s1413, 1

// kernel: tpu_custom_call.1
$region0: #{tpu_custom_call.1}
  #allocation0 [shape = 'u32[]', space=smem, size = 0x4, offset = 0x4, fixed_abs, tag = 'smem constant byte address 0x4 - core index']
  #allocation1 [shape = 'u32[72,128]{1,0:T(1,128)}', space=vmem, size = 0x9000, scoped, tag = 'internal scratch']
  %s0 = inlined_call_operand.hbm [shape: f32[2,8,32], index: 0, kind: input, shape index: {}]
  %s1 = inlined_call_operand.hbm [shape: f32[1,32], index: 1, kind: input, shape index: {}]
  %s2 = inlined_call_operand.vmem [shape: f32[1,32], index: 2, kind: input, shape index: {}]
  %s3 = inlined_call_operand.hbm [shape: bf16[32,96], index: 3, kind: input, shape index: {}]
  %s4 = inlined_call_operand.hbm [shape: bf16[32,32], index: 4, kind: input, shape index: {}]
  %s5 = inlined_call_operand.vmem [shape: f32[1,32], index: 5, kind: input, shape index: {}]
  %s6 = inlined_call_operand.hbm [shape: f32[2,8,32], index: 6, kind: output, shape index: {0}]
  %s7 = inlined_call_operand.hbm [shape: f32[2,1,128], index: 7, kind: output, shape index: {1}]
  %8 = xla_tuple %s6, %s7
  %s9 = sld [smem:[#allocation0]]
  $region81: #{tpu_custom_call.1} parent=0
    _
  %s11 = ssub.s32 1, %s9
  %s12 = scalar_select 0, %s11, %s9
  $region1: #{tpu_custom_call.1} parent=0
    #allocation2 [shape = 'u8[8192]{0}', space=vmem, size = 0x2000, scoped, tag = 'input window, operand 0']
    #allocation3 [shape = 's32[2]{0}', space=sflag, size = 0x8, scoped, tag = 'scoped memory for tpu_custom_call.1']
    #allocation4 [shape = 's32[2]{0}', space=sflag, size = 0x8, scoped, tag = 'scoped memory for tpu_custom_call.1']
    #allocation5 [shape = 'u8[512]{0}', space=vmem, size = 0x400, scoped, tag = 'input window, operand 1, single buffered']
    #allocation6 [shape = 's32[1]{0}', space=sflag, size = 0x4, scoped, tag = 'scoped memory for tpu_custom_call.1']
    #allocation7 [shape = 'u8[8192]{0}', space=vmem, size = 0x2000, scoped, tag = 'input window, operand 3, single buffered']
    #allocation8 [shape = 'u8[8192]{0}', space=vmem, size = 0x2000, scoped, tag = 'input window, operand 4, single buffered']
    #allocation9 [shape = 's32[1]{0}', space=sflag, size = 0x4, scoped, tag = 'scoped memory for tpu_custom_call.1']
    #allocation10 [shape = 'u8[8192]{0}', space=vmem, size = 0x2000, scoped, tag = 'output window, operand 0']
    #allocation11 [shape = 'u8[1024]{0}', space=vmem, size = 0x400, scoped, tag = 'output window, operand 1']
    #allocation12 [shape = 's32[2]{0}', space=sflag, size = 0x8, scoped, tag = 'scoped memory for tpu_custom_call.1']
    %13 = vsyncpa [#allocation3], 0
    %s14 = scalar_lea.sflag [#allocation3], 1
    %15 = vsyncpa %s14, 0
    %16 = vsyncpa [#allocation6], 0
    %17 = vsyncpa [#allocation9], 0
    %18 = vsyncpa [#allocation4], 0
    %s19 = scalar_lea.sflag [#allocation4], 1
    %20 = vsyncpa %s19, 0
    %21 = vsyncpa [#allocation12], 0
    %s22 = scalar_lea.sflag [#allocation12], 1
    %23 = vsyncpa %s22, 0
    loop: start=0, step=1, limit=4
    $region2: #{tpu_custom_call.1} parent=1 // loop_pre_header
      _
    $region3: #{tpu_custom_call.1} parent=1 // loop_header
      %s25 = sphi 0, %s29
      %p26 = scmp.ge.s32.totalorder %s25, 4
      %s35 = sphi 0, %s37
      %s38 = sphi 0, %s35
      %s39 = sphi 0, %s38
      %s55 = sphi 0, %s39
      %s59 = sphi 0, %s59
      %s61 = sphi 0, %s59
      %s62 = sphi 0, %s61
      %s76 = sphi 0, %s62
      %s80 = sphi 0, %s80
      %s82 = sphi 0, %s80
      %s83 = sphi 0, %s82
      %s97 = sphi 0, %s83
      %s101 = sphi 0, %s101
      %s103 = sphi 0, %s101
      %s104 = sphi 0, %s103
      %s118 = sphi 0, %s104
      %s122 = sphi 0, %s122
      %s124 = sphi 0, %s122
      %s125 = sphi 0, %s124
      %s139 = sphi 0, %s125
      %s143 = sphi 0, %s143
      %s145 = sphi 0, %s143
      %s146 = sphi 0, %s145
      %s160 = sphi 0, %s146
      %s166 = sphi 0, %s168
      %s169 = sphi 0, %s166
      %s170 = sphi 0, %s169
      %s186 = sphi 0, %s170
      %s192 = sphi 0, %s194
      %s195 = sphi 0, %s192
      %s196 = sphi 0, %s195
      %s212 = sphi 0, %s196
    $region4: #{tpu_custom_call.1} parent=1 // loop_header_branch
      %28 = sbr.rel (%p26) target = $region8
    $region5: #{tpu_custom_call.1} parent=1 // loop_body
      %s30 = ssub.s32 %s25, 1
      %s31 = ssub.s32 %s25, 2
      %s32 = sadd.s32 %s25, 1
      %s33 = ssub.s32 %s25, %s32
      %p34 = scmp.eq.s32.totalorder %s33, 0
      %s36 = sadd.s32 %s35, 1
      %s37 = scalar_select %p34, %s35, %s36
      %p40 = pneg %p34
      %p41 = scmp.eq.s32.totalorder %s25, 1
      %p42 = por %p40, %p41
      %p43 = scmp.ne.s32.totalorder %s35, %s38
      %p44 = scmp.eq.s32.totalorder %s25, 0
      %p45 = por %p43, %p44
      %p46 = scmp.ne.s32.totalorder %s35, %s38
      %p47 = scmp.eq.s32.totalorder %s30, 1
      %p48 = por %p46, %p47
      %p49 = scmp.ne.s32.totalorder %s38, %s39
      %p50 = scmp.eq.s32.totalorder %s30, 0
      %p51 = por %p49, %p50
      %p52 = scmp.ne.s32.totalorder %s38, %s39
      %p53 = scmp.eq.s32.totalorder %s31, 1
      %p54 = por %p52, %p53
      %p56 = scmp.ne.s32.totalorder %s39, %s55
      %p57 = scmp.eq.s32.totalorder %s31, 0
      %p58 = por %p56, %p57
      %s60 = sadd.s32 %s59, 1
      %p63 = scmp.eq.s32.totalorder %s25, 1
      %p64 = scmp.ne.s32.totalorder %s59, %s61
      %p65 = scmp.eq.s32.totalorder %s25, 0
      %p66 = por %p64, %p65
      %p67 = scmp.ne.s32.totalorder %s59, %s61
      %p68 = scmp.eq.s32.totalorder %s30, 1
      %p69 = por %p67, %p68
      %p70 = scmp.ne.s32.totalorder %s61, %s62
      %p71 = scmp.eq.s32.totalorder %s30, 0
      %p72 = por %p70, %p71
      %p73 = scmp.ne.s32.totalorder %s61, %s62
      %p74 = scmp.eq.s32.totalorder %s31, 1
      %p75 = por %p73, %p74
      %p77 = scmp.ne.s32.totalorder %s62, %s76
      %p78 = scmp.eq.s32.totalorder %s31, 0
      %p79 = por %p77, %p78
      %s81 = sadd.s32 %s80, 1
      %p84 = scmp.eq.s32.totalorder %s25, 1
      %p85 = scmp.ne.s32.totalorder %s80, %s82
      %p86 = scmp.eq.s32.totalorder %s25, 0
      %p87 = por %p85, %p86
      %p88 = scmp.ne.s32.totalorder %s80, %s82
      %p89 = scmp.eq.s32.totalorder %s30, 1
      %p90 = por %p88, %p89
      %p91 = scmp.ne.s32.totalorder %s82, %s83
      %p92 = scmp.eq.s32.totalorder %s30, 0
      %p93 = por %p91, %p92
      %p94 = scmp.ne.s32.totalorder %s82, %s83
      %p95 = scmp.eq.s32.totalorder %s31, 1
      %p96 = por %p94, %p95
      %p98 = scmp.ne.s32.totalorder %s83, %s97
      %p99 = scmp.eq.s32.totalorder %s31, 0
      %p100 = por %p98, %p99
      %s102 = sadd.s32 %s101, 1
      %p105 = scmp.eq.s32.totalorder %s25, 1
      %p106 = scmp.ne.s32.totalorder %s101, %s103
      %p107 = scmp.eq.s32.totalorder %s25, 0
      %p108 = por %p106, %p107
      %p109 = scmp.ne.s32.totalorder %s101, %s103
      %p110 = scmp.eq.s32.totalorder %s30, 1
      %p111 = por %p109, %p110
      %p112 = scmp.ne.s32.totalorder %s103, %s104
      %p113 = scmp.eq.s32.totalorder %s30, 0
      %p114 = por %p112, %p113
      %p115 = scmp.ne.s32.totalorder %s103, %s104
      %p116 = scmp.eq.s32.totalorder %s31, 1
      %p117 = por %p115, %p116
      %p119 = scmp.ne.s32.totalorder %s104, %s118
      %p120 = scmp.eq.s32.totalorder %s31, 0
      %p121 = por %p119, %p120
      %s123 = sadd.s32 %s122, 1
      %p126 = scmp.eq.s32.totalorder %s25, 1
      %p127 = scmp.ne.s32.totalorder %s122, %s124
      %p128 = scmp.eq.s32.totalorder %s25, 0
      %p129 = por %p127, %p128
      %p130 = scmp.ne.s32.totalorder %s122, %s124
      %p131 = scmp.eq.s32.totalorder %s30, 1
      %p132 = por %p130, %p131
      %p133 = scmp.ne.s32.totalorder %s124, %s125
      %p134 = scmp.eq.s32.totalorder %s30, 0
      %p135 = por %p133, %p134
      %p136 = scmp.ne.s32.totalorder %s124, %s125
      %p137 = scmp.eq.s32.totalorder %s31, 1
      %p138 = por %p136, %p137
      %p140 = scmp.ne.s32.totalorder %s125, %s139
      %p141 = scmp.eq.s32.totalorder %s31, 0
      %p142 = por %p140, %p141
      %s144 = sadd.s32 %s143, 1
      %p147 = scmp.eq.s32.totalorder %s25, 1
      %p148 = scmp.ne.s32.totalorder %s143, %s145
      %p149 = scmp.eq.s32.totalorder %s25, 0
      %p150 = por %p148, %p149
      %p151 = scmp.ne.s32.totalorder %s143, %s145
      %p152 = scmp.eq.s32.totalorder %s30, 1
      %p153 = por %p151, %p152
      %p154 = scmp.ne.s32.totalorder %s145, %s146
      %p155 = scmp.eq.s32.totalorder %s30, 0
      %p156 = por %p154, %p155
      %p157 = scmp.ne.s32.totalorder %s145, %s146
      %p158 = scmp.eq.s32.totalorder %s31, 1
      %p159 = por %p157, %p158
      %p161 = scmp.ne.s32.totalorder %s146, %s160
      %p162 = scmp.eq.s32.totalorder %s31, 0
      %p163 = por %p161, %p162
      %s164 = ssub.s32 %s25, %s32
      %p165 = scmp.eq.s32.totalorder %s164, 0
      %s167 = sadd.s32 %s166, 1
      %s168 = scalar_select %p165, %s166, %s167
      %p171 = pneg %p165
      %p172 = scmp.eq.s32.totalorder %s25, 1
      %p173 = por %p171, %p172
      %p174 = scmp.ne.s32.totalorder %s166, %s169
      %p175 = scmp.eq.s32.totalorder %s25, 0
      %p176 = por %p174, %p175
      %p177 = scmp.ne.s32.totalorder %s166, %s169
      %p178 = scmp.eq.s32.totalorder %s30, 1
      %p179 = por %p177, %p178
      %p180 = scmp.ne.s32.totalorder %s169, %s170
      %p181 = scmp.eq.s32.totalorder %s30, 0
      %p182 = por %p180, %p181
      %p183 = scmp.ne.s32.totalorder %s169, %s170
      %p184 = scmp.eq.s32.totalorder %s31, 1
      %p185 = por %p183, %p184
      %p187 = scmp.ne.s32.totalorder %s170, %s186
      %p188 = scmp.eq.s32.totalorder %s31, 0
      %p189 = por %p187, %p188
      %s190 = ssub.s32 %s25, %s32
      %p191 = scmp.eq.s32.totalorder %s190, 0
      %s193 = sadd.s32 %s192, 1
      %s194 = scalar_select %p191, %s192, %s193
      %p197 = pneg %p191
      %p198 = scmp.eq.s32.totalorder %s25, 1
      %p199 = por %p197, %p198
      %p200 = scmp.ne.s32.totalorder %s192, %s195
      %p201 = scmp.eq.s32.totalorder %s25, 0
      %p202 = por %p200, %p201
      %p203 = scmp.ne.s32.totalorder %s192, %s195
      %p204 = scmp.eq.s32.totalorder %s30, 1
      %p205 = por %p203, %p204
      %p206 = scmp.ne.s32.totalorder %s195, %s196
      %p207 = scmp.eq.s32.totalorder %s30, 0
      %p208 = por %p206, %p207
      %p209 = scmp.ne.s32.totalorder %s195, %s196
      %p210 = scmp.eq.s32.totalorder %s31, 1
      %p211 = por %p209, %p210
      %p213 = scmp.ne.s32.totalorder %s196, %s212
      %p214 = scmp.eq.s32.totalorder %s31, 0
      %p215 = por %p213, %p214
      %p216 = scmp.le.s32.totalorder 1, %s25
      %p217 = scmp.lt.s32.totalorder %s25, 3
      %p218 = pnand %p216, %p217
      %p219 = pneg %p218
      // Predicated region
      $region9: #{tpu_custom_call.1} parent=5 // pred_check
        _
      $region10: #{tpu_custom_call.1} parent=5 // pred_check_branch
        %221 = sbr.rel (%p218) target = $region12
      $region11: #{tpu_custom_call.1} parent=5 // pred_region
        %s222 = ssub.s32 %s25, 1
        // Predicated region
        $region13: #{tpu_custom_call.1} parent=11 // pred_check
          %p223 = pneg %p72
        $region14: #{tpu_custom_call.1} parent=11 // pred_check_branch
          %225 = sbr.rel (%p223) target = $region16
        $region15: #{tpu_custom_call.1} parent=11 // pred_region
          %227 = vsyncadd [#allocation6], 0
          %s229 = sshll.u32 %s1, 4
          %s230 = int_to_ptr.hbm [resolvable:$true] %s229
          %s231 = sshll.u32 [#allocation5], 4
          %s232 = int_to_ptr.vmem [resolvable:$true] %s231
          %234 = dma.hbm_to_vmem [thread:$0]  %s230, 16, %s232, [#allocation6]
        $region16: #{tpu_custom_call.1} parent=11 // pred_fallthru
          _
        // Predicated region
        $region17: #{tpu_custom_call.1} parent=11 // pred_check
          %p235 = pneg %p93
        $region18: #{tpu_custom_call.1} parent=11 // pred_check_branch
          %237 = sbr.rel (%p235) target = $region20
        $region19: #{tpu_custom_call.1} parent=11 // pred_region
          _
        $region20: #{tpu_custom_call.1} parent=11 // pred_fallthru
          _
        // Predicated region
        $region21: #{tpu_custom_call.1} parent=11 // pred_check
          %p238 = pneg %p114
        $region22: #{tpu_custom_call.1} parent=11 // pred_check_branch
          %240 = sbr.rel (%p238) target = $region24
        $region23: #{tpu_custom_call.1} parent=11 // pred_region
          %242 = vsyncadd [#allocation6], 0
          %s243 = sshll.u32 %s3, 4
          %s244 = int_to_ptr.hbm [resolvable:$true] %s243
          %s245 = sshll.u32 [#allocation7], 4
          %s246 = int_to_ptr.vmem [resolvable:$true] %s245
          %251 = dma.hbm_to_vmem [thread:$0]  %s244, 256, %s246, [#allocation6], 64, 64, 4
        $region24: #{tpu_custom_call.1} parent=11 // pred_fallthru
          _
        // Predicated region
        $region25: #{tpu_custom_call.1} parent=11 // pred_check
          %p252 = pneg %p135
        $region26: #{tpu_custom_call.1} parent=11 // pred_check_branch
          %254 = sbr.rel (%p252) target = $region28
        $region27: #{tpu_custom_call.1} parent=11 // pred_region
          %256 = vsyncadd [#allocation9], 0
          %s257 = sshll.u32 %s4, 4
          %s258 = int_to_ptr.hbm [resolvable:$true] %s257
          %s259 = sshll.u32 [#allocation8], 4
          %s260 = int_to_ptr.vmem [resolvable:$true] %s259
          %265 = dma.hbm_to_vmem [thread:$0]  %s258, 256, %s260, [#allocation9], 64, 64, 4
        $region28: #{tpu_custom_call.1} parent=11 // pred_fallthru
          _
        // Predicated region
        $region29: #{tpu_custom_call.1} parent=11 // pred_check
          %p266 = pneg %p156
        $region30: #{tpu_custom_call.1} parent=11 // pred_check_branch
          %268 = sbr.rel (%p266) target = $region32
        $region31: #{tpu_custom_call.1} parent=11 // pred_region
          _
        $region32: #{tpu_custom_call.1} parent=11 // pred_fallthru
          _
      $region12: #{tpu_custom_call.1} parent=5 // pred_fallthru
        _
      %p269 = scmp.lt.s32.totalorder %s25, 2
      // Predicated region
      $region33: #{tpu_custom_call.1} parent=5 // pred_check
        %p270 = pneg %p269
      $region34: #{tpu_custom_call.1} parent=5 // pred_check_branch
        %272 = sbr.rel (%p270) target = $region36
      $region35: #{tpu_custom_call.1} parent=5 // pred_region
        // Predicated region
        $region37: #{tpu_custom_call.1} parent=35 // pred_check
          %p273 = pneg %p45
        $region38: #{tpu_custom_call.1} parent=35 // pred_check_branch
          %275 = sbr.rel (%p273) target = $region40
        $region39: #{tpu_custom_call.1} parent=35 // pred_region
          %s276 = sand.u32 %s35, 1
          %s277 = scalar_lea.sflag [#allocation3], %s276
          %s278 = sand.u32 %s35, 1
          %s279 = smul.addr %s278, 8
          %s280 = scalar_lea.vmem [#allocation2], %s279
          %282 = vsyncadd %s277, 0
          %s283 = smul.addr %s25, 8
          %s284 = scalar_lea.hbm %s0, %s283
          %s286 = sshll.u32 %s284, 4
          %s287 = int_to_ptr.hbm [resolvable:$true] %s286
          %s288 = sshll.u32 %s280, 4
          %s289 = int_to_ptr.vmem [resolvable:$true] %s288
          %291 = dma.hbm_to_vmem [thread:$0]  %s287, 128, %s289, %s277
        $region40: #{tpu_custom_call.1} parent=35 // pred_fallthru
          _
      $region36: #{tpu_custom_call.1} parent=5 // pred_fallthru
        _
      %p292 = scmp.le.s32.totalorder 1, %s25
      %p293 = scmp.lt.s32.totalorder %s25, 3
      %p294 = pnand %p292, %p293
      %p295 = pneg %p294
      // Predicated region
      $region41: #{tpu_custom_call.1} parent=5 // pred_check
        _
      $region42: #{tpu_custom_call.1} parent=5 // pred_check_branch
        %297 = sbr.rel (%p294) target = $region44
      $region43: #{tpu_custom_call.1} parent=5 // pred_region
        %s298 = ssub.s32 %s25, 1
        %s299 = sand.u32 %s38, 1
        %s300 = scalar_lea.sflag [#allocation3], %s299
        %s301 = sand.u32 %s38, 1
        %s302 = smul.addr %s301, 8
        %s303 = scalar_lea.vmem [#allocation2], %s302
        // Predicated region
        $region45: #{tpu_custom_call.1} parent=43 // pred_check
          %p304 = pneg %p51
        $region46: #{tpu_custom_call.1} parent=43 // pred_check_branch
          %306 = sbr.rel (%p304) target = $region48
        $region47: #{tpu_custom_call.1} parent=43 // pred_region
          %308 = dma.done %s300, 128
        $region48: #{tpu_custom_call.1} parent=43 // pred_fallthru
          _
        // Predicated region
        $region49: #{tpu_custom_call.1} parent=43 // pred_check
          %p309 = pneg %p72
        $region50: #{tpu_custom_call.1} parent=43 // pred_check_branch
          %311 = sbr.rel (%p309) target = $region52
        $region51: #{tpu_custom_call.1} parent=43 // pred_region
          %313 = dma.done [#allocation6], 16
        $region52: #{tpu_custom_call.1} parent=43 // pred_fallthru
          _
        // Predicated region
        $region53: #{tpu_custom_call.1} parent=43 // pred_check
          %p314 = pneg %p114
        $region54: #{tpu_custom_call.1} parent=43 // pred_check_branch
          %316 = sbr.rel (%p314) target = $region56
        $region55: #{tpu_custom_call.1} parent=43 // pred_region
          %318 = dma.done [#allocation6], 256
        $region56: #{tpu_custom_call.1} parent=43 // pred_fallthru
          _
        // Predicated region
        $region57: #{tpu_custom_call.1} parent=43 // pred_check
          %p319 = pneg %p135
        $region58: #{tpu_custom_call.1} parent=43 // pred_check_branch
          %321 = sbr.rel (%p319) target = $region60
        $region59: #{tpu_custom_call.1} parent=43 // pred_region
          %323 = dma.done [#allocation9], 256
        $region60: #{tpu_custom_call.1} parent=43 // pred_fallthru
          _
        %s324 = sand.u32 %s38, 1
        %s325 = scalar_lea.sflag [#allocation3], %s324
        %s326 = sand.u32 %s38, 1
        %s327 = smul.addr %s326, 8
        %s328 = scalar_lea.vmem [#allocation2], %s327
        %p329 = pneg %p51
        %p330 = pneg %p48
        %p331 = pneg %p72
        %p332 = pneg %p69
        %p333 = pneg %p93
        %p334 = pneg %p90
        %p335 = pneg %p114
        %p336 = pneg %p111
        %p337 = pneg %p135
        %p338 = pneg %p132
        %p339 = pneg %p156
        %p340 = pneg %p153
        %p341 = pneg %p182
        %p342 = pneg %p179
        %s343 = sand.u32 %s169, 1
        %s344 = scalar_lea.sflag [#allocation4], %s343
        %s345 = sand.u32 %s169, 1
        %s346 = smul.addr %s345, 8
        %s347 = scalar_lea.vmem [#allocation10], %s346
        %p348 = pneg %p208
        %p349 = pneg %p205
        %s350 = sand.u32 %s195, 1
        %s351 = scalar_lea.sflag [#allocation12], %s350
        %s352 = sand.u32 %s195, 1
        %s353 = scalar_lea.vmem [#allocation11], %s352
        %v355 = vld [vmem:[%s303] sm:$0xff]
        %vm356 = vcmask 261120
        %v357 = vsel %vm356, %v355, 0.0
        %358 = vadd.xlane.f32.xlu0 %v357
        %v359 = vpop.xlane.xlu0 %358
        %v360 = vrcp.pop 32.0
        %v361 = vmul.f32 32.0, %v360
        %v362 = vsub.f32 1.0, %v361
        %v363 = vmul.f32 %v360, %v362
        %v364 = vadd.f32 %v360, %v363
        %vm365 = vweird.f32 %v360
        %v366 = vsel %vm365, %v360, %v364
        %v367 = vmul.f32 %v359, %v366
        %v368 = vsub.f32 %v355, %v367
        %v369 = vmul.f32 %v368, %v368
        %v370 = vsel %vm356, %v369, 0.0
        %371 = vadd.xlane.f32.xlu0 %v370
        %v372 = vpop.xlane.xlu0 %371
        %v373 = vmul.f32 %v372, %v366
        %v374 = vadd.f32 %v373, 1e-05
        %v375 = vrsqrt.pop %v374
        %v376 = vmul.f32 %v375, %v374
        %v377 = vmul.f32 %v376, %v375
        %v378 = vmul.f32 0.5, %v377
        %v379 = vsub.f32 1.5, %v378
        %v380 = vmul.f32 %v375, %v379
        %vm381 = vweird.f32 %v374
        %vm382 = vweird.f32 %v375
        %vm383 = vmor %vm381, %vm382
        %v384 = vsel %vm383, %v375, %v380
        %v385 = vmul.f32 %v368, %v384
        %v386 = vld [vmem:[#allocation5] sm:$0x1]
        %v388 = vperm.slane %v386, 0
        %v390 = vmul.f32 %v385, %v388
        %v391 = vld [vmem:[%s2] sm:$0x1]
        %v393 = vperm.slane %v391, 0
        %v395 = vadd.f32 %v390, %v393
        %v396 = vpack.c.bf16 %v395, %v395
        %v397 = vld [vmem:[#allocation7] sm:$0xf]
        %v398 = vld [vmem:[#allocation7 + $0x4] sm:$0xf]
        %v399 = vld [vmem:[#allocation7 + $0x8] sm:$0xf]
        %v400 = vld [vmem:[#allocation7 + $0xc] sm:$0xf]
        %v405 = vunpack.c.l.b16 %v397
        %v406 = vunpack.c.l.b16 %v398
        %v407 = vunpack.c.l.b16 %v399
        %v408 = vunpack.c.l.b16 %v400
        %v409 = vpack.c.b16 %v406, %v405
        %v410 = vpack.c.b16 %v408, %v407
        %v414 = vsel %vm356, %v396, 0
        %416 = vmatpush.bf16.msra.mxu0 0
        %417 = vmatpush.bf16.msra.mxu0 0
        %418 = vmatpush.bf16.msra.mxu0 0
        %419 = vmatpush.bf16.msra.mxu0 0
        %420 = vmatpush.bf16.msra.mxu0 0
        %421 = vmatpush.bf16.msra.mxu0 0
        %422 = vmatpush.bf16.msra.mxu0 %v410
        %423 = vmatpush.bf16.msra.mxu0 %v409
        %424 = vmatmul.bf16.gmra.mxu0 %v414
        %v425 = vpop.f32.mrf.mxu0
        %v426 = vadd.f32 0.0, %v425
        %v427 = vpop.f32.mrf.mxu0
        %428 = vdwg.mxu0
        %430 = vrot.lane.b32.xlu0 %v426, 120
        %v431 = vpop.permute.xlu0 %430
        %433 = vrot.lane.b32.xlu0 %v426, 112
        %v434 = vpop.permute.xlu0 %433
        %436 = vrot.lane.b32.xlu0 %v426, 104
        %v437 = vpop.permute.xlu0 %436
        %439 = vrot.lane.b32.xlu0 %v426, 96
        %v440 = vpop.permute.xlu0 %439
        %442 = vrot.lane.b32.xlu0 %v426, 88
        %v443 = vpop.permute.xlu0 %442
        %445 = vrot.lane.b32.xlu0 %v426, 80
        %v446 = vpop.permute.xlu0 %445
        %448 = vrot.lane.b32.xlu0 %v426, 72
        %v449 = vpop.permute.xlu0 %448
        %451 = vrot.lane.b32.xlu0 %v426, 64
        %v452 = vpop.permute.xlu0 %451
        %454 = vrot.lane.b32.xlu0 %v426, 56
        %v455 = vpop.permute.xlu0 %454
        %457 = vrot.lane.b32.xlu0 %v426, 48
        %v458 = vpop.permute.xlu0 %457
        %460 = vrot.lane.b32.xlu0 %v426, 40
        %v461 = vpop.permute.xlu0 %460
        %v463 = vrot.slane %v434, 4
        %vm464 = vcmask 1047556
        %v465 = vsel %vm464, %v463, %v426
        %v466 = vrot.slane %v426, 4
        %v467 = vsel %vm464, %v434, %v466
        %v469 = vunpack.c.l.s4 1983009808
        %v470 = vunpack.c.0.s8 %v469
        %v471 = vperm.slane %v465, %v470
        %v473 = vunpack.c.l.s4 1983009808
        %v474 = vunpack.c.0.s8 %v473
        %v475 = vperm.slane %v467, %v474
        %v476 = vrot.slane %v437, 4
        %v477 = vsel %vm464, %v476, %v431
        %v478 = vrot.slane %v431, 4
        %v479 = vsel %vm464, %v437, %v478
        %v481 = vunpack.c.l.s4 1983009808
        %v482 = vunpack.c.0.s8 %v481
        %v483 = vperm.slane %v477, %v482
        %v485 = vunpack.c.l.s4 1983009808
        %v486 = vunpack.c.0.s8 %v485
        %v487 = vperm.slane %v479, %v486
        %v488 = vrot.slane %v446, 4
        %v489 = vsel %vm464, %v488, %v440
        %v490 = vrot.slane %v440, 4
        %v491 = vsel %vm464, %v446, %v490
        %v493 = vunpack.c.l.s4 1983009808
        %v494 = vunpack.c.0.s8 %v493
        %v495 = vperm.slane %v489, %v494
        %v497 = vunpack.c.l.s4 1983009808
        %v498 = vunpack.c.0.s8 %v497
        %v499 = vperm.slane %v491, %v498
        %v500 = vrot.slane %v449, 4
        %v501 = vsel %vm464, %v500, %v443
        %v502 = vrot.slane %v443, 4
        %v503 = vsel %vm464, %v449, %v502
        %v505 = vunpack.c.l.s4 1983009808
        %v506 = vunpack.c.0.s8 %v505
        %v507 = vperm.slane %v501, %v506
        %v509 = vunpack.c.l.s4 1983009808
        %v510 = vunpack.c.0.s8 %v509
        %v511 = vperm.slane %v503, %v510
        %v512 = vrot.slane %v483, 4
        %v513 = vsel %vm464, %v512, %v471
        %v514 = vrot.slane %v471, 4
        %v515 = vsel %vm464, %v483, %v514
        %v517 = vunpack.c.l.s4 1934713408
        %v518 = vunpack.c.0.s8 %v517
        %v519 = vperm.slane %v513, %v518
        %v521 = vunpack.c.l.s4 1934713408
        %v522 = vunpack.c.0.s8 %v521
        %v523 = vperm.slane %v515, %v522
        %v524 = vrot.slane %v487, 4
        %v525 = vsel %vm464, %v524, %v475
        %v526 = vrot.slane %v475, 4
        %v527 = vsel %vm464, %v487, %v526
        %v529 = vunpack.c.l.s4 1934713408
        %v530 = vunpack.c.0.s8 %v529
        %v531 = vperm.slane %v525, %v530
        %v533 = vunpack.c.l.s4 1934713408
        %v534 = vunpack.c.0.s8 %v533
        %v535 = vperm.slane %v527, %v534
        %v536 = vrot.slane %v507, 4
        %v537 = vsel %vm464, %v536, %v495
        %v538 = vrot.slane %v495, 4
        %v539 = vsel %vm464, %v507, %v538
        %v541 = vunpack.c.l.s4 1934713408
        %v542 = vunpack.c.0.s8 %v541
        %v543 = vperm.slane %v537, %v542
        %v545 = vunpack.c.l.s4 1934713408
        %v546 = vunpack.c.0.s8 %v545
        %v547 = vperm.slane %v539, %v546
        %v548 = vrot.slane %v511, 4
        %v549 = vsel %vm464, %v548, %v499
        %v550 = vrot.slane %v499, 4
        %v551 = vsel %vm464, %v511, %v550
        %v553 = vunpack.c.l.s4 1934713408
        %v554 = vunpack.c.0.s8 %v553
        %v555 = vperm.slane %v549, %v554
        %v557 = vunpack.c.l.s4 1934713408
        %v558 = vunpack.c.0.s8 %v557
        %v559 = vperm.slane %v551, %v558
        %v560 = vrot.slane %v543, 4
        %v561 = vsel %vm464, %v560, %v519
        %v562 = vrot.slane %v519, 4
        %v563 = vsel %vm464, %v543, %v562
        %v564 = vrot.slane %v547, 4
        %v565 = vsel %vm464, %v564, %v523
        %v566 = vrot.slane %v523, 4
        %v567 = vsel %vm464, %v547, %v566
        %v568 = vrot.slane %v555, 4
        %v569 = vsel %vm464, %v568, %v531
        %v570 = vrot.slane %v531, 4
        %v571 = vsel %vm464, %v555, %v570
        %v572 = vrot.slane %v559, 4
        %v573 = vsel %vm464, %v572, %v535
        %v574 = vrot.slane %v535, 4
        %v575 = vsel %vm464, %v559, %v574
        %v576 = vrot.slane %v458, 4
        %v577 = vsel %vm464, %v576, %v452
        %v578 = vrot.slane %v452, 4
        %v579 = vsel %vm464, %v458, %v578
        %v581 = vunpack.c.l.s4 1983009808
        %v582 = vunpack.c.0.s8 %v581
        %v583 = vperm.slane %v577, %v582
        %v585 = vunpack.c.l.s4 1983009808
        %v586 = vunpack.c.0.s8 %v585
        %v587 = vperm.slane %v579, %v586
        %v588 = vrot.slane %v461, 4
        %v589 = vsel %vm464, %v588, %v455
        %v590 = vrot.slane %v455, 4
        %v591 = vsel %vm464, %v461, %v590
        %v593 = vunpack.c.l.s4 1983009808
        %v594 = vunpack.c.0.s8 %v593
        %v595 = vperm.slane %v589, %v594
        %v597 = vunpack.c.l.s4 1983009808
        %v598 = vunpack.c.0.s8 %v597
        %v599 = vperm.slane %v591, %v598
        %v600 = vrot.slane %v595, 4
        %v601 = vsel %vm464, %v600, %v583
        %v602 = vrot.slane %v583, 4
        %v603 = vsel %vm464, %v595, %v602
        %v605 = vunpack.c.l.s4 1934713408
        %v606 = vunpack.c.0.s8 %v605
        %v607 = vperm.slane %v601, %v606
        %v609 = vunpack.c.l.s4 1934713408
        %v610 = vunpack.c.0.s8 %v609
        %v611 = vperm.slane %v603, %v610
        %v612 = vrot.slane %v599, 4
        %v613 = vsel %vm464, %v612, %v587
        %v614 = vrot.slane %v587, 4
        %v615 = vsel %vm464, %v599, %v614
        %v617 = vunpack.c.l.s4 1934713408
        %v618 = vunpack.c.0.s8 %v617
        %v619 = vperm.slane %v613, %v618
        %v621 = vunpack.c.l.s4 1934713408
        %v622 = vunpack.c.0.s8 %v621
        %v623 = vperm.slane %v615, %v622
        %v624 = vrot.slane %v607, 4
        %v625 = vsel %vm464, 0.0, %v624
        %v626 = vrot.slane %v611, 4
        %v627 = vsel %vm464, 0.0, %v626
        %v628 = vrot.slane %v619, 4
        %v629 = vsel %vm464, 0.0, %v628
        %v630 = vrot.slane %v623, 4
        %v631 = vsel %vm464, 0.0, %v630
        %v632 = vrot.slane %v565, 4
        %v633 = vsel %vm464, %v632, %v561
        %v634 = vrot.slane %v561, 4
        %v635 = vsel %vm464, %v565, %v634
        %v637 = vunpack.c.l.s4 1983009808
        %v638 = vunpack.c.0.s8 %v637
        %v639 = vperm.slane %v633, %v638
        %v641 = vunpack.c.l.s4 1983009808
        %v642 = vunpack.c.0.s8 %v641
        %v643 = vperm.slane %v635, %v642
        %v644 = vrot.slane %v567, 4
        %v645 = vsel %vm464, %v644, %v563
        %v646 = vrot.slane %v563, 4
        %v647 = vsel %vm464, %v567, %v646
        %v649 = vunpack.c.l.s4 1983009808
        %v650 = vunpack.c.0.s8 %v649
        %v651 = vperm.slane %v645, %v650
        %v653 = vunpack.c.l.s4 1983009808
        %v654 = vunpack.c.0.s8 %v653
        %v655 = vperm.slane %v647, %v654
        %v656 = vrot.slane %v573, 4
        %v657 = vsel %vm464, %v656, %v569
        %v658 = vrot.slane %v569, 4
        %v659 = vsel %vm464, %v573, %v658
        %v661 = vunpack.c.l.s4 1983009808
        %v662 = vunpack.c.0.s8 %v661
        %v663 = vperm.slane %v657, %v662
        %v665 = vunpack.c.l.s4 1983009808
        %v666 = vunpack.c.0.s8 %v665
        %v667 = vperm.slane %v659, %v666
        %v668 = vrot.slane %v575, 4
        %v669 = vsel %vm464, %v668, %v571
        %v670 = vrot.slane %v571, 4
        %v671 = vsel %vm464, %v575, %v670
        %v673 = vunpack.c.l.s4 1983009808
        %v674 = vunpack.c.0.s8 %v673
        %v675 = vperm.slane %v669, %v674
        %v677 = vunpack.c.l.s4 1983009808
        %v678 = vunpack.c.0.s8 %v677
        %v679 = vperm.slane %v671, %v678
        %v680 = vrot.slane %v651, 4
        %v681 = vsel %vm464, %v680, %v639
        %v682 = vrot.slane %v639, 4
        %v683 = vsel %vm464, %v651, %v682
        %v685 = vunpack.c.l.s4 1934713408
        %v686 = vunpack.c.0.s8 %v685
        %v687 = vperm.slane %v681, %v686
        %v689 = vunpack.c.l.s4 1934713408
        %v690 = vunpack.c.0.s8 %v689
        %v691 = vperm.slane %v683, %v690
        %v692 = vrot.slane %v655, 4
        %v693 = vsel %vm464, %v692, %v643
        %v694 = vrot.slane %v643, 4
        %v695 = vsel %vm464, %v655, %v694
        %v697 = vunpack.c.l.s4 1934713408
        %v698 = vunpack.c.0.s8 %v697
        %v699 = vperm.slane %v693, %v698
        %v701 = vunpack.c.l.s4 1934713408
        %v702 = vunpack.c.0.s8 %v701
        %v703 = vperm.slane %v695, %v702
        %v704 = vrot.slane %v675, 4
        %v705 = vsel %vm464, %v704, %v663
        %v706 = vrot.slane %v663, 4
        %v707 = vsel %vm464, %v675, %v706
        %v709 = vunpack.c.l.s4 1934713408
        %v710 = vunpack.c.0.s8 %v709
        %v711 = vperm.slane %v705, %v710
        %v713 = vunpack.c.l.s4 1934713408
        %v714 = vunpack.c.0.s8 %v713
        %v715 = vperm.slane %v707, %v714
        %v716 = vrot.slane %v679, 4
        %v717 = vsel %vm464, %v716, %v667
        %v718 = vrot.slane %v667, 4
        %v719 = vsel %vm464, %v679, %v718
        %v721 = vunpack.c.l.s4 1934713408
        %v722 = vunpack.c.0.s8 %v721
        %v723 = vperm.slane %v717, %v722
        %v725 = vunpack.c.l.s4 1934713408
        %v726 = vunpack.c.0.s8 %v725
        %v727 = vperm.slane %v719, %v726
        %v728 = vrot.slane %v711, 4
        %v729 = vsel %vm464, %v728, %v687
        %v730 = vrot.slane %v687, 4
        %v731 = vsel %vm464, %v711, %v730
        %v732 = vrot.slane %v715, 4
        %v733 = vsel %vm464, %v732, %v691
        %v734 = vrot.slane %v691, 4
        %v735 = vsel %vm464, %v715, %v734
        %v736 = vrot.slane %v723, 4
        %v737 = vsel %vm464, %v736, %v699
        %v738 = vrot.slane %v699, 4
        %v739 = vsel %vm464, %v723, %v738
        %v740 = vrot.slane %v727, 4
        %v741 = vsel %vm464, %v740, %v703
        %v742 = vrot.slane %v703, 4
        %v743 = vsel %vm464, %v727, %v742
        %v744 = vsel %vm464, %v626, %v607
        %v746 = vunpack.c.l.s4 1983009808
        %v747 = vunpack.c.0.s8 %v746
        %v748 = vperm.slane %v744, %v747
        %v749 = vrot.slane %v627, 4
        %v750 = vsel %vm464, %v749, %v625
        %v752 = vunpack.c.l.s4 1983009808
        %v753 = vunpack.c.0.s8 %v752
        %v754 = vperm.slane %v750, %v753
        %v755 = vsel %vm464, %v630, %v619
        %v757 = vunpack.c.l.s4 1983009808
        %v758 = vunpack.c.0.s8 %v757
        %v759 = vperm.slane %v755, %v758
        %v760 = vrot.slane %v631, 4
        %v761 = vsel %vm464, %v760, %v629
        %v763 = vunpack.c.l.s4 1983009808
        %v764 = vunpack.c.0.s8 %v763
        %v765 = vperm.slane %v761, %v764
        %v766 = vrot.slane %v754, 4
        %v767 = vsel %vm464, %v766, %v748
        %v768 = vrot.slane %v748, 4
        %v769 = vsel %vm464, %v754, %v768
        %v771 = vunpack.c.l.s4 1934713408
        %v772 = vunpack.c.0.s8 %v771
        %v773 = vperm.slane %v767, %v772
        %v775 = vunpack.c.l.s4 1934713408
        %v776 = vunpack.c.0.s8 %v775
        %v777 = vperm.slane %v769, %v776
        %v778 = vrot.slane %v765, 4
        %v779 = vsel %vm464, %v778, %v759
        %v780 = vrot.slane %v759, 4
        %v781 = vsel %vm464, %v765, %v780
        %v783 = vunpack.c.l.s4 1934713408
        %v784 = vunpack.c.0.s8 %v783
        %v785 = vperm.slane %v779, %v784
        %v787 = vunpack.c.l.s4 1934713408
        %v788 = vunpack.c.0.s8 %v787
        %v789 = vperm.slane %v781, %v788
        %v790 = vrot.slane %v785, 4
        %v791 = vsel %vm464, %v790, %v773
        %v792 = vrot.slane %v773, 4
        %v793 = vsel %vm464, %v785, %v792
        %v794 = vrot.slane %v789, 4
        %v795 = vsel %vm464, %v794, %v777
        %v796 = vrot.slane %v777, 4
        %v797 = vsel %vm464, %v789, %v796
        %v798 = vpack.c.bf16 %v729, %v729
        %v799 = vpack.c.bf16 %v731, %v731
        %v800 = vpack.c.bf16 %v733, %v733
        %v801 = vpack.c.bf16 %v735, %v735
        %v802 = vpack.c.bf16 %v737, %v737
        %v803 = vpack.c.bf16 %v739, %v739
        %v804 = vpack.c.bf16 %v741, %v741
        %v805 = vpack.c.bf16 %v743, %v743
        %v806 = vpack.c.bf16 %v791, %v791
        %v807 = vpack.c.bf16 %v793, %v793
        %v808 = vpack.c.bf16 %v795, %v795
        %v809 = vpack.c.bf16 %v797, %v797
        %vm810 = vcmask 64512
        %v812 = vsel %vm810, %v798, 0
        %v815 = vsel %vm810, %v802, 0
        %817 = vmatpush.bf16.xpose.msra.mxu0 0
        %818 = vmatpush.bf16.xpose.msra.mxu0 0
        %819 = vmatpush.bf16.xpose.msra.mxu0 0
        %820 = vmatpush.bf16.xpose.msra.mxu0 0
        %821 = vmatpush.bf16.xpose.msra.mxu0 0
        %822 = vmatpush.bf16.xpose.msra.mxu0 0
        %823 = vmatpush.bf16.xpose.msra.mxu0 0
        %824 = vmatpush.bf16.xpose.msra.mxu0 %v815
        %825 = vmatmul.bf16.gmra.mxu0 %v812
        %v826 = vpop.f32.mrf.mxu0
        %v827 = vadd.f32 0.0, %v826
        %v828 = vpop.f32.mrf.mxu0
        %829 = vdwg.mxu0
        %v831 = vsel %vm810, %v799, 0
        %v834 = vsel %vm810, %v803, 0
        %836 = vmatpush.bf16.xpose.msra.mxu0 0
        %837 = vmatpush.bf16.xpose.msra.mxu0 0
        %838 = vmatpush.bf16.xpose.msra.mxu0 0
        %839 = vmatpush.bf16.xpose.msra.mxu0 0
        %840 = vmatpush.bf16.xpose.msra.mxu0 0
        %841 = vmatpush.bf16.xpose.msra.mxu0 0
        %842 = vmatpush.bf16.xpose.msra.mxu0 0
        %843 = vmatpush.bf16.xpose.msra.mxu0 %v834
        %844 = vmatmul.bf16.gmra.mxu0 %v831
        %v845 = vpop.f32.mrf.mxu0
        %v846 = vadd.f32 0.0, %v845
        %v847 = vpop.f32.mrf.mxu0
        %848 = vdwg.mxu0
        %v850 = vsel %vm810, %v800, 0
        %v853 = vsel %vm810, %v804, 0
        %855 = vmatpush.bf16.xpose.msra.mxu0 0
        %856 = vmatpush.bf16.xpose.msra.mxu0 0
        %857 = vmatpush.bf16.xpose.msra.mxu0 0
        %858 = vmatpush.bf16.xpose.msra.mxu0 0
        %859 = vmatpush.bf16.xpose.msra.mxu0 0
        %860 = vmatpush.bf16.xpose.msra.mxu0 0
        %861 = vmatpush.bf16.xpose.msra.mxu0 0
        %862 = vmatpush.bf16.xpose.msra.mxu0 %v853
        %863 = vmatmul.bf16.gmra.mxu0 %v850
        %v864 = vpop.f32.mrf.mxu0
        %v865 = vadd.f32 0.0, %v864
        %v866 = vpop.f32.mrf.mxu0
        %867 = vdwg.mxu0
        %v869 = vsel %vm810, %v801, 0
        %v872 = vsel %vm810, %v805, 0
        %874 = vmatpush.bf16.xpose.msra.mxu0 0
        %875 = vmatpush.bf16.xpose.msra.mxu0 0
        %876 = vmatpush.bf16.xpose.msra.mxu0 0
        %877 = vmatpush.bf16.xpose.msra.mxu0 0
        %878 = vmatpush.bf16.xpose.msra.mxu0 0
        %879 = vmatpush.bf16.xpose.msra.mxu0 0
        %880 = vmatpush.bf16.xpose.msra.mxu0 0
        %881 = vmatpush.bf16.xpose.msra.mxu0 %v872
        %882 = vmatmul.bf16.gmra.mxu0 %v869
        %v883 = vpop.f32.mrf.mxu0
        %v884 = vadd.f32 0.0, %v883
        %v885 = vpop.f32.mrf.mxu0
        %886 = vdwg.mxu0
        %v887 = vsel %vm810, %v827, -inf
        %888 = vmax.xlane.f32.xlu0 %v887
        %v889 = vpop.xlane.xlu0 %888
        %v890 = vsel %vm810, %v846, -inf
        %891 = vmax.xlane.f32.xlu0 %v890
        %v892 = vpop.xlane.xlu0 %891
        %v893 = vsel %vm810, %v865, -inf
        %894 = vmax.xlane.f32.xlu0 %v893
        %v895 = vpop.xlane.xlu0 %894
        %v896 = vsel %vm810, %v884, -inf
        %897 = vmax.xlane.f32.xlu0 %v896
        %v898 = vpop.xlane.xlu0 %897
        %v899 = vsub.f32 %v827, %v889
        %v900 = vsub.f32 %v846, %v892
        %v901 = vsub.f32 %v865, %v895
        %v902 = vsub.f32 %v884, %v898
        %v903 = vmul.f32 %v899, 1.442695
        %v904 = vpow.pop %v903
        %v905 = vmul.f32 %v900, 1.442695
        %v906 = vpow.pop %v905
        %v907 = vmul.f32 %v901, 1.442695
        %v908 = vpow.pop %v907
        %v909 = vmul.f32 %v902, 1.442695
        %v910 = vpow.pop %v909
        %v915 = vrot.slane %v906, 7
        %vm916 = vcmask 1041409
        %v917 = vsel %vm916, %v915, %v904
        %v918 = vrot.slane %v908, 6
        %vm919 = vcmask 1042434
        %v920 = vsel %vm919, %v918, %v917
        %v921 = vrot.slane %v910, 5
        %vm922 = vcmask 1043459
        %v923 = vsel %vm922, %v921, %v920
        %vm925 = vcmask 60416
        %v926 = vsel %vm925, %v923, 0.0
        %927 = vadd.xlane.f32.xlu0 %v926
        %v928 = vpop.xlane.xlu0 %927
        %v930 = vrot.slane %v928, 1
        %v931 = vrot.slane %v928, 2
        %v932 = vrot.slane %v928, 3
        %v937 = vrcp.pop %v928
        %v938 = vmul.f32 %v928, %v937
        %v939 = vsub.f32 1.0, %v938
        %v940 = vmul.f32 %v937, %v939
        %v941 = vadd.f32 %v937, %v940
        %vm942 = vweird.f32 %v928
        %vm943 = vweird.f32 %v937
        %vm944 = vmor %vm942, %vm943
        %v945 = vsel %vm944, %v937, %v941
        %v946 = vand.u32 2147483647, %v928
        %vm947 = vcmp.eq.f32.partialorder %v946, 8.507059e+37
        %v948 = vand.u32 %v928, 2147483648
        %v949 = vor.u32 1.1754944e-38, %v948
        %v950 = vsel %vm947, %v949, %v945
        %v951 = vmul.f32 %v904, %v950
        %v952 = vrcp.pop %v930
        %v953 = vmul.f32 %v930, %v952
        %v954 = vsub.f32 1.0, %v953
        %v955 = vmul.f32 %v952, %v954
        %v956 = vadd.f32 %v952, %v955
        %vm957 = vweird.f32 %v930
        %vm958 = vweird.f32 %v952
        %vm959 = vmor %vm957, %vm958
        %v960 = vsel %vm959, %v952, %v956
        %v961 = vand.u32 2147483647, %v930
        %vm962 = vcmp.eq.f32.partialorder %v961, 8.507059e+37
        %v963 = vand.u32 %v930, 2147483648
        %v964 = vor.u32 1.1754944e-38, %v963
        %v965 = vsel %vm962, %v964, %v960
        %v966 = vmul.f32 %v906, %v965
        %v967 = vrcp.pop %v931
        %v968 = vmul.f32 %v931, %v967
        %v969 = vsub.f32 1.0, %v968
        %v970 = vmul.f32 %v967, %v969
        %v971 = vadd.f32 %v967, %v970
        %vm972 = vweird.f32 %v931
        %vm973 = vweird.f32 %v967
        %vm974 = vmor %vm972, %vm973
        %v975 = vsel %vm974, %v967, %v971
        %v976 = vand.u32 2147483647, %v931
        %vm977 = vcmp.eq.f32.partialorder %v976, 8.507059e+37
        %v978 = vand.u32 %v931, 2147483648
        %v979 = vor.u32 1.1754944e-38, %v978
        %v980 = vsel %vm977, %v979, %v975
        %v981 = vmul.f32 %v908, %v980
        %v982 = vrcp.pop %v932
        %v983 = vmul.f32 %v932, %v982
        %v984 = vsub.f32 1.0, %v983
        %v985 = vmul.f32 %v982, %v984
        %v986 = vadd.f32 %v982, %v985
        %vm987 = vweird.f32 %v932
        %vm988 = vweird.f32 %v982
        %vm989 = vmor %vm987, %vm988
        %v990 = vsel %vm989, %v982, %v986
        %v991 = vand.u32 2147483647, %v932
        %vm992 = vcmp.eq.f32.partialorder %v991, 8.507059e+37
        %v993 = vand.u32 %v932, 2147483648
        %v994 = vor.u32 1.1754944e-38, %v993
        %v995 = vsel %vm992, %v994, %v990
        %v996 = vmul.f32 %v910, %v995
        %v1001 = vrot.slane %v966, 7
        %v1002 = vsel %vm916, %v1001, %v951
        %v1003 = vrot.slane %v981, 6
        %v1004 = vsel %vm919, %v1003, %v1002
        %v1005 = vrot.slane %v996, 5
        %v1006 = vsel %vm922, %v1005, %v1004
        %v1008 = vsel %vm925, %v1006, 0.0
        %v1009 = vrot.slane %v1008, 4
        %v1010 = vadd.f32 %v1008, %v1009
        %v1011 = vrot.slane %v1010, 2
        %v1012 = vadd.f32 %v1010, %v1011
        %v1013 = vrot.slane %v1012, 1
        %v1014 = vadd.f32 %v1012, %v1013
        %v1015 = vrcp.pop 4.0
        %v1016 = vmul.f32 4.0, %v1015
        %v1017 = vsub.f32 1.0, %v1016
        %v1018 = vmul.f32 %v1015, %v1017
        %v1019 = vadd.f32 %v1015, %v1018
        %vm1020 = vweird.f32 %v1015
        %v1021 = vsel %vm1020, %v1015, %v1019
        %v1022 = vmul.f32 %v1014, %v1021
        %v1023 = vsel %vm810, %v1022, 0.0
        %1024 = vst [vmem:[%s353] sm:$0x1] %v1023
        %v1025 = vsel %vm810, %v904, 0.0
        %1026 = vadd.xlane.f32.xlu0 %v1025
        %v1027 = vpop.xlane.xlu0 %1026
        %v1028 = vsel %vm810, %v906, 0.0
        %1029 = vadd.xlane.f32.xlu0 %v1028
        %v1030 = vpop.xlane.xlu0 %1029
        %v1031 = vsel %vm810, %v908, 0.0
        %1032 = vadd.xlane.f32.xlu0 %v1031
        %v1033 = vpop.xlane.xlu0 %1032
        %v1034 = vsel %vm810, %v910, 0.0
        %1035 = vadd.xlane.f32.xlu0 %v1034
        %v1036 = vpop.xlane.xlu0 %1035
        %v1037 = vpack.c.bf16 %v904, %v904
        %v1038 = vpack.c.bf16 %v906, %v906
        %v1039 = vpack.c.bf16 %v908, %v908
        %v1040 = vpack.c.bf16 %v910, %v910
        %v1042 = vsel %vm810, %v1037, 0
        %vm1044 = vcmask 1043456
        %v1046 = vsel %vm1044, %v806, 0
        %1048 = vmatpush.bf16.msra.mxu0 0
        %1049 = vmatpush.bf16.msra.mxu0 0
        %1050 = vmatpush.bf16.msra.mxu0 0
        %1051 = vmatpush.bf16.msra.mxu0 0
        %1052 = vmatpush.bf16.msra.mxu0 0
        %1053 = vmatpush.bf16.msra.mxu0 0
        %1054 = vmatpush.bf16.msra.mxu0 0
        %1055 = vmatpush.bf16.msra.mxu0 %v1046
        %1056 = vmatmul.bf16.gmra.mxu0 %v1042
        %v1057 = vpop.f32.mrf.mxu0
        %v1058 = vadd.f32 0.0, %v1057
        %v1059 = vpop.f32.mrf.mxu0
        %1060 = vdwg.mxu0
        %v1062 = vsel %vm810, %v1038, 0
        %v1065 = vsel %vm1044, %v807, 0
        %1067 = vmatpush.bf16.msra.mxu0 0
        %1068 = vmatpush.bf16.msra.mxu0 0
        %1069 = vmatpush.bf16.msra.mxu0 0
        %1070 = vmatpush.bf16.msra.mxu0 0
        %1071 = vmatpush.bf16.msra.mxu0 0
        %1072 = vmatpush.bf16.msra.mxu0 0
        %1073 = vmatpush.bf16.msra.mxu0 0
        %1074 = vmatpush.bf16.msra.mxu0 %v1065
        %1075 = vmatmul.bf16.gmra.mxu0 %v1062
        %v1076 = vpop.f32.mrf.mxu0
        %v1077 = vadd.f32 0.0, %v1076
        %v1078 = vpop.f32.mrf.mxu0
        %1079 = vdwg.mxu0
        %v1081 = vsel %vm810, %v1039, 0
        %v1084 = vsel %vm1044, %v808, 0
        %1086 = vmatpush.bf16.msra.mxu0 0
        %1087 = vmatpush.bf16.msra.mxu0 0
        %1088 = vmatpush.bf16.msra.mxu0 0
        %1089 = vmatpush.bf16.msra.mxu0 0
        %1090 = vmatpush.bf16.msra.mxu0 0
        %1091 = vmatpush.bf16.msra.mxu0 0
        %1092 = vmatpush.bf16.msra.mxu0 0
        %1093 = vmatpush.bf16.msra.mxu0 %v1084
        %1094 = vmatmul.bf16.gmra.mxu0 %v1081
        %v1095 = vpop.f32.mrf.mxu0
        %v1096 = vadd.f32 0.0, %v1095
        %v1097 = vpop.f32.mrf.mxu0
        %1098 = vdwg.mxu0
        %v1100 = vsel %vm810, %v1040, 0
        %v1103 = vsel %vm1044, %v809, 0
        %1105 = vmatpush.bf16.msra.mxu0 0
        %1106 = vmatpush.bf16.msra.mxu0 0
        %1107 = vmatpush.bf16.msra.mxu0 0
        %1108 = vmatpush.bf16.msra.mxu0 0
        %1109 = vmatpush.bf16.msra.mxu0 0
        %1110 = vmatpush.bf16.msra.mxu0 0
        %1111 = vmatpush.bf16.msra.mxu0 0
        %1112 = vmatpush.bf16.msra.mxu0 %v1103
        %1113 = vmatmul.bf16.gmra.mxu0 %v1100
        %v1114 = vpop.f32.mrf.mxu0
        %v1115 = vadd.f32 0.0, %v1114
        %v1116 = vpop.f32.mrf.mxu0
        %1117 = vdwg.mxu0
        %v1118 = vrcp.pop %v1027
        %v1119 = vmul.f32 %v1027, %v1118
        %v1120 = vsub.f32 1.0, %v1119
        %v1121 = vmul.f32 %v1118, %v1120
        %v1122 = vadd.f32 %v1118, %v1121
        %vm1123 = vweird.f32 %v1027
        %vm1124 = vweird.f32 %v1118
        %vm1125 = vmor %vm1123, %vm1124
        %v1126 = vsel %vm1125, %v1118, %v1122
        %v1127 = vand.u32 2147483647, %v1027
        %vm1128 = vcmp.eq.f32.partialorder %v1127, 8.507059e+37
        %v1129 = vand.u32 %v1027, 2147483648
        %v1130 = vor.u32 1.1754944e-38, %v1129
        %v1131 = vsel %vm1128, %v1130, %v1126
        %v1132 = vrcp.pop %v1030
        %v1133 = vmul.f32 %v1030, %v1132
        %v1134 = vsub.f32 1.0, %v1133
        %v1135 = vmul.f32 %v1132, %v1134
        %v1136 = vadd.f32 %v1132, %v1135
        %vm1137 = vweird.f32 %v1030
        %vm1138 = vweird.f32 %v1132
        %vm1139 = vmor %vm1137, %vm1138
        %v1140 = vsel %vm1139, %v1132, %v1136
        %v1141 = vand.u32 2147483647, %v1030
        %vm1142 = vcmp.eq.f32.partialorder %v1141, 8.507059e+37
        %v1143 = vand.u32 %v1030, 2147483648
        %v1144 = vor.u32 1.1754944e-38, %v1143
        %v1145 = vsel %vm1142, %v1144, %v1140
        %v1146 = vrcp.pop %v1033
        %v1147 = vmul.f32 %v1033, %v1146
        %v1148 = vsub.f32 1.0, %v1147
        %v1149 = vmul.f32 %v1146, %v1148
        %v1150 = vadd.f32 %v1146, %v1149
        %vm1151 = vweird.f32 %v1033
        %vm1152 = vweird.f32 %v1146
        %vm1153 = vmor %vm1151, %vm1152
        %v1154 = vsel %vm1153, %v1146, %v1150
        %v1155 = vand.u32 2147483647, %v1033
        %vm1156 = vcmp.eq.f32.partialorder %v1155, 8.507059e+37
        %v1157 = vand.u32 %v1033, 2147483648
        %v1158 = vor.u32 1.1754944e-38, %v1157
        %v1159 = vsel %vm1156, %v1158, %v1154
        %v1160 = vrcp.pop %v1036
        %v1161 = vmul.f32 %v1036, %v1160
        %v1162 = vsub.f32 1.0, %v1161
        %v1163 = vmul.f32 %v1160, %v1162
        %v1164 = vadd.f32 %v1160, %v1163
        %vm1165 = vweird.f32 %v1036
        %vm1166 = vweird.f32 %v1160
        %vm1167 = vmor %vm1165, %vm1166
        %v1168 = vsel %vm1167, %v1160, %v1164
        %v1169 = vand.u32 2147483647, %v1036
        %vm1170 = vcmp.eq.f32.partialorder %v1169, 8.507059e+37
        %v1171 = vand.u32 %v1036, 2147483648
        %v1172 = vor.u32 1.1754944e-38, %v1171
        %v1173 = vsel %vm1170, %v1172, %v1168
        %v1174 = vmul.f32 %v1058, %v1131
        %v1175 = vmul.f32 %v1077, %v1145
        %v1176 = vmul.f32 %v1096, %v1159
        %v1177 = vmul.f32 %v1115, %v1173
        %v1178 = vrot.slane %v1176, 4
        %v1179 = vsel %vm464, %v1178, %v1174
        %v1180 = vrot.slane %v1174, 4
        %v1181 = vsel %vm464, %v1176, %v1180
        %v1183 = vunpack.c.l.s4 1983009808
        %v1184 = vunpack.c.0.s8 %v1183
        %v1185 = vperm.slane %v1179, %v1184
        %v1187 = vunpack.c.l.s4 1983009808
        %v1188 = vunpack.c.0.s8 %v1187
        %v1189 = vperm.slane %v1181, %v1188
        %v1190 = vrot.slane %v1177, 4
        %v1191 = vsel %vm464, %v1190, %v1175
        %v1192 = vrot.slane %v1175, 4
        %v1193 = vsel %vm464, %v1177, %v1192
        %v1195 = vunpack.c.l.s4 1983009808
        %v1196 = vunpack.c.0.s8 %v1195
        %v1197 = vperm.slane %v1191, %v1196
        %v1199 = vunpack.c.l.s4 1983009808
        %v1200 = vunpack.c.0.s8 %v1199
        %v1201 = vperm.slane %v1193, %v1200
        %v1202 = vrot.slane %v1197, 4
        %v1203 = vsel %vm464, %v1202, %v1185
        %v1204 = vrot.slane %v1185, 4
        %v1205 = vsel %vm464, %v1197, %v1204
        %v1207 = vunpack.c.l.s4 1934713408
        %v1208 = vunpack.c.0.s8 %v1207
        %v1209 = vperm.slane %v1203, %v1208
        %v1211 = vunpack.c.l.s4 1934713408
        %v1212 = vunpack.c.0.s8 %v1211
        %v1213 = vperm.slane %v1205, %v1212
        %v1214 = vrot.slane %v1201, 4
        %v1215 = vsel %vm464, %v1214, %v1189
        %v1216 = vrot.slane %v1189, 4
        %v1217 = vsel %vm464, %v1201, %v1216
        %v1219 = vunpack.c.l.s4 1934713408
        %v1220 = vunpack.c.0.s8 %v1219
        %v1221 = vperm.slane %v1215, %v1220
        %v1223 = vunpack.c.l.s4 1934713408
        %v1224 = vunpack.c.0.s8 %v1223
        %v1225 = vperm.slane %v1217, %v1224
        %v1226 = vrot.slane %v1209, 4
        %v1227 = vsel %vm464, 0.0, %v1226
        %v1228 = vrot.slane %v1213, 4
        %v1229 = vsel %vm464, 0.0, %v1228
        %v1230 = vrot.slane %v1221, 4
        %v1231 = vsel %vm464, 0.0, %v1230
        %v1232 = vrot.slane %v1225, 4
        %v1233 = vsel %vm464, 0.0, %v1232
        %v1234 = vsel %vm464, %v1228, %v1209
        %v1236 = vunpack.c.l.s4 1983009808
        %v1237 = vunpack.c.0.s8 %v1236
        %v1238 = vperm.slane %v1234, %v1237
        %v1239 = vrot.slane %v1229, 4
        %v1240 = vsel %vm464, %v1239, %v1227
        %v1242 = vunpack.c.l.s4 1983009808
        %v1243 = vunpack.c.0.s8 %v1242
        %v1244 = vperm.slane %v1240, %v1243
        %v1245 = vsel %vm464, %v1232, %v1221
        %v1247 = vunpack.c.l.s4 1983009808
        %v1248 = vunpack.c.0.s8 %v1247
        %v1249 = vperm.slane %v1245, %v1248
        %v1250 = vrot.slane %v1233, 4
        %v1251 = vsel %vm464, %v1250, %v1231
        %v1253 = vunpack.c.l.s4 1983009808
        %v1254 = vunpack.c.0.s8 %v1253
        %v1255 = vperm.slane %v1251, %v1254
        %v1256 = vrot.slane %v1244, 4
        %v1257 = vsel %vm464, %v1256, %v1238
        %v1258 = vrot.slane %v1238, 4
        %v1259 = vsel %vm464, %v1244, %v1258
        %v1261 = vunpack.c.l.s4 1934713408
        %v1262 = vunpack.c.0.s8 %v1261
        %v1263 = vperm.slane %v1257, %v1262
        %v1265 = vunpack.c.l.s4 1934713408
        %v1266 = vunpack.c.0.s8 %v1265
        %v1267 = vperm.slane %v1259, %v1266
        %v1268 = vrot.slane %v1255, 4
        %v1269 = vsel %vm464, %v1268, %v1249
        %v1270 = vrot.slane %v1249, 4
        %v1271 = vsel %vm464, %v1255, %v1270
        %v1273 = vunpack.c.l.s4 1934713408
        %v1274 = vunpack.c.0.s8 %v1273
        %v1275 = vperm.slane %v1269, %v1274
        %v1277 = vunpack.c.l.s4 1934713408
        %v1278 = vunpack.c.0.s8 %v1277
        %v1279 = vperm.slane %v1271, %v1278
        %v1280 = vrot.slane %v1275, 4
        %v1281 = vsel %vm464, %v1280, %v1263
        %v1282 = vrot.slane %v1263, 4
        %v1283 = vsel %vm464, %v1275, %v1282
        %v1284 = vrot.slane %v1279, 4
        %v1285 = vsel %vm464, %v1284, %v1267
        %v1286 = vrot.slane %v1267, 4
        %v1287 = vsel %vm464, %v1279, %v1286
        %1289 = vrot.lane.b32.xlu0 %v1283, 8
        %v1290 = vpop.permute.xlu0 %1289
        %1293 = vrot.lane.b32.xlu0 %v1285, 16
        %v1294 = vpop.permute.xlu0 %1293
        %1297 = vrot.lane.b32.xlu0 %v1287, 24
        %v1298 = vpop.permute.xlu0 %1297
        %v1300 = vsel %vm810, %v1281, %v1290
        %vm1301 = vcmask 130048
        %v1302 = vsel %vm1301, %v1300, %v1294
        %vm1303 = vcmask 195584
        %v1304 = vsel %vm1303, %v1302, %v1298
        %v1305 = vpack.c.bf16 %v1304, %v1304
        %v1306 = vld [vmem:[#allocation8] sm:$0xf]
        %v1307 = vld [vmem:[#allocation8 + $0x4] sm:$0xf]
        %v1308 = vld [vmem:[#allocation8 + $0x8] sm:$0xf]
        %v1309 = vld [vmem:[#allocation8 + $0xc] sm:$0xf]
        %v1310 = vld [vmem:[%s5] sm:$0x1]
        %v1312 = vperm.slane %v1310, 0
        %v1318 = vunpack.c.l.b16 %v1306
        %v1319 = vunpack.c.l.b16 %v1307
        %v1320 = vunpack.c.l.b16 %v1308
        %v1321 = vunpack.c.l.b16 %v1309
        %v1322 = vpack.c.b16 %v1319, %v1318
        %v1323 = vpack.c.b16 %v1321, %v1320
        %v1327 = vsel %vm356, %v1305, 0
        %1329 = vmatpush.bf16.msra.mxu0 0
        %1330 = vmatpush.bf16.msra.mxu0 0
        %1331 = vmatpush.bf16.msra.mxu0 0
        %1332 = vmatpush.bf16.msra.mxu0 0
        %1333 = vmatpush.bf16.msra.mxu0 0
        %1334 = vmatpush.bf16.msra.mxu0 0
        %1335 = vmatpush.bf16.msra.mxu0 %v1323
        %1336 = vmatpush.bf16.msra.mxu0 %v1322
        %1337 = vmatmul.bf16.gmra.mxu0 %v1327
        %v1338 = vpop.f32.mrf.mxu0
        %v1339 = vadd.f32 %v1312, %v1338
        %v1340 = vpop.f32.mrf.mxu0
        %1341 = vdwg.mxu0
        %v1342 = vadd.f32 %v355, %v1339
        %1343 = vst.msk [vmem:[%s347] sm:$0xff] %vm356, %v1342
        %s1344 = sand.u32 %s169, 1
        %s1345 = scalar_lea.sflag [#allocation4], %s1344
        %s1346 = sand.u32 %s169, 1
        %s1347 = smul.addr %s1346, 8
        %s1348 = scalar_lea.vmem [#allocation10], %s1347
        %s1349 = sand.u32 %s195, 1
        %s1350 = scalar_lea.sflag [#allocation12], %s1349
        %s1351 = sand.u32 %s195, 1
        %s1352 = scalar_lea.vmem [#allocation11], %s1351
        // Predicated region
        $region61: #{tpu_custom_call.1} parent=43 // pred_check
          %p1353 = pneg %p179
        $region62: #{tpu_custom_call.1} parent=43 // pred_check_branch
          %1355 = sbr.rel (%p1353) target = $region64
        $region63: #{tpu_custom_call.1} parent=43 // pred_region
          %1357 = vsyncadd %s1345, 0
          %s1358 = smul.addr %s30, 8
          %s1359 = scalar_lea.hbm %s6, %s1358
          %s1361 = sshll.u32 %s1348, 4
          %s1362 = int_to_ptr.vmem [resolvable:$true] %s1361
          %s1363 = sshll.u32 %s1359, 4
          %s1364 = int_to_ptr.hbm [resolvable:$true] %s1363
          %1366 = dma.vmem_to_hbm [thread:$0]  %s1362, 128, %s1364, %s1345
        $region64: #{tpu_custom_call.1} parent=43 // pred_fallthru
          _
        // Predicated region
        $region65: #{tpu_custom_call.1} parent=43 // pred_check
          %p1367 = pneg %p205
        $region66: #{tpu_custom_call.1} parent=43 // pred_check_branch
          %1369 = sbr.rel (%p1367) target = $region68
        $region67: #{tpu_custom_call.1} parent=43 // pred_region
          %1371 = vsyncadd %s1350, 0
          %s1372 = scalar_lea.hbm %s7, %s30
          %s1374 = sshll.u32 %s1352, 4
          %s1375 = int_to_ptr.vmem [resolvable:$true] %s1374
          %s1376 = sshll.u32 %s1372, 4
          %s1377 = int_to_ptr.hbm [resolvable:$true] %s1376
          %1379 = dma.vmem_to_hbm [thread:$0]  %s1375, 16, %s1377, %s1350
        $region68: #{tpu_custom_call.1} parent=43 // pred_fallthru
          _
      $region44: #{tpu_custom_call.1} parent=5 // pred_fallthru
        _
      %p1380 = scmp.le.s32.totalorder 2, %s25
      // Predicated region
      $region69: #{tpu_custom_call.1} parent=5 // pred_check
        %p1381 = pneg %p1380
      $region70: #{tpu_custom_call.1} parent=5 // pred_check_branch
        %1383 = sbr.rel (%p1381) target = $region72
      $region71: #{tpu_custom_call.1} parent=5 // pred_region
        %s1384 = ssub.s32 %s25, 2
        // Predicated region
        $region73: #{tpu_custom_call.1} parent=71 // pred_check
          %p1385 = pneg %p185
        $region74: #{tpu_custom_call.1} parent=71 // pred_check_branch
          %1387 = sbr.rel (%p1385) target = $region76
        $region75: #{tpu_custom_call.1} parent=71 // pred_region
          %s1388 = sand.u32 %s170, 1
          %s1389 = scalar_lea.sflag [#allocation4], %s1388
          %s1390 = sand.u32 %s170, 1
          %s1391 = smul.addr %s1390, 8
          %s1392 = scalar_lea.vmem [#allocation10], %s1391
          %1394 = dma.done %s1389, 128
        $region76: #{tpu_custom_call.1} parent=71 // pred_fallthru
          _
        // Predicated region
        $region77: #{tpu_custom_call.1} parent=71 // pred_check
          %p1395 = pneg %p211
        $region78: #{tpu_custom_call.1} parent=71 // pred_check_branch
          %1397 = sbr.rel (%p1395) target = $region80
        $region79: #{tpu_custom_call.1} parent=71 // pred_region
          %s1398 = sand.u32 %s196, 1
          %s1399 = scalar_lea.sflag [#allocation12], %s1398
          %s1400 = sand.u32 %s196, 1
          %s1401 = scalar_lea.vmem [#allocation11], %s1400
          %1403 = dma.done %s1399, 16
        $region80: #{tpu_custom_call.1} parent=71 // pred_fallthru
          _
      $region72: #{tpu_custom_call.1} parent=5 // pred_fallthru
        _
    $region6: #{tpu_custom_call.1} parent=1 // loop_footer
      %s29 = sadd.s32 1, %s25
    $region7: #{tpu_custom_call.1} parent=1 // loop_footer_branch
      %24 = sbr.rel target = $region3
    $region8: #{tpu_custom_call.1} parent=1 // loop_exit
      _
    %1404 = vsyncpa [#allocation3], 1
    %s1405 = scalar_lea.sflag [#allocation3], 1
    %1406 = vsyncpa %s1405, 1
    %1407 = vsyncpa [#allocation6], 1
    %1408 = vsyncpa [#allocation9], 1
    %1409 = vsyncpa [#allocation4], 1
    %s1410 = scalar_lea.sflag [#allocation4], 1
    %1411 = vsyncpa %s1410, 1
    %1412 = vsyncpa [#allocation12], 1
    %s1413 = scalar_lea.sflag [#allocation12], 1
    %1414 = vsyncpa %s1413, 1

</llo_original>
